<compile_context>
chip_gen: v5e
topology: v5e:2x2
jax: 0.10.0
libtpu: 0.0.40
codegen_flags: <defaults>
</compile_context>

<pallas_src>
import functools

import jax
import jax.numpy as jnp
from jax import lax
from jax.experimental import pallas as pl
from jax.experimental.pallas import tpu as pltpu


def _round_up(v, m):
    return (v + m - 1) // m * m


def _pad_to(arr, shape):
    pads = [(0, s - d) for d, s in zip(arr.shape, shape)]
    return jnp.pad(arr, pads)


def _osc_kernel(L, N, n_real, h_osc, h_wave,
                x_ref, lap_ref, we_ref, be_ref,
                a_ref, bw_ref, bb_ref, wf_ref, bf_ref,
                out_ref):
    n = x_ref.shape[0]
    H = be_ref.shape[-1]
    f32 = jnp.float32
    bf16 = jnp.bfloat16

    # ---- loop-invariant loads; kept at (1,H) / (H,H), NOT broadcast ------
    lap = lap_ref[...]                          # (n, n) bf16, lane-dense
    A = [a_ref[j] for j in range(L)]            # (1, H) f32
    Bb = [bb_ref[j] for j in range(L)]          # (1, H) f32
    Bw = [bw_ref[j] for j in range(L)]          # (H, H) bf16

    # ---- initial encoder: X = x @ We + be (bf16 operands, f32 accum) -----
    X = (jnp.dot(x_ref[...], we_ref[...], preferred_element_type=f32)
         + be_ref[...])
    # Zero padded node rows so padded state stays exactly 0 through the
    # integration (lap columns for padded rows are zero anyway; defensive).
    row_ok = lax.broadcasted_iota(jnp.int32, (n, 1), 0) < n_real
    X = jnp.where(row_ok, X, 0.0)

    zeros = jnp.zeros((n, H), f32)
    # Pipeline prologue: lap @ X_0 (consumed at the top of step 0).
    lap_x0 = jnp.dot(lap, X.astype(bf16), preferred_element_type=f32)
    carry = (X, zeros, (zeros,) * L, (zeros,) * L, lap_x0)

    def step(carry):
        X, Y, Z, U, lap_x = carry

        # WaveLayer explicit Euler step, consuming the pre-issued lap @ X.
        Y = Y - h_wave * lap_x
        X = X + h_wave * Y

        # Single bf16 copy of the fresh X, reused by both MXU consumers.
        Xb = X.astype(bf16)

        # Rotated matmul: lap @ X_{t+1} for the NEXT step, issued now so it
        # overlaps the layer matmuls below (last step's result is unused).
        lap_x_next = jnp.dot(lap, Xb, preferred_element_type=f32)

        # Matmuls whose operands are previous-step state: issue early.
        mm = [None] * L
        mm[0] = jnp.dot(Xb, Bw[0], preferred_element_type=f32)
        for j in range(2, L):
            mm[j] = jnp.dot(Z[j - 1].astype(bf16), Bw[j],
                            preferred_element_type=f32)

        Z_new, U_new = list(Z), list(U)

        # Oscillator layer 0, driven by the freshly updated X.
        pre0 = A[0] * Z[0] + mm[0] + Bb[0]
        U_new[0] = U[0] + h_osc * jnp.maximum(pre0, 0.0)
        Z_new[0] = Z[0] + h_osc * U_new[0]

        # Layers L-1 .. 1 (same order as the PyTorch loop): j==1 sees the
        # already-updated Z[0]; j>=2 see previous-step Z[j-1].
        for j in range(L - 1, 0, -1):
            m = mm[j] if j >= 2 else jnp.dot(
                Z_new[0].astype(bf16), Bw[1], preferred_element_type=f32)
            pre = A[j] * Z[j] + m + Bb[j]
            U_new[j] = U[j] + h_osc * jnp.maximum(pre, 0.0)
            Z_new[j] = Z[j] + h_osc * U_new[j]

        return (X, Y, tuple(Z_new), tuple(U_new), lap_x_next)

    if N <= 16:
        # Tiny time loops: full trace-time unroll (best scheduler visibility).
        for _ in range(N):
            carry = step(carry)
    else:
        carry = lax.fori_loop(0, N, lambda _, c: step(c), carry)

    _, _, Z, _, _ = carry
    out_ref[...] = (jnp.dot(Z[L - 1].astype(bf16), wf_ref[...],
                            preferred_element_type=f32) + bf_ref[...])


def glaudio_forward(x, lap, params, *, L, N, h=0.1, h_wave=0.1):
    n, in_dim = x.shape
    H = params["we"].shape[1]
    out_dim = params["wf"].shape[1]

    # Lane/sublane-dense layout:
    #   * hidden / output / input dims -> multiples of 128 (lane axis)
    #   * node count n -> multiple of 128 as well: n is simultaneously the
    #     lane (last) dim of lap, contracted in lap@X, and the sublane dim of
    #     every state array; 128-alignment keeps both unmasked.
    H_pad = _round_up(H, 128)
    out_pad = _round_up(out_dim, 128)
    in_pad = _round_up(in_dim, 128)
    n_pad = _round_up(n, 128)

    f32, bf16 = jnp.float32, jnp.bfloat16
    x_p = _pad_to(x, (n_pad, in_pad)).astype(bf16)
    lap_p = _pad_to(lap, (n_pad, n_pad)).astype(bf16)
    we_p = _pad_to(params["we"], (in_pad, H_pad)).astype(bf16)
    be_p = _pad_to(params["be"], (1, H_pad)).astype(f32)
    a_p = _pad_to(params["a"], (L, 1, H_pad)).astype(f32)
    bw_p = _pad_to(params["bw"], (L, H_pad, H_pad)).astype(bf16)
    bb_p = _pad_to(params["bb"], (L, 1, H_pad)).astype(f32)
    wf_p = _pad_to(params["wf"], (H_pad, out_pad)).astype(bf16)
    bf_p = _pad_to(params["bf"], (1, out_pad)).astype(f32)

    operands = (x_p, lap_p, we_p, be_p, a_p, bw_p, bb_p, wf_p, bf_p)

    # VMEM accounting: operands + f32 carry (X, Y, Z[L], U[L], lap_x)
    # + in-loop temporaries (matmul results, pre-activations, bf16 casts)
    # + output tile, with 1.5x headroom, capped at physical VMEM - margin.
    op_bytes = sum(int(o.size) * o.dtype.itemsize for o in operands)
    state_bytes = (2 * L + 3) * n_pad * H_pad * 4
    temp_bytes = 6 * n_pad * H_pad * 4
    out_bytes = n_pad * out_pad * 4
    need = op_bytes + state_bytes + temp_bytes + out_bytes

    try:
        vmem_cap = int(getattr(pltpu.get_tpu_info(), "vmem_capacity_bytes",
                               64 << 20))
    except Exception:
        vmem_cap = 64 << 20   # conservative (v7x per-TC physical VMEM)
    vmem_limit = int(min(max(int(1.5 * need) + (4 << 20), 32 << 20),
                         vmem_cap - (12 << 20)))
    # TODO(synk): if `need` exceeds vmem_cap (large graphs), switch to a
    # streamed / sparse Laplacian path instead of the fully-resident lap.

    kernel = functools.partial(_osc_kernel, L, N, n, h, h_wave)
    out = pl.pallas_call(
        kernel,
        out_shape=jax.ShapeDtypeStruct((n_pad, out_pad), jnp.float32),
        in_specs=[pl.BlockSpec(memory_space=pltpu.MemorySpace.VMEM)] * 9,
        out_specs=pl.BlockSpec(memory_space=pltpu.MemorySpace.VMEM),
        compiler_params=pltpu.CompilerParams(vmem_limit_bytes=vmem_limit),
    )(*operands)
    return out[:n, :out_dim]


def ref_forward(x, lap, params, *, L, N, h=0.1, h_wave=0.1,
                mm_dtype=jnp.float32):
    """Pure-JAX reference mirroring the PyTorch forward.

    mm_dtype selects the dtype of the matmul operands (state stays f32, MXU
    accumulation f32) so the kernel's bf16-operand math can be checked tightly.
    """
    def mm(a, b):
        return jnp.dot(a.astype(mm_dtype), b.astype(mm_dtype),
                       preferred_element_type=jnp.float32)

    X = mm(x, params["we"]) + params["be"]
    Y = jnp.zeros_like(X)
    Z = [jnp.zeros_like(X) for _ in range(L)]
    U = [jnp.zeros_like(X) for _ in range(L)]
    for _ in range(N):
        Y = Y - h_wave * mm(lap, X)
        X = X + h_wave * Y
        pre = params["a"][0] * Z[0] + mm(X, params["bw"][0]) + params["bb"][0]
        U[0] = U[0] + h * jnp.maximum(pre, 0.0)
        Z[0] = Z[0] + h * U[0]
        for j in range(L - 1, 0, -1):
            pre = (params["a"][j] * Z[j] + mm(Z[j - 1], params["bw"][j])
                   + params["bb"][j])
            U[j] = U[j] + h * jnp.maximum(pre, 0.0)
            Z[j] = Z[j] + h * U[j]
    return mm(Z[-1], params["wf"]) + params["bf"]


def build_laplacian(edge_index, num_nodes):
    """Dense (D - S) matching WaveLayer with normalized_lap=False, no self loops.

    For each edge (row=src, col=dst): message -x[src] aggregated at dst, and
    deg = in-degree(dst). So vel_update = (D - S) x with S[dst, src] += 1.
    """
    row, col = edge_index
    S = jnp.zeros((num_nodes, num_nodes), jnp.float32).at[col, row].add(1.0)
    deg = jnp.zeros((num_nodes,), jnp.float32).at[col].add(1.0)
    return jnp.diag(deg) - S


if __name__ == "__main__":
    # Small, deterministic configuration.
    num_nodes = 16
    input_dim = 8
    hidden_dim = 32
    output_dim = 4
    L = 3          # number of NeuralOscillator layers
    N = 8          # number of wave-equation time steps
    h = 0.1
    h_wave = 0.1   # WaveLayer is constructed with h=0.1 in the module

    key = jax.random.PRNGKey(0)
    ks = jax.random.split(key, 8)

    # Node features.
    x = jax.random.normal(ks[0], (num_nodes, input_dim), jnp.float32)

    # Deterministic bidirectional ring graph: edge_index shape (2, 2*num_nodes).
    src = jnp.arange(num_nodes, dtype=jnp.int32)
    dst = (src + 1) % num_nodes
    edge_index = jnp.stack([jnp.concatenate([src, dst]),
                            jnp.concatenate([dst, src])], axis=0)
    lap = build_laplacian(edge_index, num_nodes)

    # Parameters (deterministic random init; ElementwiseLinear 'a' is zero in
    # the module's __init__ but we use small random values to keep the path live).
    H = hidden_dim
    params = {
        "we": 0.2 * jax.random.normal(ks[1], (input_dim, H), jnp.float32),
        "be": 0.1 * jax.random.normal(ks[2], (1, H), jnp.float32),
        "a":  0.1 * jax.random.normal(ks[3], (L, 1, H), jnp.float32),
        "bw": 0.2 * jax.random.normal(ks[4], (L, H, H), jnp.float32),  # stored (in, out)
        "bb": 0.1 * jax.random.normal(ks[5], (L, 1, H), jnp.float32),
        "wf": 0.2 * jax.random.normal(ks[6], (H, output_dim), jnp.float32),
        "bf": 0.1 * jax.random.normal(ks[7], (1, output_dim), jnp.float32),
    }

    out = glaudio_forward(x, lap, params, L=L, N=N, h=h, h_wave=h_wave)
    out = jax.block_until_ready(out)
    assert out.shape == (num_nodes, output_dim)

    # Tight check against a reference that uses the same bf16 MXU operands.
    ref_bf16 = ref_forward(x, lap, params, L=L, N=N, h=h, h_wave=h_wave,
                           mm_dtype=jnp.bfloat16)
    assert jnp.allclose(out, ref_bf16, rtol=2e-3, atol=2e-3), \
        "mismatch vs bf16-operand JAX reference"

    # Sanity check against the full-f32 reference (bf16 operand drift bound).
    # TODO(synk): re-validate the drift bound at production N; fall back to
    # f32 lap@X operands if drift grows with many more time steps.
    ref_f32 = ref_forward(x, lap, params, L=L, N=N, h=h, h_wave=h_wave,
                          mm_dtype=jnp.float32)
    assert jnp.allclose(out, ref_f32, rtol=5e-2, atol=5e-2), \
        "drift vs f32 JAX reference too large"

    # TODO(synk): hidden_gcn_dim != 0 (GCNConv encoder), pooling (global_add_pool),
    # initial/post_processing branches and dropout(training=True) are not exercised.
    print("KERNEL_OK")
</pallas_src>

<mosaic_0001>
module attributes {stable_mosaic.version = 11 : i64} {
  func.func @_osc_kernel(%arg0: memref<128x128xbf16, #tpu.memory_space<vmem>>, %arg1: memref<128x128xbf16, #tpu.memory_space<vmem>>, %arg2: memref<128x128xbf16, #tpu.memory_space<vmem>>, %arg3: memref<1x128xf32, #tpu.memory_space<vmem>>, %arg4: memref<3x1x128xf32, #tpu.memory_space<vmem>>, %arg5: memref<3x128x128xbf16, #tpu.memory_space<vmem>>, %arg6: memref<3x1x128xf32, #tpu.memory_space<vmem>>, %arg7: memref<128x128xbf16, #tpu.memory_space<vmem>>, %arg8: memref<1x128xf32, #tpu.memory_space<vmem>>, %arg9: memref<128x128xf32, #tpu.memory_space<vmem>>) attributes {dimension_semantics = [], scalar_prefetch = 0 : i64, scratch_operands = 0 : i64, tpu.core_type = #tpu.core_type<tc>} {
    %c0 = arith.constant 0 : index
    %c0_0 = arith.constant 0 : index
    %0 = vector.load %arg1[%c0, %c0_0] : memref<128x128xbf16, #tpu.memory_space<vmem>>, vector<128x128xbf16>
    %c0_1 = arith.constant 0 : index
    %c0_2 = arith.constant 0 : index
    %c0_3 = arith.constant 0 : index
    %1 = vector.load %arg4[%c0_1, %c0_2, %c0_3] : memref<3x1x128xf32, #tpu.memory_space<vmem>>, vector<1x1x128xf32>
    %2 = vector.shape_cast %1 : vector<1x1x128xf32> to vector<1x128xf32>
    %c1 = arith.constant 1 : index
    %c0_4 = arith.constant 0 : index
    %c0_5 = arith.constant 0 : index
    %3 = vector.load %arg4[%c1, %c0_4, %c0_5] : memref<3x1x128xf32, #tpu.memory_space<vmem>>, vector<1x1x128xf32>
    %4 = vector.shape_cast %3 : vector<1x1x128xf32> to vector<1x128xf32>
    %c2 = arith.constant 2 : index
    %c0_6 = arith.constant 0 : index
    %c0_7 = arith.constant 0 : index
    %5 = vector.load %arg4[%c2, %c0_6, %c0_7] : memref<3x1x128xf32, #tpu.memory_space<vmem>>, vector<1x1x128xf32>
    %6 = vector.shape_cast %5 : vector<1x1x128xf32> to vector<1x128xf32>
    %c0_8 = arith.constant 0 : index
    %c0_9 = arith.constant 0 : index
    %c0_10 = arith.constant 0 : index
    %7 = vector.load %arg6[%c0_8, %c0_9, %c0_10] : memref<3x1x128xf32, #tpu.memory_space<vmem>>, vector<1x1x128xf32>
    %8 = vector.shape_cast %7 : vector<1x1x128xf32> to vector<1x128xf32>
    %c1_11 = arith.constant 1 : index
    %c0_12 = arith.constant 0 : index
    %c0_13 = arith.constant 0 : index
    %9 = vector.load %arg6[%c1_11, %c0_12, %c0_13] : memref<3x1x128xf32, #tpu.memory_space<vmem>>, vector<1x1x128xf32>
    %10 = vector.shape_cast %9 : vector<1x1x128xf32> to vector<1x128xf32>
    %c2_14 = arith.constant 2 : index
    %c0_15 = arith.constant 0 : index
    %c0_16 = arith.constant 0 : index
    %11 = vector.load %arg6[%c2_14, %c0_15, %c0_16] : memref<3x1x128xf32, #tpu.memory_space<vmem>>, vector<1x1x128xf32>
    %12 = vector.shape_cast %11 : vector<1x1x128xf32> to vector<1x128xf32>
    %c0_17 = arith.constant 0 : index
    %c0_18 = arith.constant 0 : index
    %c0_19 = arith.constant 0 : index
    %13 = vector.load %arg5[%c0_17, %c0_18, %c0_19] : memref<3x128x128xbf16, #tpu.memory_space<vmem>>, vector<1x128x128xbf16>
    %14 = vector.shape_cast %13 : vector<1x128x128xbf16> to vector<128x128xbf16>
    %c1_20 = arith.constant 1 : index
    %c0_21 = arith.constant 0 : index
    %c0_22 = arith.constant 0 : index
    %15 = vector.load %arg5[%c1_20, %c0_21, %c0_22] : memref<3x128x128xbf16, #tpu.memory_space<vmem>>, vector<1x128x128xbf16>
    %16 = vector.shape_cast %15 : vector<1x128x128xbf16> to vector<128x128xbf16>
    %c2_23 = arith.constant 2 : index
    %c0_24 = arith.constant 0 : index
    %c0_25 = arith.constant 0 : index
    %17 = vector.load %arg5[%c2_23, %c0_24, %c0_25] : memref<3x128x128xbf16, #tpu.memory_space<vmem>>, vector<1x128x128xbf16>
    %18 = vector.shape_cast %17 : vector<1x128x128xbf16> to vector<128x128xbf16>
    %c0_26 = arith.constant 0 : index
    %c0_27 = arith.constant 0 : index
    %19 = vector.load %arg0[%c0_26, %c0_27] : memref<128x128xbf16, #tpu.memory_space<vmem>>, vector<128x128xbf16>
    %c0_28 = arith.constant 0 : index
    %c0_29 = arith.constant 0 : index
    %20 = vector.load %arg2[%c0_28, %c0_29] : memref<128x128xbf16, #tpu.memory_space<vmem>>, vector<128x128xbf16>
    %cst = arith.constant dense<0.000000e+00> : vector<128x128xf32>
    %21 = tpu.matmul %19, %20, %cst {dimension_numbers = #tpu.dot_dimension_numbers<[1], [0], [0], [1], [0, 0, 1, 1], [], []>} : vector<128x128xbf16>, vector<128x128xbf16>, vector<128x128xf32> -> vector<128x128xf32>
    %c0_30 = arith.constant 0 : index
    %c0_31 = arith.constant 0 : index
    %22 = vector.load %arg3[%c0_30, %c0_31] : memref<1x128xf32, #tpu.memory_space<vmem>>, vector<1x128xf32>
    %23 = vector.broadcast %22 : vector<1x128xf32> to vector<128x128xf32>
    %24 = arith.addf %21, %23 : vector<128x128xf32>
    %25 = tpu.iota {dimensions = array<i32: 0>} : vector<128x1xi32>
    %c16_i32 = arith.constant 16 : i32
    %26 = vector.broadcast %c16_i32 : i32 to vector<128x1xi32>
    %27 = arith.cmpi slt, %25, %26 : vector<128x1xi32>
    %cst_32 = arith.constant 0.000000e+00 : f32
    %28 = vector.shape_cast %27 : vector<128x1xi1> to vector<128x1xi1>
    %29 = vector.broadcast %28 : vector<128x1xi1> to vector<128x128xi1>
    %30 = vector.broadcast %cst_32 : f32 to vector<128x128xf32>
    %31 = arith.select %29, %24, %30 : vector<128x128xi1>, vector<128x128xf32>
    %cst_33 = arith.constant 0.000000e+00 : f32
    %32 = vector.broadcast %cst_33 : f32 to vector<128x128xf32>
    %33 = arith.truncf %31 : vector<128x128xf32> to vector<128x128xbf16>
    %cst_34 = arith.constant dense<0.000000e+00> : vector<128x128xf32>
    %34 = tpu.matmul %0, %33, %cst_34 {dimension_numbers = #tpu.dot_dimension_numbers<[1], [0], [0], [1], [0, 0, 1, 1], [], []>} : vector<128x128xbf16>, vector<128x128xbf16>, vector<128x128xf32> -> vector<128x128xf32>
    %cst_35 = arith.constant 1.000000e-01 : f32
    %35 = vector.broadcast %cst_35 : f32 to vector<128x128xf32>
    %36 = arith.mulf %35, %34 : vector<128x128xf32>
    %37 = arith.subf %32, %36 : vector<128x128xf32>
    %cst_36 = arith.constant 1.000000e-01 : f32
    %38 = vector.broadcast %cst_36 : f32 to vector<128x128xf32>
    %39 = arith.mulf %38, %37 : vector<128x128xf32>
    %40 = arith.addf %31, %39 : vector<128x128xf32>
    %41 = arith.truncf %40 : vector<128x128xf32> to vector<128x128xbf16>
    %cst_37 = arith.constant dense<0.000000e+00> : vector<128x128xf32>
    %42 = tpu.matmul %0, %41, %cst_37 {dimension_numbers = #tpu.dot_dimension_numbers<[1], [0], [0], [1], [0, 0, 1, 1], [], []>} : vector<128x128xbf16>, vector<128x128xbf16>, vector<128x128xf32> -> vector<128x128xf32>
    %cst_38 = arith.constant dense<0.000000e+00> : vector<128x128xf32>
    %43 = tpu.matmul %41, %14, %cst_38 {dimension_numbers = #tpu.dot_dimension_numbers<[1], [0], [0], [1], [0, 0, 1, 1], [], []>} : vector<128x128xbf16>, vector<128x128xbf16>, vector<128x128xf32> -> vector<128x128xf32>
    %44 = arith.truncf %32 : vector<128x128xf32> to vector<128x128xbf16>
    %cst_39 = arith.constant dense<0.000000e+00> : vector<128x128xf32>
    %45 = tpu.matmul %44, %18, %cst_39 {dimension_numbers = #tpu.dot_dimension_numbers<[1], [0], [0], [1], [0, 0, 1, 1], [], []>} : vector<128x128xbf16>, vector<128x128xbf16>, vector<128x128xf32> -> vector<128x128xf32>
    %46 = vector.broadcast %2 : vector<1x128xf32> to vector<128x128xf32>
    %47 = arith.mulf %46, %32 : vector<128x128xf32>
    %48 = arith.addf %47, %43 : vector<128x128xf32>
    %49 = vector.broadcast %8 : vector<1x128xf32> to vector<128x128xf32>
    %50 = arith.addf %48, %49 : vector<128x128xf32>
    %cst_40 = arith.constant 0.000000e+00 : f32
    %51 = vector.broadcast %cst_40 : f32 to vector<128x128xf32>
    %52 = arith.maximumf %50, %51 : vector<128x128xf32>
    %cst_41 = arith.constant 1.000000e-01 : f32
    %53 = vector.broadcast %cst_41 : f32 to vector<128x128xf32>
    %54 = arith.mulf %53, %52 : vector<128x128xf32>
    %55 = arith.addf %32, %54 : vector<128x128xf32>
    %cst_42 = arith.constant 1.000000e-01 : f32
    %56 = vector.broadcast %cst_42 : f32 to vector<128x128xf32>
    %57 = arith.mulf %56, %55 : vector<128x128xf32>
    %58 = arith.addf %32, %57 : vector<128x128xf32>
    %59 = vector.broadcast %6 : vector<1x128xf32> to vector<128x128xf32>
    %60 = arith.mulf %59, %32 : vector<128x128xf32>
    %61 = arith.addf %60, %45 : vector<128x128xf32>
    %62 = vector.broadcast %12 : vector<1x128xf32> to vector<128x128xf32>
    %63 = arith.addf %61, %62 : vector<128x128xf32>
    %cst_43 = arith.constant 0.000000e+00 : f32
    %64 = vector.broadcast %cst_43 : f32 to vector<128x128xf32>
    %65 = arith.maximumf %63, %64 : vector<128x128xf32>
    %cst_44 = arith.constant 1.000000e-01 : f32
    %66 = vector.broadcast %cst_44 : f32 to vector<128x128xf32>
    %67 = arith.mulf %66, %65 : vector<128x128xf32>
    %68 = arith.addf %32, %67 : vector<128x128xf32>
    %cst_45 = arith.constant 1.000000e-01 : f32
    %69 = vector.broadcast %cst_45 : f32 to vector<128x128xf32>
    %70 = arith.mulf %69, %68 : vector<128x128xf32>
    %71 = arith.addf %32, %70 : vector<128x128xf32>
    %72 = arith.truncf %58 : vector<128x128xf32> to vector<128x128xbf16>
    %cst_46 = arith.constant dense<0.000000e+00> : vector<128x128xf32>
    %73 = tpu.matmul %72, %16, %cst_46 {dimension_numbers = #tpu.dot_dimension_numbers<[1], [0], [0], [1], [0, 0, 1, 1], [], []>} : vector<128x128xbf16>, vector<128x128xbf16>, vector<128x128xf32> -> vector<128x128xf32>
    %74 = vector.broadcast %4 : vector<1x128xf32> to vector<128x128xf32>
    %75 = arith.mulf %74, %32 : vector<128x128xf32>
    %76 = arith.addf %75, %73 : vector<128x128xf32>
    %77 = vector.broadcast %10 : vector<1x128xf32> to vector<128x128xf32>
    %78 = arith.addf %76, %77 : vector<128x128xf32>
    %cst_47 = arith.constant 0.000000e+00 : f32
    %79 = vector.broadcast %cst_47 : f32 to vector<128x128xf32>
    %80 = arith.maximumf %78, %79 : vector<128x128xf32>
    %cst_48 = arith.constant 1.000000e-01 : f32
    %81 = vector.broadcast %cst_48 : f32 to vector<128x128xf32>
    %82 = arith.mulf %81, %80 : vector<128x128xf32>
    %83 = arith.addf %32, %82 : vector<128x128xf32>
    %cst_49 = arith.constant 1.000000e-01 : f32
    %84 = vector.broadcast %cst_49 : f32 to vector<128x128xf32>
    %85 = arith.mulf %84, %83 : vector<128x128xf32>
    %86 = arith.addf %32, %85 : vector<128x128xf32>
    %cst_50 = arith.constant 1.000000e-01 : f32
    %87 = vector.broadcast %cst_50 : f32 to vector<128x128xf32>
    %88 = arith.mulf %87, %42 : vector<128x128xf32>
    %89 = arith.subf %37, %88 : vector<128x128xf32>
    %cst_51 = arith.constant 1.000000e-01 : f32
    %90 = vector.broadcast %cst_51 : f32 to vector<128x128xf32>
    %91 = arith.mulf %90, %89 : vector<128x128xf32>
    %92 = arith.addf %40, %91 : vector<128x128xf32>
    %93 = arith.truncf %92 : vector<128x128xf32> to vector<128x128xbf16>
    %cst_52 = arith.constant dense<0.000000e+00> : vector<128x128xf32>
    %94 = tpu.matmul %0, %93, %cst_52 {dimension_numbers = #tpu.dot_dimension_numbers<[1], [0], [0], [1], [0, 0, 1, 1], [], []>} : vector<128x128xbf16>, vector<128x128xbf16>, vector<128x128xf32> -> vector<128x128xf32>
    %cst_53 = arith.constant dense<0.000000e+00> : vector<128x128xf32>
    %95 = tpu.matmul %93, %14, %cst_53 {dimension_numbers = #tpu.dot_dimension_numbers<[1], [0], [0], [1], [0, 0, 1, 1], [], []>} : vector<128x128xbf16>, vector<128x128xbf16>, vector<128x128xf32> -> vector<128x128xf32>
    %96 = arith.truncf %86 : vector<128x128xf32> to vector<128x128xbf16>
    %cst_54 = arith.constant dense<0.000000e+00> : vector<128x128xf32>
    %97 = tpu.matmul %96, %18, %cst_54 {dimension_numbers = #tpu.dot_dimension_numbers<[1], [0], [0], [1], [0, 0, 1, 1], [], []>} : vector<128x128xbf16>, vector<128x128xbf16>, vector<128x128xf32> -> vector<128x128xf32>
    %98 = vector.broadcast %2 : vector<1x128xf32> to vector<128x128xf32>
    %99 = arith.mulf %98, %58 : vector<128x128xf32>
    %100 = arith.addf %99, %95 : vector<128x128xf32>
    %101 = vector.broadcast %8 : vector<1x128xf32> to vector<128x128xf32>
    %102 = arith.addf %100, %101 : vector<128x128xf32>
    %cst_55 = arith.constant 0.000000e+00 : f32
    %103 = vector.broadcast %cst_55 : f32 to vector<128x128xf32>
    %104 = arith.maximumf %102, %103 : vector<128x128xf32>
    %cst_56 = arith.constant 1.000000e-01 : f32
    %105 = vector.broadcast %cst_56 : f32 to vector<128x128xf32>
    %106 = arith.mulf %105, %104 : vector<128x128xf32>
    %107 = arith.addf %55, %106 : vector<128x128xf32>
    %cst_57 = arith.constant 1.000000e-01 : f32
    %108 = vector.broadcast %cst_57 : f32 to vector<128x128xf32>
    %109 = arith.mulf %108, %107 : vector<128x128xf32>
    %110 = arith.addf %58, %109 : vector<128x128xf32>
    %111 = vector.broadcast %6 : vector<1x128xf32> to vector<128x128xf32>
    %112 = arith.mulf %111, %71 : vector<128x128xf32>
    %113 = arith.addf %112, %97 : vector<128x128xf32>
    %114 = vector.broadcast %12 : vector<1x128xf32> to vector<128x128xf32>
    %115 = arith.addf %113, %114 : vector<128x128xf32>
    %cst_58 = arith.constant 0.000000e+00 : f32
    %116 = vector.broadcast %cst_58 : f32 to vector<128x128xf32>
    %117 = arith.maximumf %115, %116 : vector<128x128xf32>
    %cst_59 = arith.constant 1.000000e-01 : f32
    %118 = vector.broadcast %cst_59 : f32 to vector<128x128xf32>
    %119 = arith.mulf %118, %117 : vector<128x128xf32>
    %120 = arith.addf %68, %119 : vector<128x128xf32>
    %cst_60 = arith.constant 1.000000e-01 : f32
    %121 = vector.broadcast %cst_60 : f32 to vector<128x128xf32>
    %122 = arith.mulf %121, %120 : vector<128x128xf32>
    %123 = arith.addf %71, %122 : vector<128x128xf32>
    %124 = arith.truncf %110 : vector<128x128xf32> to vector<128x128xbf16>
    %cst_61 = arith.constant dense<0.000000e+00> : vector<128x128xf32>
    %125 = tpu.matmul %124, %16, %cst_61 {dimension_numbers = #tpu.dot_dimension_numbers<[1], [0], [0], [1], [0, 0, 1, 1], [], []>} : vector<128x128xbf16>, vector<128x128xbf16>, vector<128x128xf32> -> vector<128x128xf32>
    %126 = vector.broadcast %4 : vector<1x128xf32> to vector<128x128xf32>
    %127 = arith.mulf %126, %86 : vector<128x128xf32>
    %128 = arith.addf %127, %125 : vector<128x128xf32>
    %129 = vector.broadcast %10 : vector<1x128xf32> to vector<128x128xf32>
    %130 = arith.addf %128, %129 : vector<128x128xf32>
    %cst_62 = arith.constant 0.000000e+00 : f32
    %131 = vector.broadcast %cst_62 : f32 to vector<128x128xf32>
    %132 = arith.maximumf %130, %131 : vector<128x128xf32>
    %cst_63 = arith.constant 1.000000e-01 : f32
    %133 = vector.broadcast %cst_63 : f32 to vector<128x128xf32>
    %134 = arith.mulf %133, %132 : vector<128x128xf32>
    %135 = arith.addf %83, %134 : vector<128x128xf32>
    %cst_64 = arith.constant 1.000000e-01 : f32
    %136 = vector.broadcast %cst_64 : f32 to vector<128x128xf32>
    %137 = arith.mulf %136, %135 : vector<128x128xf32>
    %138 = arith.addf %86, %137 : vector<128x128xf32>
    %cst_65 = arith.constant 1.000000e-01 : f32
    %139 = vector.broadcast %cst_65 : f32 to vector<128x128xf32>
    %140 = arith.mulf %139, %94 : vector<128x128xf32>
    %141 = arith.subf %89, %140 : vector<128x128xf32>
    %cst_66 = arith.constant 1.000000e-01 : f32
    %142 = vector.broadcast %cst_66 : f32 to vector<128x128xf32>
    %143 = arith.mulf %142, %141 : vector<128x128xf32>
    %144 = arith.addf %92, %143 : vector<128x128xf32>
    %145 = arith.truncf %144 : vector<128x128xf32> to vector<128x128xbf16>
    %cst_67 = arith.constant dense<0.000000e+00> : vector<128x128xf32>
    %146 = tpu.matmul %0, %145, %cst_67 {dimension_numbers = #tpu.dot_dimension_numbers<[1], [0], [0], [1], [0, 0, 1, 1], [], []>} : vector<128x128xbf16>, vector<128x128xbf16>, vector<128x128xf32> -> vector<128x128xf32>
    %cst_68 = arith.constant dense<0.000000e+00> : vector<128x128xf32>
    %147 = tpu.matmul %145, %14, %cst_68 {dimension_numbers = #tpu.dot_dimension_numbers<[1], [0], [0], [1], [0, 0, 1, 1], [], []>} : vector<128x128xbf16>, vector<128x128xbf16>, vector<128x128xf32> -> vector<128x128xf32>
    %148 = arith.truncf %138 : vector<128x128xf32> to vector<128x128xbf16>
    %cst_69 = arith.constant dense<0.000000e+00> : vector<128x128xf32>
    %149 = tpu.matmul %148, %18, %cst_69 {dimension_numbers = #tpu.dot_dimension_numbers<[1], [0], [0], [1], [0, 0, 1, 1], [], []>} : vector<128x128xbf16>, vector<128x128xbf16>, vector<128x128xf32> -> vector<128x128xf32>
    %150 = vector.broadcast %2 : vector<1x128xf32> to vector<128x128xf32>
    %151 = arith.mulf %150, %110 : vector<128x128xf32>
    %152 = arith.addf %151, %147 : vector<128x128xf32>
    %153 = vector.broadcast %8 : vector<1x128xf32> to vector<128x128xf32>
    %154 = arith.addf %152, %153 : vector<128x128xf32>
    %cst_70 = arith.constant 0.000000e+00 : f32
    %155 = vector.broadcast %cst_70 : f32 to vector<128x128xf32>
    %156 = arith.maximumf %154, %155 : vector<128x128xf32>
    %cst_71 = arith.constant 1.000000e-01 : f32
    %157 = vector.broadcast %cst_71 : f32 to vector<128x128xf32>
    %158 = arith.mulf %157, %156 : vector<128x128xf32>
    %159 = arith.addf %107, %158 : vector<128x128xf32>
    %cst_72 = arith.constant 1.000000e-01 : f32
    %160 = vector.broadcast %cst_72 : f32 to vector<128x128xf32>
    %161 = arith.mulf %160, %159 : vector<128x128xf32>
    %162 = arith.addf %110, %161 : vector<128x128xf32>
    %163 = vector.broadcast %6 : vector<1x128xf32> to vector<128x128xf32>
    %164 = arith.mulf %163, %123 : vector<128x128xf32>
    %165 = arith.addf %164, %149 : vector<128x128xf32>
    %166 = vector.broadcast %12 : vector<1x128xf32> to vector<128x128xf32>
    %167 = arith.addf %165, %166 : vector<128x128xf32>
    %cst_73 = arith.constant 0.000000e+00 : f32
    %168 = vector.broadcast %cst_73 : f32 to vector<128x128xf32>
    %169 = arith.maximumf %167, %168 : vector<128x128xf32>
    %cst_74 = arith.constant 1.000000e-01 : f32
    %170 = vector.broadcast %cst_74 : f32 to vector<128x128xf32>
    %171 = arith.mulf %170, %169 : vector<128x128xf32>
    %172 = arith.addf %120, %171 : vector<128x128xf32>
    %cst_75 = arith.constant 1.000000e-01 : f32
    %173 = vector.broadcast %cst_75 : f32 to vector<128x128xf32>
    %174 = arith.mulf %173, %172 : vector<128x128xf32>
    %175 = arith.addf %123, %174 : vector<128x128xf32>
    %176 = arith.truncf %162 : vector<128x128xf32> to vector<128x128xbf16>
    %cst_76 = arith.constant dense<0.000000e+00> : vector<128x128xf32>
    %177 = tpu.matmul %176, %16, %cst_76 {dimension_numbers = #tpu.dot_dimension_numbers<[1], [0], [0], [1], [0, 0, 1, 1], [], []>} : vector<128x128xbf16>, vector<128x128xbf16>, vector<128x128xf32> -> vector<128x128xf32>
    %178 = vector.broadcast %4 : vector<1x128xf32> to vector<128x128xf32>
    %179 = arith.mulf %178, %138 : vector<128x128xf32>
    %180 = arith.addf %179, %177 : vector<128x128xf32>
    %181 = vector.broadcast %10 : vector<1x128xf32> to vector<128x128xf32>
    %182 = arith.addf %180, %181 : vector<128x128xf32>
    %cst_77 = arith.constant 0.000000e+00 : f32
    %183 = vector.broadcast %cst_77 : f32 to vector<128x128xf32>
    %184 = arith.maximumf %182, %183 : vector<128x128xf32>
    %cst_78 = arith.constant 1.000000e-01 : f32
    %185 = vector.broadcast %cst_78 : f32 to vector<128x128xf32>
    %186 = arith.mulf %185, %184 : vector<128x128xf32>
    %187 = arith.addf %135, %186 : vector<128x128xf32>
    %cst_79 = arith.constant 1.000000e-01 : f32
    %188 = vector.broadcast %cst_79 : f32 to vector<128x128xf32>
    %189 = arith.mulf %188, %187 : vector<128x128xf32>
    %190 = arith.addf %138, %189 : vector<128x128xf32>
    %cst_80 = arith.constant 1.000000e-01 : f32
    %191 = vector.broadcast %cst_80 : f32 to vector<128x128xf32>
    %192 = arith.mulf %191, %146 : vector<128x128xf32>
    %193 = arith.subf %141, %192 : vector<128x128xf32>
    %cst_81 = arith.constant 1.000000e-01 : f32
    %194 = vector.broadcast %cst_81 : f32 to vector<128x128xf32>
    %195 = arith.mulf %194, %193 : vector<128x128xf32>
    %196 = arith.addf %144, %195 : vector<128x128xf32>
    %197 = arith.truncf %196 : vector<128x128xf32> to vector<128x128xbf16>
    %cst_82 = arith.constant dense<0.000000e+00> : vector<128x128xf32>
    %198 = tpu.matmul %0, %197, %cst_82 {dimension_numbers = #tpu.dot_dimension_numbers<[1], [0], [0], [1], [0, 0, 1, 1], [], []>} : vector<128x128xbf16>, vector<128x128xbf16>, vector<128x128xf32> -> vector<128x128xf32>
    %cst_83 = arith.constant dense<0.000000e+00> : vector<128x128xf32>
    %199 = tpu.matmul %197, %14, %cst_83 {dimension_numbers = #tpu.dot_dimension_numbers<[1], [0], [0], [1], [0, 0, 1, 1], [], []>} : vector<128x128xbf16>, vector<128x128xbf16>, vector<128x128xf32> -> vector<128x128xf32>
    %200 = arith.truncf %190 : vector<128x128xf32> to vector<128x128xbf16>
    %cst_84 = arith.constant dense<0.000000e+00> : vector<128x128xf32>
    %201 = tpu.matmul %200, %18, %cst_84 {dimension_numbers = #tpu.dot_dimension_numbers<[1], [0], [0], [1], [0, 0, 1, 1], [], []>} : vector<128x128xbf16>, vector<128x128xbf16>, vector<128x128xf32> -> vector<128x128xf32>
    %202 = vector.broadcast %2 : vector<1x128xf32> to vector<128x128xf32>
    %203 = arith.mulf %202, %162 : vector<128x128xf32>
    %204 = arith.addf %203, %199 : vector<128x128xf32>
    %205 = vector.broadcast %8 : vector<1x128xf32> to vector<128x128xf32>
    %206 = arith.addf %204, %205 : vector<128x128xf32>
    %cst_85 = arith.constant 0.000000e+00 : f32
    %207 = vector.broadcast %cst_85 : f32 to vector<128x128xf32>
    %208 = arith.maximumf %206, %207 : vector<128x128xf32>
    %cst_86 = arith.constant 1.000000e-01 : f32
    %209 = vector.broadcast %cst_86 : f32 to vector<128x128xf32>
    %210 = arith.mulf %209, %208 : vector<128x128xf32>
    %211 = arith.addf %159, %210 : vector<128x128xf32>
    %cst_87 = arith.constant 1.000000e-01 : f32
    %212 = vector.broadcast %cst_87 : f32 to vector<128x128xf32>
    %213 = arith.mulf %212, %211 : vector<128x128xf32>
    %214 = arith.addf %162, %213 : vector<128x128xf32>
    %215 = vector.broadcast %6 : vector<1x128xf32> to vector<128x128xf32>
    %216 = arith.mulf %215, %175 : vector<128x128xf32>
    %217 = arith.addf %216, %201 : vector<128x128xf32>
    %218 = vector.broadcast %12 : vector<1x128xf32> to vector<128x128xf32>
    %219 = arith.addf %217, %218 : vector<128x128xf32>
    %cst_88 = arith.constant 0.000000e+00 : f32
    %220 = vector.broadcast %cst_88 : f32 to vector<128x128xf32>
    %221 = arith.maximumf %219, %220 : vector<128x128xf32>
    %cst_89 = arith.constant 1.000000e-01 : f32
    %222 = vector.broadcast %cst_89 : f32 to vector<128x128xf32>
    %223 = arith.mulf %222, %221 : vector<128x128xf32>
    %224 = arith.addf %172, %223 : vector<128x128xf32>
    %cst_90 = arith.constant 1.000000e-01 : f32
    %225 = vector.broadcast %cst_90 : f32 to vector<128x128xf32>
    %226 = arith.mulf %225, %224 : vector<128x128xf32>
    %227 = arith.addf %175, %226 : vector<128x128xf32>
    %228 = arith.truncf %214 : vector<128x128xf32> to vector<128x128xbf16>
    %cst_91 = arith.constant dense<0.000000e+00> : vector<128x128xf32>
    %229 = tpu.matmul %228, %16, %cst_91 {dimension_numbers = #tpu.dot_dimension_numbers<[1], [0], [0], [1], [0, 0, 1, 1], [], []>} : vector<128x128xbf16>, vector<128x128xbf16>, vector<128x128xf32> -> vector<128x128xf32>
    %230 = vector.broadcast %4 : vector<1x128xf32> to vector<128x128xf32>
    %231 = arith.mulf %230, %190 : vector<128x128xf32>
    %232 = arith.addf %231, %229 : vector<128x128xf32>
    %233 = vector.broadcast %10 : vector<1x128xf32> to vector<128x128xf32>
    %234 = arith.addf %232, %233 : vector<128x128xf32>
    %cst_92 = arith.constant 0.000000e+00 : f32
    %235 = vector.broadcast %cst_92 : f32 to vector<128x128xf32>
    %236 = arith.maximumf %234, %235 : vector<128x128xf32>
    %cst_93 = arith.constant 1.000000e-01 : f32
    %237 = vector.broadcast %cst_93 : f32 to vector<128x128xf32>
    %238 = arith.mulf %237, %236 : vector<128x128xf32>
    %239 = arith.addf %187, %238 : vector<128x128xf32>
    %cst_94 = arith.constant 1.000000e-01 : f32
    %240 = vector.broadcast %cst_94 : f32 to vector<128x128xf32>
    %241 = arith.mulf %240, %239 : vector<128x128xf32>
    %242 = arith.addf %190, %241 : vector<128x128xf32>
    %cst_95 = arith.constant 1.000000e-01 : f32
    %243 = vector.broadcast %cst_95 : f32 to vector<128x128xf32>
    %244 = arith.mulf %243, %198 : vector<128x128xf32>
    %245 = arith.subf %193, %244 : vector<128x128xf32>
    %cst_96 = arith.constant 1.000000e-01 : f32
    %246 = vector.broadcast %cst_96 : f32 to vector<128x128xf32>
    %247 = arith.mulf %246, %245 : vector<128x128xf32>
    %248 = arith.addf %196, %247 : vector<128x128xf32>
    %249 = arith.truncf %248 : vector<128x128xf32> to vector<128x128xbf16>
    %cst_97 = arith.constant dense<0.000000e+00> : vector<128x128xf32>
    %250 = tpu.matmul %0, %249, %cst_97 {dimension_numbers = #tpu.dot_dimension_numbers<[1], [0], [0], [1], [0, 0, 1, 1], [], []>} : vector<128x128xbf16>, vector<128x128xbf16>, vector<128x128xf32> -> vector<128x128xf32>
    %cst_98 = arith.constant dense<0.000000e+00> : vector<128x128xf32>
    %251 = tpu.matmul %249, %14, %cst_98 {dimension_numbers = #tpu.dot_dimension_numbers<[1], [0], [0], [1], [0, 0, 1, 1], [], []>} : vector<128x128xbf16>, vector<128x128xbf16>, vector<128x128xf32> -> vector<128x128xf32>
    %252 = arith.truncf %242 : vector<128x128xf32> to vector<128x128xbf16>
    %cst_99 = arith.constant dense<0.000000e+00> : vector<128x128xf32>
    %253 = tpu.matmul %252, %18, %cst_99 {dimension_numbers = #tpu.dot_dimension_numbers<[1], [0], [0], [1], [0, 0, 1, 1], [], []>} : vector<128x128xbf16>, vector<128x128xbf16>, vector<128x128xf32> -> vector<128x128xf32>
    %254 = vector.broadcast %2 : vector<1x128xf32> to vector<128x128xf32>
    %255 = arith.mulf %254, %214 : vector<128x128xf32>
    %256 = arith.addf %255, %251 : vector<128x128xf32>
    %257 = vector.broadcast %8 : vector<1x128xf32> to vector<128x128xf32>
    %258 = arith.addf %256, %257 : vector<128x128xf32>
    %cst_100 = arith.constant 0.000000e+00 : f32
    %259 = vector.broadcast %cst_100 : f32 to vector<128x128xf32>
    %260 = arith.maximumf %258, %259 : vector<128x128xf32>
    %cst_101 = arith.constant 1.000000e-01 : f32
    %261 = vector.broadcast %cst_101 : f32 to vector<128x128xf32>
    %262 = arith.mulf %261, %260 : vector<128x128xf32>
    %263 = arith.addf %211, %262 : vector<128x128xf32>
    %cst_102 = arith.constant 1.000000e-01 : f32
    %264 = vector.broadcast %cst_102 : f32 to vector<128x128xf32>
    %265 = arith.mulf %264, %263 : vector<128x128xf32>
    %266 = arith.addf %214, %265 : vector<128x128xf32>
    %267 = vector.broadcast %6 : vector<1x128xf32> to vector<128x128xf32>
    %268 = arith.mulf %267, %227 : vector<128x128xf32>
    %269 = arith.addf %268, %253 : vector<128x128xf32>
    %270 = vector.broadcast %12 : vector<1x128xf32> to vector<128x128xf32>
    %271 = arith.addf %269, %270 : vector<128x128xf32>
    %cst_103 = arith.constant 0.000000e+00 : f32
    %272 = vector.broadcast %cst_103 : f32 to vector<128x128xf32>
    %273 = arith.maximumf %271, %272 : vector<128x128xf32>
    %cst_104 = arith.constant 1.000000e-01 : f32
    %274 = vector.broadcast %cst_104 : f32 to vector<128x128xf32>
    %275 = arith.mulf %274, %273 : vector<128x128xf32>
    %276 = arith.addf %224, %275 : vector<128x128xf32>
    %cst_105 = arith.constant 1.000000e-01 : f32
    %277 = vector.broadcast %cst_105 : f32 to vector<128x128xf32>
    %278 = arith.mulf %277, %276 : vector<128x128xf32>
    %279 = arith.addf %227, %278 : vector<128x128xf32>
    %280 = arith.truncf %266 : vector<128x128xf32> to vector<128x128xbf16>
    %cst_106 = arith.constant dense<0.000000e+00> : vector<128x128xf32>
    %281 = tpu.matmul %280, %16, %cst_106 {dimension_numbers = #tpu.dot_dimension_numbers<[1], [0], [0], [1], [0, 0, 1, 1], [], []>} : vector<128x128xbf16>, vector<128x128xbf16>, vector<128x128xf32> -> vector<128x128xf32>
    %282 = vector.broadcast %4 : vector<1x128xf32> to vector<128x128xf32>
    %283 = arith.mulf %282, %242 : vector<128x128xf32>
    %284 = arith.addf %283, %281 : vector<128x128xf32>
    %285 = vector.broadcast %10 : vector<1x128xf32> to vector<128x128xf32>
    %286 = arith.addf %284, %285 : vector<128x128xf32>
    %cst_107 = arith.constant 0.000000e+00 : f32
    %287 = vector.broadcast %cst_107 : f32 to vector<128x128xf32>
    %288 = arith.maximumf %286, %287 : vector<128x128xf32>
    %cst_108 = arith.constant 1.000000e-01 : f32
    %289 = vector.broadcast %cst_108 : f32 to vector<128x128xf32>
    %290 = arith.mulf %289, %288 : vector<128x128xf32>
    %291 = arith.addf %239, %290 : vector<128x128xf32>
    %cst_109 = arith.constant 1.000000e-01 : f32
    %292 = vector.broadcast %cst_109 : f32 to vector<128x128xf32>
    %293 = arith.mulf %292, %291 : vector<128x128xf32>
    %294 = arith.addf %242, %293 : vector<128x128xf32>
    %cst_110 = arith.constant 1.000000e-01 : f32
    %295 = vector.broadcast %cst_110 : f32 to vector<128x128xf32>
    %296 = arith.mulf %295, %250 : vector<128x128xf32>
    %297 = arith.subf %245, %296 : vector<128x128xf32>
    %cst_111 = arith.constant 1.000000e-01 : f32
    %298 = vector.broadcast %cst_111 : f32 to vector<128x128xf32>
    %299 = arith.mulf %298, %297 : vector<128x128xf32>
    %300 = arith.addf %248, %299 : vector<128x128xf32>
    %301 = arith.truncf %300 : vector<128x128xf32> to vector<128x128xbf16>
    %cst_112 = arith.constant dense<0.000000e+00> : vector<128x128xf32>
    %302 = tpu.matmul %0, %301, %cst_112 {dimension_numbers = #tpu.dot_dimension_numbers<[1], [0], [0], [1], [0, 0, 1, 1], [], []>} : vector<128x128xbf16>, vector<128x128xbf16>, vector<128x128xf32> -> vector<128x128xf32>
    %cst_113 = arith.constant dense<0.000000e+00> : vector<128x128xf32>
    %303 = tpu.matmul %301, %14, %cst_113 {dimension_numbers = #tpu.dot_dimension_numbers<[1], [0], [0], [1], [0, 0, 1, 1], [], []>} : vector<128x128xbf16>, vector<128x128xbf16>, vector<128x128xf32> -> vector<128x128xf32>
    %304 = arith.truncf %294 : vector<128x128xf32> to vector<128x128xbf16>
    %cst_114 = arith.constant dense<0.000000e+00> : vector<128x128xf32>
    %305 = tpu.matmul %304, %18, %cst_114 {dimension_numbers = #tpu.dot_dimension_numbers<[1], [0], [0], [1], [0, 0, 1, 1], [], []>} : vector<128x128xbf16>, vector<128x128xbf16>, vector<128x128xf32> -> vector<128x128xf32>
    %306 = vector.broadcast %2 : vector<1x128xf32> to vector<128x128xf32>
    %307 = arith.mulf %306, %266 : vector<128x128xf32>
    %308 = arith.addf %307, %303 : vector<128x128xf32>
    %309 = vector.broadcast %8 : vector<1x128xf32> to vector<128x128xf32>
    %310 = arith.addf %308, %309 : vector<128x128xf32>
    %cst_115 = arith.constant 0.000000e+00 : f32
    %311 = vector.broadcast %cst_115 : f32 to vector<128x128xf32>
    %312 = arith.maximumf %310, %311 : vector<128x128xf32>
    %cst_116 = arith.constant 1.000000e-01 : f32
    %313 = vector.broadcast %cst_116 : f32 to vector<128x128xf32>
    %314 = arith.mulf %313, %312 : vector<128x128xf32>
    %315 = arith.addf %263, %314 : vector<128x128xf32>
    %cst_117 = arith.constant 1.000000e-01 : f32
    %316 = vector.broadcast %cst_117 : f32 to vector<128x128xf32>
    %317 = arith.mulf %316, %315 : vector<128x128xf32>
    %318 = arith.addf %266, %317 : vector<128x128xf32>
    %319 = vector.broadcast %6 : vector<1x128xf32> to vector<128x128xf32>
    %320 = arith.mulf %319, %279 : vector<128x128xf32>
    %321 = arith.addf %320, %305 : vector<128x128xf32>
    %322 = vector.broadcast %12 : vector<1x128xf32> to vector<128x128xf32>
    %323 = arith.addf %321, %322 : vector<128x128xf32>
    %cst_118 = arith.constant 0.000000e+00 : f32
    %324 = vector.broadcast %cst_118 : f32 to vector<128x128xf32>
    %325 = arith.maximumf %323, %324 : vector<128x128xf32>
    %cst_119 = arith.constant 1.000000e-01 : f32
    %326 = vector.broadcast %cst_119 : f32 to vector<128x128xf32>
    %327 = arith.mulf %326, %325 : vector<128x128xf32>
    %328 = arith.addf %276, %327 : vector<128x128xf32>
    %cst_120 = arith.constant 1.000000e-01 : f32
    %329 = vector.broadcast %cst_120 : f32 to vector<128x128xf32>
    %330 = arith.mulf %329, %328 : vector<128x128xf32>
    %331 = arith.addf %279, %330 : vector<128x128xf32>
    %332 = arith.truncf %318 : vector<128x128xf32> to vector<128x128xbf16>
    %cst_121 = arith.constant dense<0.000000e+00> : vector<128x128xf32>
    %333 = tpu.matmul %332, %16, %cst_121 {dimension_numbers = #tpu.dot_dimension_numbers<[1], [0], [0], [1], [0, 0, 1, 1], [], []>} : vector<128x128xbf16>, vector<128x128xbf16>, vector<128x128xf32> -> vector<128x128xf32>
    %334 = vector.broadcast %4 : vector<1x128xf32> to vector<128x128xf32>
    %335 = arith.mulf %334, %294 : vector<128x128xf32>
    %336 = arith.addf %335, %333 : vector<128x128xf32>
    %337 = vector.broadcast %10 : vector<1x128xf32> to vector<128x128xf32>
    %338 = arith.addf %336, %337 : vector<128x128xf32>
    %cst_122 = arith.constant 0.000000e+00 : f32
    %339 = vector.broadcast %cst_122 : f32 to vector<128x128xf32>
    %340 = arith.maximumf %338, %339 : vector<128x128xf32>
    %cst_123 = arith.constant 1.000000e-01 : f32
    %341 = vector.broadcast %cst_123 : f32 to vector<128x128xf32>
    %342 = arith.mulf %341, %340 : vector<128x128xf32>
    %343 = arith.addf %291, %342 : vector<128x128xf32>
    %cst_124 = arith.constant 1.000000e-01 : f32
    %344 = vector.broadcast %cst_124 : f32 to vector<128x128xf32>
    %345 = arith.mulf %344, %343 : vector<128x128xf32>
    %346 = arith.addf %294, %345 : vector<128x128xf32>
    %cst_125 = arith.constant 1.000000e-01 : f32
    %347 = vector.broadcast %cst_125 : f32 to vector<128x128xf32>
    %348 = arith.mulf %347, %302 : vector<128x128xf32>
    %349 = arith.subf %297, %348 : vector<128x128xf32>
    %cst_126 = arith.constant 1.000000e-01 : f32
    %350 = vector.broadcast %cst_126 : f32 to vector<128x128xf32>
    %351 = arith.mulf %350, %349 : vector<128x128xf32>
    %352 = arith.addf %300, %351 : vector<128x128xf32>
    %353 = arith.truncf %352 : vector<128x128xf32> to vector<128x128xbf16>
    %cst_127 = arith.constant dense<0.000000e+00> : vector<128x128xf32>
    %354 = tpu.matmul %353, %14, %cst_127 {dimension_numbers = #tpu.dot_dimension_numbers<[1], [0], [0], [1], [0, 0, 1, 1], [], []>} : vector<128x128xbf16>, vector<128x128xbf16>, vector<128x128xf32> -> vector<128x128xf32>
    %355 = arith.truncf %346 : vector<128x128xf32> to vector<128x128xbf16>
    %cst_128 = arith.constant dense<0.000000e+00> : vector<128x128xf32>
    %356 = tpu.matmul %355, %18, %cst_128 {dimension_numbers = #tpu.dot_dimension_numbers<[1], [0], [0], [1], [0, 0, 1, 1], [], []>} : vector<128x128xbf16>, vector<128x128xbf16>, vector<128x128xf32> -> vector<128x128xf32>
    %357 = vector.broadcast %2 : vector<1x128xf32> to vector<128x128xf32>
    %358 = arith.mulf %357, %318 : vector<128x128xf32>
    %359 = arith.addf %358, %354 : vector<128x128xf32>
    %360 = vector.broadcast %8 : vector<1x128xf32> to vector<128x128xf32>
    %361 = arith.addf %359, %360 : vector<128x128xf32>
    %cst_129 = arith.constant 0.000000e+00 : f32
    %362 = vector.broadcast %cst_129 : f32 to vector<128x128xf32>
    %363 = arith.maximumf %361, %362 : vector<128x128xf32>
    %cst_130 = arith.constant 1.000000e-01 : f32
    %364 = vector.broadcast %cst_130 : f32 to vector<128x128xf32>
    %365 = arith.mulf %364, %363 : vector<128x128xf32>
    %366 = arith.addf %315, %365 : vector<128x128xf32>
    %cst_131 = arith.constant 1.000000e-01 : f32
    %367 = vector.broadcast %cst_131 : f32 to vector<128x128xf32>
    %368 = arith.mulf %367, %366 : vector<128x128xf32>
    %369 = arith.addf %318, %368 : vector<128x128xf32>
    %370 = vector.broadcast %6 : vector<1x128xf32> to vector<128x128xf32>
    %371 = arith.mulf %370, %331 : vector<128x128xf32>
    %372 = arith.addf %371, %356 : vector<128x128xf32>
    %373 = vector.broadcast %12 : vector<1x128xf32> to vector<128x128xf32>
    %374 = arith.addf %372, %373 : vector<128x128xf32>
    %cst_132 = arith.constant 0.000000e+00 : f32
    %375 = vector.broadcast %cst_132 : f32 to vector<128x128xf32>
    %376 = arith.maximumf %374, %375 : vector<128x128xf32>
    %cst_133 = arith.constant 1.000000e-01 : f32
    %377 = vector.broadcast %cst_133 : f32 to vector<128x128xf32>
    %378 = arith.mulf %377, %376 : vector<128x128xf32>
    %379 = arith.addf %328, %378 : vector<128x128xf32>
    %cst_134 = arith.constant 1.000000e-01 : f32
    %380 = vector.broadcast %cst_134 : f32 to vector<128x128xf32>
    %381 = arith.mulf %380, %379 : vector<128x128xf32>
    %382 = arith.addf %331, %381 : vector<128x128xf32>
    %383 = arith.truncf %369 : vector<128x128xf32> to vector<128x128xbf16>
    %cst_135 = arith.constant dense<0.000000e+00> : vector<128x128xf32>
    %384 = tpu.matmul %383, %16, %cst_135 {dimension_numbers = #tpu.dot_dimension_numbers<[1], [0], [0], [1], [0, 0, 1, 1], [], []>} : vector<128x128xbf16>, vector<128x128xbf16>, vector<128x128xf32> -> vector<128x128xf32>
    %385 = vector.broadcast %4 : vector<1x128xf32> to vector<128x128xf32>
    %386 = arith.mulf %385, %346 : vector<128x128xf32>
    %387 = arith.addf %386, %384 : vector<128x128xf32>
    %388 = vector.broadcast %10 : vector<1x128xf32> to vector<128x128xf32>
    %389 = arith.addf %387, %388 : vector<128x128xf32>
    %cst_136 = arith.constant 0.000000e+00 : f32
    %390 = vector.broadcast %cst_136 : f32 to vector<128x128xf32>
    %391 = arith.maximumf %389, %390 : vector<128x128xf32>
    %cst_137 = arith.constant 1.000000e-01 : f32
    %392 = vector.broadcast %cst_137 : f32 to vector<128x128xf32>
    %393 = arith.mulf %392, %391 : vector<128x128xf32>
    %394 = arith.addf %343, %393 : vector<128x128xf32>
    %cst_138 = arith.constant 1.000000e-01 : f32
    %395 = vector.broadcast %cst_138 : f32 to vector<128x128xf32>
    %396 = arith.mulf %395, %394 : vector<128x128xf32>
    %397 = arith.addf %346, %396 : vector<128x128xf32>
    %398 = arith.truncf %397 : vector<128x128xf32> to vector<128x128xbf16>
    %cst_139 = arith.constant dense<0.000000e+00> : vector<128x128xf32>
    %399 = tpu.matmul %398, %18, %cst_139 {dimension_numbers = #tpu.dot_dimension_numbers<[1], [0], [0], [1], [0, 0, 1, 1], [], []>} : vector<128x128xbf16>, vector<128x128xbf16>, vector<128x128xf32> -> vector<128x128xf32>
    %400 = vector.broadcast %6 : vector<1x128xf32> to vector<128x128xf32>
    %401 = arith.mulf %400, %382 : vector<128x128xf32>
    %402 = arith.addf %401, %399 : vector<128x128xf32>
    %403 = vector.broadcast %12 : vector<1x128xf32> to vector<128x128xf32>
    %404 = arith.addf %402, %403 : vector<128x128xf32>
    %cst_140 = arith.constant 0.000000e+00 : f32
    %405 = vector.broadcast %cst_140 : f32 to vector<128x128xf32>
    %406 = arith.maximumf %404, %405 : vector<128x128xf32>
    %cst_141 = arith.constant 1.000000e-01 : f32
    %407 = vector.broadcast %cst_141 : f32 to vector<128x128xf32>
    %408 = arith.mulf %407, %406 : vector<128x128xf32>
    %409 = arith.addf %379, %408 : vector<128x128xf32>
    %cst_142 = arith.constant 1.000000e-01 : f32
    %410 = vector.broadcast %cst_142 : f32 to vector<128x128xf32>
    %411 = arith.mulf %410, %409 : vector<128x128xf32>
    %412 = arith.addf %382, %411 : vector<128x128xf32>
    %413 = arith.truncf %412 : vector<128x128xf32> to vector<128x128xbf16>
    %c0_143 = arith.constant 0 : index
    %c0_144 = arith.constant 0 : index
    %414 = vector.load %arg7[%c0_143, %c0_144] : memref<128x128xbf16, #tpu.memory_space<vmem>>, vector<128x128xbf16>
    %cst_145 = arith.constant dense<0.000000e+00> : vector<128x128xf32>
    %415 = tpu.matmul %413, %414, %cst_145 {dimension_numbers = #tpu.dot_dimension_numbers<[1], [0], [0], [1], [0, 0, 1, 1], [], []>} : vector<128x128xbf16>, vector<128x128xbf16>, vector<128x128xf32> -> vector<128x128xf32>
    %c0_146 = arith.constant 0 : index
    %c0_147 = arith.constant 0 : index
    %416 = vector.load %arg8[%c0_146, %c0_147] : memref<1x128xf32, #tpu.memory_space<vmem>>, vector<1x128xf32>
    %417 = vector.broadcast %416 : vector<1x128xf32> to vector<128x128xf32>
    %418 = arith.addf %415, %417 : vector<128x128xf32>
    %c0_148 = arith.constant 0 : index
    %c0_149 = arith.constant 0 : index
    %419 = vector.load %arg9[%c0_148, %c0_149] : memref<128x128xf32, #tpu.memory_space<vmem>>, vector<128x128xf32>
    tpu.vector_store %arg9[%c0_148, %c0_149], %418 {strides = array<i32>} : memref<128x128xf32, #tpu.memory_space<vmem>>, vector<128x128xf32>,
    return
  }
}

</mosaic_0001>

<llo_original>
// kernel: tpu_custom_call.1
$region0: #{tpu_custom_call.1}
  #allocation0 [shape = 'u32[]', space=smem, size = 0x4, offset = 0x4, fixed_abs, tag = 'smem constant byte address 0x4 - core index']
  #allocation1 [shape = 'u32[72,128]{1,0:T(1,128)}', space=vmem, size = 0x9000, scoped, tag = 'internal scratch']
  %s0 = inlined_call_operand.hbm [shape: bf16[128,128], index: 0, kind: input, shape index: {}]
  %s1 = inlined_call_operand.hbm [shape: bf16[128,128], index: 1, kind: input, shape index: {}]
  %s2 = inlined_call_operand.hbm [shape: bf16[128,128], index: 2, kind: input, shape index: {}]
  %s3 = inlined_call_operand.hbm [shape: f32[1,128], index: 3, kind: input, shape index: {}]
  %s4 = inlined_call_operand.vmem [shape: f32[3,1,128], index: 4, kind: input, shape index: {}]
  %s5 = inlined_call_operand.hbm [shape: bf16[3,128,128], index: 5, kind: input, shape index: {}]
  %s6 = inlined_call_operand.hbm [shape: f32[3,1,128], index: 6, kind: input, shape index: {}]
  %s7 = inlined_call_operand.hbm [shape: bf16[128,128], index: 7, kind: input, shape index: {}]
  %s8 = inlined_call_operand.vmem [shape: f32[1,128], index: 8, kind: input, shape index: {}]
  %s9 = inlined_call_operand.hbm [shape: f32[128,128], index: 9, kind: output, shape index: {}]
  %s10 = sld [smem:[#allocation0]]
  $region74: #{tpu_custom_call.1} parent=0
    _
  %s12 = ssub.s32 1, %s10
  %s13 = scalar_select 0, %s12, %s10
  $region1: #{tpu_custom_call.1} parent=0
    #allocation2 [shape = 'u8[32768]{0}', space=vmem, size = 0x8000, scoped, tag = 'input window, operand 0, single buffered']
    #allocation3 [shape = 's32[1]{0}', space=sflag, size = 0x4, scoped, tag = 'scoped memory for tpu_custom_call.1']
    #allocation4 [shape = 's32[1]{0}', space=sflag, size = 0x4, scoped, tag = 'scoped memory for tpu_custom_call.1']
    #allocation5 [shape = 'u8[32768]{0}', space=vmem, size = 0x8000, scoped, tag = 'input window, operand 1, single buffered']
    #allocation6 [shape = 's32[1]{0}', space=sflag, size = 0x4, scoped, tag = 'scoped memory for tpu_custom_call.1']
    #allocation7 [shape = 'u8[32768]{0}', space=vmem, size = 0x8000, scoped, tag = 'input window, operand 2, single buffered']
    #allocation8 [shape = 'u8[512]{0}', space=vmem, size = 0x400, scoped, tag = 'input window, operand 3, single buffered']
    #allocation9 [shape = 's32[1]{0}', space=sflag, size = 0x4, scoped, tag = 'scoped memory for tpu_custom_call.1']
    #allocation10 [shape = 'u8[98304]{0}', space=vmem, size = 0x18000, scoped, tag = 'input window, operand 5, single buffered']
    #allocation11 [shape = 'u8[1536]{0}', space=vmem, size = 0x800, scoped, tag = 'input window, operand 6, single buffered']
    #allocation12 [shape = 's32[1]{0}', space=sflag, size = 0x4, scoped, tag = 'scoped memory for tpu_custom_call.1']
    #allocation13 [shape = 'u8[32768]{0}', space=vmem, size = 0x8000, scoped, tag = 'input window, operand 7, single buffered']
    #allocation14 [shape = 'u8[65536]{0}', space=vmem, size = 0x10000, scoped, tag = 'output window, operand 0, single buffered']
    %14 = vsyncpa [#allocation3], 0
    %15 = vsyncpa [#allocation6], 0
    %16 = vsyncpa [#allocation9], 0
    %17 = vsyncpa [#allocation12], 0
    %18 = vsyncpa [#allocation4], 0
    // Predicated region
    $region2: #{tpu_custom_call.1} parent=1 // pred_check
      _
    $region3: #{tpu_custom_call.1} parent=1 // pred_check_branch
      %20 = sbr.rel (0) target = $region5
    $region4: #{tpu_custom_call.1} parent=1 // pred_region
      %22 = vsyncadd [#allocation3], 0
      %s23 = sshll.u32 %s0, 4
      %s24 = int_to_ptr.hbm [resolvable:$true] %s23
      %s25 = sshll.u32 [#allocation2], 4
      %s26 = int_to_ptr.vmem [resolvable:$true] %s25
      %31 = dma.hbm_to_vmem [thread:$0]  %s24, 1024, %s26, [#allocation3], 64, 64, 4
    $region5: #{tpu_custom_call.1} parent=1 // pred_fallthru
      _
    // Predicated region
    $region6: #{tpu_custom_call.1} parent=1 // pred_check
      _
    $region7: #{tpu_custom_call.1} parent=1 // pred_check_branch
      %33 = sbr.rel (0) target = $region9
    $region8: #{tpu_custom_call.1} parent=1 // pred_region
      %35 = vsyncadd [#allocation6], 0
      %s36 = sshll.u32 %s1, 4
      %s37 = int_to_ptr.hbm [resolvable:$true] %s36
      %s38 = sshll.u32 [#allocation5], 4
      %s39 = int_to_ptr.vmem [resolvable:$true] %s38
      %44 = dma.hbm_to_vmem [thread:$0]  %s37, 1024, %s39, [#allocation6], 64, 64, 4
    $region9: #{tpu_custom_call.1} parent=1 // pred_fallthru
      _
    // Predicated region
    $region10: #{tpu_custom_call.1} parent=1 // pred_check
      _
    $region11: #{tpu_custom_call.1} parent=1 // pred_check_branch
      %46 = sbr.rel (0) target = $region13
    $region12: #{tpu_custom_call.1} parent=1 // pred_region
      %48 = vsyncadd [#allocation6], 0
      %s49 = sshll.u32 %s2, 4
      %s50 = int_to_ptr.hbm [resolvable:$true] %s49
      %s51 = sshll.u32 [#allocation7], 4
      %s52 = int_to_ptr.vmem [resolvable:$true] %s51
      %57 = dma.hbm_to_vmem [thread:$0]  %s50, 1024, %s52, [#allocation6], 64, 64, 4
    $region13: #{tpu_custom_call.1} parent=1 // pred_fallthru
      _
    // Predicated region
    $region14: #{tpu_custom_call.1} parent=1 // pred_check
      _
    $region15: #{tpu_custom_call.1} parent=1 // pred_check_branch
      %59 = sbr.rel (0) target = $region17
    $region16: #{tpu_custom_call.1} parent=1 // pred_region
      %61 = vsyncadd [#allocation9], 0
      %s63 = sshll.u32 %s3, 4
      %s64 = int_to_ptr.hbm [resolvable:$true] %s63
      %s65 = sshll.u32 [#allocation8], 4
      %s66 = int_to_ptr.vmem [resolvable:$true] %s65
      %68 = dma.hbm_to_vmem [thread:$0]  %s64, 16, %s66, [#allocation9]
    $region17: #{tpu_custom_call.1} parent=1 // pred_fallthru
      _
    // Predicated region
    $region18: #{tpu_custom_call.1} parent=1 // pred_check
      _
    $region19: #{tpu_custom_call.1} parent=1 // pred_check_branch
      %70 = sbr.rel (0) target = $region21
    $region20: #{tpu_custom_call.1} parent=1 // pred_region
      _
    $region21: #{tpu_custom_call.1} parent=1 // pred_fallthru
      _
    // Predicated region
    $region22: #{tpu_custom_call.1} parent=1 // pred_check
      _
    $region23: #{tpu_custom_call.1} parent=1 // pred_check_branch
      %72 = sbr.rel (0) target = $region25
    $region24: #{tpu_custom_call.1} parent=1 // pred_region
      %74 = vsyncadd [#allocation9], 0
      %s75 = sshll.u32 %s5, 4
      %s76 = int_to_ptr.hbm [resolvable:$true] %s75
      %s77 = sshll.u32 [#allocation10], 4
      %s78 = int_to_ptr.vmem [resolvable:$true] %s77
      %83 = dma.hbm_to_vmem [thread:$0]  %s76, 3072, %s78, [#allocation9], 64, 64, 4
    $region25: #{tpu_custom_call.1} parent=1 // pred_fallthru
      _
    // Predicated region
    $region26: #{tpu_custom_call.1} parent=1 // pred_check
      _
    $region27: #{tpu_custom_call.1} parent=1 // pred_check_branch
      %85 = sbr.rel (0) target = $region29
    $region28: #{tpu_custom_call.1} parent=1 // pred_region
      %87 = vsyncadd [#allocation12], 0
      %s88 = sshll.u32 %s6, 4
      %s89 = int_to_ptr.hbm [resolvable:$true] %s88
      %s90 = sshll.u32 [#allocation11], 4
      %s91 = int_to_ptr.vmem [resolvable:$true] %s90
      %96 = dma.hbm_to_vmem [thread:$0]  %s89, 48, %s91, [#allocation12], 16, 16, 1
    $region29: #{tpu_custom_call.1} parent=1 // pred_fallthru
      _
    // Predicated region
    $region30: #{tpu_custom_call.1} parent=1 // pred_check
      _
    $region31: #{tpu_custom_call.1} parent=1 // pred_check_branch
      %98 = sbr.rel (0) target = $region33
    $region32: #{tpu_custom_call.1} parent=1 // pred_region
      %100 = vsyncadd [#allocation12], 0
      %s101 = sshll.u32 %s7, 4
      %s102 = int_to_ptr.hbm [resolvable:$true] %s101
      %s103 = sshll.u32 [#allocation13], 4
      %s104 = int_to_ptr.vmem [resolvable:$true] %s103
      %109 = dma.hbm_to_vmem [thread:$0]  %s102, 1024, %s104, [#allocation12], 64, 64, 4
    $region33: #{tpu_custom_call.1} parent=1 // pred_fallthru
      _
    // Predicated region
    $region34: #{tpu_custom_call.1} parent=1 // pred_check
      _
    $region35: #{tpu_custom_call.1} parent=1 // pred_check_branch
      %111 = sbr.rel (0) target = $region37
    $region36: #{tpu_custom_call.1} parent=1 // pred_region
      _
    $region37: #{tpu_custom_call.1} parent=1 // pred_fallthru
      _
    // Predicated region
    $region38: #{tpu_custom_call.1} parent=1 // pred_check
      _
    $region39: #{tpu_custom_call.1} parent=1 // pred_check_branch
      %113 = sbr.rel (0) target = $region41
    $region40: #{tpu_custom_call.1} parent=1 // pred_region
      %115 = dma.done [#allocation3], 1024
    $region41: #{tpu_custom_call.1} parent=1 // pred_fallthru
      _
    // Predicated region
    $region42: #{tpu_custom_call.1} parent=1 // pred_check
      _
    $region43: #{tpu_custom_call.1} parent=1 // pred_check_branch
      %117 = sbr.rel (0) target = $region45
    $region44: #{tpu_custom_call.1} parent=1 // pred_region
      %119 = dma.done [#allocation6], 1024
    $region45: #{tpu_custom_call.1} parent=1 // pred_fallthru
      _
    // Predicated region
    $region46: #{tpu_custom_call.1} parent=1 // pred_check
      _
    $region47: #{tpu_custom_call.1} parent=1 // pred_check_branch
      %121 = sbr.rel (0) target = $region49
    $region48: #{tpu_custom_call.1} parent=1 // pred_region
      %123 = dma.done [#allocation6], 1024
    $region49: #{tpu_custom_call.1} parent=1 // pred_fallthru
      _
    // Predicated region
    $region50: #{tpu_custom_call.1} parent=1 // pred_check
      _
    $region51: #{tpu_custom_call.1} parent=1 // pred_check_branch
      %125 = sbr.rel (0) target = $region53
    $region52: #{tpu_custom_call.1} parent=1 // pred_region
      %127 = dma.done [#allocation9], 16
    $region53: #{tpu_custom_call.1} parent=1 // pred_fallthru
      _
    // Predicated region
    $region54: #{tpu_custom_call.1} parent=1 // pred_check
      _
    $region55: #{tpu_custom_call.1} parent=1 // pred_check_branch
      %129 = sbr.rel (0) target = $region57
    $region56: #{tpu_custom_call.1} parent=1 // pred_region
      %131 = dma.done [#allocation9], 3072
    $region57: #{tpu_custom_call.1} parent=1 // pred_fallthru
      _
    // Predicated region
    $region58: #{tpu_custom_call.1} parent=1 // pred_check
      _
    $region59: #{tpu_custom_call.1} parent=1 // pred_check_branch
      %133 = sbr.rel (0) target = $region61
    $region60: #{tpu_custom_call.1} parent=1 // pred_region
      %135 = dma.done [#allocation12], 48
    $region61: #{tpu_custom_call.1} parent=1 // pred_fallthru
      _
    // Predicated region
    $region62: #{tpu_custom_call.1} parent=1 // pred_check
      _
    $region63: #{tpu_custom_call.1} parent=1 // pred_check_branch
      %137 = sbr.rel (0) target = $region65
    $region64: #{tpu_custom_call.1} parent=1 // pred_region
      %139 = dma.done [#allocation12], 1024
    $region65: #{tpu_custom_call.1} parent=1 // pred_fallthru
      _
    %v141 = vld [vmem:[#allocation5] sm:$0xf]
    %v142 = vld [vmem:[#allocation5 + $0x4] sm:$0xf]
    %v143 = vld [vmem:[#allocation5 + $0x8] sm:$0xf]
    %v144 = vld [vmem:[#allocation5 + $0xc] sm:$0xf]
    %v145 = vld [vmem:[#allocation5 + $0x10] sm:$0xf]
    %v146 = vld [vmem:[#allocation5 + $0x14] sm:$0xf]
    %v147 = vld [vmem:[#allocation5 + $0x18] sm:$0xf]
    %v148 = vld [vmem:[#allocation5 + $0x1c] sm:$0xf]
    %v149 = vld [vmem:[#allocation5 + $0x20] sm:$0xf]
    %v150 = vld [vmem:[#allocation5 + $0x24] sm:$0xf]
    %v151 = vld [vmem:[#allocation5 + $0x28] sm:$0xf]
    %v152 = vld [vmem:[#allocation5 + $0x2c] sm:$0xf]
    %v153 = vld [vmem:[#allocation5 + $0x30] sm:$0xf]
    %v154 = vld [vmem:[#allocation5 + $0x34] sm:$0xf]
    %v155 = vld [vmem:[#allocation5 + $0x38] sm:$0xf]
    %v156 = vld [vmem:[#allocation5 + $0x3c] sm:$0xf]
    %v157 = vld [vmem:[%s4] sm:$0x1]
    %s158 = scalar_lea.vmem %s4, 1
    %v159 = vld [vmem:[%s158] sm:$0x1]
    %s160 = scalar_lea.vmem %s4, 2
    %v161 = vld [vmem:[%s160] sm:$0x1]
    %v162 = vld [vmem:[#allocation11] sm:$0x1]
    %s163 = scalar_lea.vmem [#allocation11], 1
    %v164 = vld [vmem:[%s163] sm:$0x1]
    %s165 = scalar_lea.vmem [#allocation11], 2
    %v166 = vld [vmem:[%s165] sm:$0x1]
    %v167 = vld [vmem:[#allocation10] sm:$0xf]
    %v168 = vld [vmem:[#allocation10 + $0x4] sm:$0xf]
    %v169 = vld [vmem:[#allocation10 + $0x8] sm:$0xf]
    %v170 = vld [vmem:[#allocation10 + $0xc] sm:$0xf]
    %v171 = vld [vmem:[#allocation10 + $0x10] sm:$0xf]
    %v172 = vld [vmem:[#allocation10 + $0x14] sm:$0xf]
    %v173 = vld [vmem:[#allocation10 + $0x18] sm:$0xf]
    %v174 = vld [vmem:[#allocation10 + $0x1c] sm:$0xf]
    %v175 = vld [vmem:[#allocation10 + $0x20] sm:$0xf]
    %v176 = vld [vmem:[#allocation10 + $0x24] sm:$0xf]
    %v177 = vld [vmem:[#allocation10 + $0x28] sm:$0xf]
    %v178 = vld [vmem:[#allocation10 + $0x2c] sm:$0xf]
    %v179 = vld [vmem:[#allocation10 + $0x30] sm:$0xf]
    %v180 = vld [vmem:[#allocation10 + $0x34] sm:$0xf]
    %v181 = vld [vmem:[#allocation10 + $0x38] sm:$0xf]
    %v182 = vld [vmem:[#allocation10 + $0x3c] sm:$0xf]
    %s183 = scalar_lea.vmem [#allocation10], 64
    %v184 = vld [vmem:[%s183] sm:$0xf]
    %v185 = vld [vmem:[%s183 + $0x4] sm:$0xf]
    %v186 = vld [vmem:[%s183 + $0x8] sm:$0xf]
    %v187 = vld [vmem:[%s183 + $0xc] sm:$0xf]
    %v188 = vld [vmem:[%s183 + $0x10] sm:$0xf]
    %v189 = vld [vmem:[%s183 + $0x14] sm:$0xf]
    %v190 = vld [vmem:[%s183 + $0x18] sm:$0xf]
    %v191 = vld [vmem:[%s183 + $0x1c] sm:$0xf]
    %v192 = vld [vmem:[%s183 + $0x20] sm:$0xf]
    %v193 = vld [vmem:[%s183 + $0x24] sm:$0xf]
    %v194 = vld [vmem:[%s183 + $0x28] sm:$0xf]
    %v195 = vld [vmem:[%s183 + $0x2c] sm:$0xf]
    %v196 = vld [vmem:[%s183 + $0x30] sm:$0xf]
    %v197 = vld [vmem:[%s183 + $0x34] sm:$0xf]
    %v198 = vld [vmem:[%s183 + $0x38] sm:$0xf]
    %v199 = vld [vmem:[%s183 + $0x3c] sm:$0xf]
    %s200 = scalar_lea.vmem [#allocation10], 128
    %v201 = vld [vmem:[%s200] sm:$0xf]
    %v202 = vld [vmem:[%s200 + $0x4] sm:$0xf]
    %v203 = vld [vmem:[%s200 + $0x8] sm:$0xf]
    %v204 = vld [vmem:[%s200 + $0xc] sm:$0xf]
    %v205 = vld [vmem:[%s200 + $0x10] sm:$0xf]
    %v206 = vld [vmem:[%s200 + $0x14] sm:$0xf]
    %v207 = vld [vmem:[%s200 + $0x18] sm:$0xf]
    %v208 = vld [vmem:[%s200 + $0x1c] sm:$0xf]
    %v209 = vld [vmem:[%s200 + $0x20] sm:$0xf]
    %v210 = vld [vmem:[%s200 + $0x24] sm:$0xf]
    %v211 = vld [vmem:[%s200 + $0x28] sm:$0xf]
    %v212 = vld [vmem:[%s200 + $0x2c] sm:$0xf]
    %v213 = vld [vmem:[%s200 + $0x30] sm:$0xf]
    %v214 = vld [vmem:[%s200 + $0x34] sm:$0xf]
    %v215 = vld [vmem:[%s200 + $0x38] sm:$0xf]
    %v216 = vld [vmem:[%s200 + $0x3c] sm:$0xf]
    %v217 = vld [vmem:[#allocation2] sm:$0xf]
    %v218 = vld [vmem:[#allocation2 + $0x4] sm:$0xf]
    %v219 = vld [vmem:[#allocation2 + $0x8] sm:$0xf]
    %v220 = vld [vmem:[#allocation2 + $0xc] sm:$0xf]
    %v221 = vld [vmem:[#allocation2 + $0x10] sm:$0xf]
    %v222 = vld [vmem:[#allocation2 + $0x14] sm:$0xf]
    %v223 = vld [vmem:[#allocation2 + $0x18] sm:$0xf]
    %v224 = vld [vmem:[#allocation2 + $0x1c] sm:$0xf]
    %v225 = vld [vmem:[#allocation2 + $0x20] sm:$0xf]
    %v226 = vld [vmem:[#allocation2 + $0x24] sm:$0xf]
    %v227 = vld [vmem:[#allocation2 + $0x28] sm:$0xf]
    %v228 = vld [vmem:[#allocation2 + $0x2c] sm:$0xf]
    %v229 = vld [vmem:[#allocation2 + $0x30] sm:$0xf]
    %v230 = vld [vmem:[#allocation2 + $0x34] sm:$0xf]
    %v231 = vld [vmem:[#allocation2 + $0x38] sm:$0xf]
    %v232 = vld [vmem:[#allocation2 + $0x3c] sm:$0xf]
    %v233 = vld [vmem:[#allocation7] sm:$0xf]
    %v234 = vld [vmem:[#allocation7 + $0x4] sm:$0xf]
    %v235 = vld [vmem:[#allocation7 + $0x8] sm:$0xf]
    %v236 = vld [vmem:[#allocation7 + $0xc] sm:$0xf]
    %v237 = vld [vmem:[#allocation7 + $0x10] sm:$0xf]
    %v238 = vld [vmem:[#allocation7 + $0x14] sm:$0xf]
    %v239 = vld [vmem:[#allocation7 + $0x18] sm:$0xf]
    %v240 = vld [vmem:[#allocation7 + $0x1c] sm:$0xf]
    %v241 = vld [vmem:[#allocation7 + $0x20] sm:$0xf]
    %v242 = vld [vmem:[#allocation7 + $0x24] sm:$0xf]
    %v243 = vld [vmem:[#allocation7 + $0x28] sm:$0xf]
    %v244 = vld [vmem:[#allocation7 + $0x2c] sm:$0xf]
    %v245 = vld [vmem:[#allocation7 + $0x30] sm:$0xf]
    %v246 = vld [vmem:[#allocation7 + $0x34] sm:$0xf]
    %v247 = vld [vmem:[#allocation7 + $0x38] sm:$0xf]
    %v248 = vld [vmem:[#allocation7 + $0x3c] sm:$0xf]
    %v249 = vld [vmem:[#allocation8] sm:$0x1]
    %v251 = vperm.slane %v249, 0
    %v269 = vunpack.c.l.b16 %v217
    %v270 = vunpack.c.l.b16 %v218
    %v271 = vunpack.c.l.b16 %v219
    %v272 = vunpack.c.l.b16 %v220
    %v273 = vunpack.c.l.b16 %v221
    %v274 = vunpack.c.l.b16 %v222
    %v275 = vunpack.c.l.b16 %v223
    %v276 = vunpack.c.l.b16 %v224
    %v277 = vunpack.c.l.b16 %v225
    %v278 = vunpack.c.l.b16 %v226
    %v279 = vunpack.c.l.b16 %v227
    %v280 = vunpack.c.l.b16 %v228
    %v281 = vunpack.c.l.b16 %v229
    %v282 = vunpack.c.l.b16 %v230
    %v283 = vunpack.c.l.b16 %v231
    %v284 = vunpack.c.l.b16 %v232
    %v285 = vpack.c.b16 %v270, %v269
    %v286 = vpack.c.b16 %v272, %v271
    %v287 = vpack.c.b16 %v274, %v273
    %v288 = vpack.c.b16 %v276, %v275
    %v289 = vpack.c.b16 %v278, %v277
    %v290 = vpack.c.b16 %v280, %v279
    %v291 = vpack.c.b16 %v282, %v281
    %v292 = vpack.c.b16 %v284, %v283
    %v317 = vunpack.c.l.b16 %v233
    %v318 = vunpack.c.l.b16 %v234
    %v319 = vunpack.c.l.b16 %v235
    %v320 = vunpack.c.l.b16 %v236
    %v321 = vunpack.c.l.b16 %v237
    %v322 = vunpack.c.l.b16 %v238
    %v323 = vunpack.c.l.b16 %v239
    %v324 = vunpack.c.l.b16 %v240
    %v325 = vunpack.c.l.b16 %v241
    %v326 = vunpack.c.l.b16 %v242
    %v327 = vunpack.c.l.b16 %v243
    %v328 = vunpack.c.l.b16 %v244
    %v329 = vunpack.c.l.b16 %v245
    %v330 = vunpack.c.l.b16 %v246
    %v331 = vunpack.c.l.b16 %v247
    %v332 = vunpack.c.l.b16 %v248
    %v333 = vpack.c.b16 %v318, %v317
    %v334 = vpack.c.b16 %v320, %v319
    %v335 = vpack.c.b16 %v322, %v321
    %v336 = vpack.c.b16 %v324, %v323
    %v337 = vpack.c.b16 %v326, %v325
    %v338 = vpack.c.b16 %v328, %v327
    %v339 = vpack.c.b16 %v330, %v329
    %v340 = vpack.c.b16 %v332, %v331
    %349 = vmatpush.bf16.msra.mxu0 %v340
    %350 = vmatpush.bf16.msra.mxu0 %v339
    %351 = vmatpush.bf16.msra.mxu0 %v338
    %352 = vmatpush.bf16.msra.mxu0 %v337
    %353 = vmatpush.bf16.msra.mxu0 %v336
    %354 = vmatpush.bf16.msra.mxu0 %v335
    %355 = vmatpush.bf16.msra.mxu0 %v334
    %356 = vmatpush.bf16.msra.mxu0 %v333
    %357 = vmatmul.bf16.gmra.mxu0 %v285
    %v358 = vpop.f32.mrf.mxu0
    %v359 = vadd.f32 %v251, %v358
    %v360 = vpop.f32.mrf.mxu0
    %v361 = vadd.f32 %v251, %v360
    %362 = vmatmul.bf16.gmra.mxu0 %v286
    %v363 = vpop.f32.mrf.mxu0
    %v364 = vadd.f32 %v251, %v363
    %v365 = vpop.f32.mrf.mxu0
    %v366 = vadd.f32 %v251, %v365
    %367 = vmatmul.bf16.gmra.mxu0 %v287
    %v368 = vpop.f32.mrf.mxu0
    %v369 = vadd.f32 %v251, %v368
    %v370 = vpop.f32.mrf.mxu0
    %v371 = vadd.f32 %v251, %v370
    %372 = vmatmul.bf16.gmra.mxu0 %v288
    %v373 = vpop.f32.mrf.mxu0
    %v374 = vadd.f32 %v251, %v373
    %v375 = vpop.f32.mrf.mxu0
    %v376 = vadd.f32 %v251, %v375
    %377 = vmatmul.bf16.gmra.mxu0 %v289
    %v378 = vpop.f32.mrf.mxu0
    %v379 = vadd.f32 %v251, %v378
    %v380 = vpop.f32.mrf.mxu0
    %v381 = vadd.f32 %v251, %v380
    %382 = vmatmul.bf16.gmra.mxu0 %v290
    %v383 = vpop.f32.mrf.mxu0
    %v384 = vadd.f32 %v251, %v383
    %v385 = vpop.f32.mrf.mxu0
    %v386 = vadd.f32 %v251, %v385
    %387 = vmatmul.bf16.gmra.mxu0 %v291
    %v388 = vpop.f32.mrf.mxu0
    %v389 = vadd.f32 %v251, %v388
    %v390 = vpop.f32.mrf.mxu0
    %v391 = vadd.f32 %v251, %v390
    %392 = vmatmul.bf16.gmra.mxu0 %v292
    %v393 = vpop.f32.mrf.mxu0
    %v394 = vadd.f32 %v251, %v393
    %v395 = vpop.f32.mrf.mxu0
    %v396 = vadd.f32 %v251, %v395
    %397 = vdwg.mxu0
    %v398 = vlaneseq
    %v399 = vshrl.u32 %v398, 7
    %v400 = vadd.s32 %v399, 8
    %v401 = vadd.s32 %v399, 16
    %v402 = vadd.s32 %v399, 24
    %v403 = vadd.s32 %v399, 32
    %v404 = vadd.s32 %v399, 40
    %v405 = vadd.s32 %v399, 48
    %v406 = vadd.s32 %v399, 56
    %v407 = vadd.s32 %v399, 64
    %v408 = vadd.s32 %v399, 72
    %v409 = vadd.s32 %v399, 80
    %v410 = vadd.s32 %v399, 88
    %v411 = vadd.s32 %v399, 96
    %v412 = vadd.s32 %v399, 104
    %v413 = vadd.s32 %v399, 112
    %v414 = vadd.s32 %v399, 120
    %vm415 = vcmp.lt.s32.totalorder %v399, 16
    %vm416 = vcmp.lt.s32.totalorder %v400, 16
    %vm417 = vcmp.lt.s32.totalorder %v401, 16
    %vm418 = vcmp.lt.s32.totalorder %v402, 16
    %vm419 = vcmp.lt.s32.totalorder %v403, 16
    %vm420 = vcmp.lt.s32.totalorder %v404, 16
    %vm421 = vcmp.lt.s32.totalorder %v405, 16
    %vm422 = vcmp.lt.s32.totalorder %v406, 16
    %vm423 = vcmp.lt.s32.totalorder %v407, 16
    %vm424 = vcmp.lt.s32.totalorder %v408, 16
    %vm425 = vcmp.lt.s32.totalorder %v409, 16
    %vm426 = vcmp.lt.s32.totalorder %v410, 16
    %vm427 = vcmp.lt.s32.totalorder %v411, 16
    %vm428 = vcmp.lt.s32.totalorder %v412, 16
    %vm429 = vcmp.lt.s32.totalorder %v413, 16
    %vm430 = vcmp.lt.s32.totalorder %v414, 16
    %v431 = vsel %vm415, 1, 0
    %v432 = vsel %vm416, 1, 0
    %v433 = vsel %vm417, 1, 0
    %v434 = vsel %vm418, 1, 0
    %v435 = vsel %vm419, 1, 0
    %v436 = vsel %vm420, 1, 0
    %v437 = vsel %vm421, 1, 0
    %v438 = vsel %vm422, 1, 0
    %v439 = vsel %vm423, 1, 0
    %v440 = vsel %vm424, 1, 0
    %v441 = vsel %vm425, 1, 0
    %v442 = vsel %vm426, 1, 0
    %v443 = vsel %vm427, 1, 0
    %v444 = vsel %vm428, 1, 0
    %v445 = vsel %vm429, 1, 0
    %v446 = vsel %vm430, 1, 0
    %vm447 = vcmp.eq.s32.totalorder %v431, 1
    %vm448 = vcmp.eq.s32.totalorder %v432, 1
    %vm449 = vcmp.eq.s32.totalorder %v433, 1
    %vm450 = vcmp.eq.s32.totalorder %v434, 1
    %vm451 = vcmp.eq.s32.totalorder %v435, 1
    %vm452 = vcmp.eq.s32.totalorder %v436, 1
    %vm453 = vcmp.eq.s32.totalorder %v437, 1
    %vm454 = vcmp.eq.s32.totalorder %v438, 1
    %vm455 = vcmp.eq.s32.totalorder %v439, 1
    %vm456 = vcmp.eq.s32.totalorder %v440, 1
    %vm457 = vcmp.eq.s32.totalorder %v441, 1
    %vm458 = vcmp.eq.s32.totalorder %v442, 1
    %vm459 = vcmp.eq.s32.totalorder %v443, 1
    %vm460 = vcmp.eq.s32.totalorder %v444, 1
    %vm461 = vcmp.eq.s32.totalorder %v445, 1
    %vm462 = vcmp.eq.s32.totalorder %v446, 1
    %v463 = vsel %vm447, %v359, 0.0
    %v464 = vsel %vm448, %v361, 0.0
    %v465 = vsel %vm449, %v364, 0.0
    %v466 = vsel %vm450, %v366, 0.0
    %v467 = vsel %vm451, %v369, 0.0
    %v468 = vsel %vm452, %v371, 0.0
    %v469 = vsel %vm453, %v374, 0.0
    %v470 = vsel %vm454, %v376, 0.0
    %v471 = vsel %vm455, %v379, 0.0
    %v472 = vsel %vm456, %v381, 0.0
    %v473 = vsel %vm457, %v384, 0.0
    %v474 = vsel %vm458, %v386, 0.0
    %v475 = vsel %vm459, %v389, 0.0
    %v476 = vsel %vm460, %v391, 0.0
    %v477 = vsel %vm461, %v394, 0.0
    %v478 = vsel %vm462, %v396, 0.0
    %v479 = vpack.c.bf16 %v464, %v463
    %v480 = vpack.c.bf16 %v466, %v465
    %v481 = vpack.c.bf16 %v468, %v467
    %v482 = vpack.c.bf16 %v470, %v469
    %v483 = vpack.c.bf16 %v472, %v471
    %v484 = vpack.c.bf16 %v474, %v473
    %v485 = vpack.c.bf16 %v476, %v475
    %v486 = vpack.c.bf16 %v478, %v477
    %v503 = vunpack.c.l.b16 %v141
    %v504 = vunpack.c.l.b16 %v142
    %v505 = vunpack.c.l.b16 %v143
    %v506 = vunpack.c.l.b16 %v144
    %v507 = vunpack.c.l.b16 %v145
    %v508 = vunpack.c.l.b16 %v146
    %v509 = vunpack.c.l.b16 %v147
    %v510 = vunpack.c.l.b16 %v148
    %v511 = vunpack.c.l.b16 %v149
    %v512 = vunpack.c.l.b16 %v150
    %v513 = vunpack.c.l.b16 %v151
    %v514 = vunpack.c.l.b16 %v152
    %v515 = vunpack.c.l.b16 %v153
    %v516 = vunpack.c.l.b16 %v154
    %v517 = vunpack.c.l.b16 %v155
    %v518 = vunpack.c.l.b16 %v156
    %v519 = vpack.c.b16 %v504, %v503
    %v520 = vpack.c.b16 %v506, %v505
    %v521 = vpack.c.b16 %v508, %v507
    %v522 = vpack.c.b16 %v510, %v509
    %v523 = vpack.c.b16 %v512, %v511
    %v524 = vpack.c.b16 %v514, %v513
    %v525 = vpack.c.b16 %v516, %v515
    %v526 = vpack.c.b16 %v518, %v517
    %535 = vmatpush.bf16.msra.mxu0 %v486
    %536 = vmatpush.bf16.msra.mxu0 %v485
    %537 = vmatpush.bf16.msra.mxu0 %v484
    %538 = vmatpush.bf16.msra.mxu0 %v483
    %539 = vmatpush.bf16.msra.mxu0 %v482
    %540 = vmatpush.bf16.msra.mxu0 %v481
    %541 = vmatpush.bf16.msra.mxu0 %v480
    %542 = vmatpush.bf16.msra.mxu0 %v479
    %543 = vmatmul.bf16.gmra.mxu0 %v519
    %v544 = vpop.f32.mrf.mxu0
    %v545 = vadd.f32 0.0, %v544
    %v546 = vpop.f32.mrf.mxu0
    %v547 = vadd.f32 0.0, %v546
    %548 = vmatmul.bf16.gmra.mxu0 %v520
    %v549 = vpop.f32.mrf.mxu0
    %v550 = vadd.f32 0.0, %v549
    %v551 = vpop.f32.mrf.mxu0
    %v552 = vadd.f32 0.0, %v551
    %553 = vmatmul.bf16.gmra.mxu0 %v521
    %v554 = vpop.f32.mrf.mxu0
    %v555 = vadd.f32 0.0, %v554
    %v556 = vpop.f32.mrf.mxu0
    %v557 = vadd.f32 0.0, %v556
    %558 = vmatmul.bf16.gmra.mxu0 %v522
    %v559 = vpop.f32.mrf.mxu0
    %v560 = vadd.f32 0.0, %v559
    %v561 = vpop.f32.mrf.mxu0
    %v562 = vadd.f32 0.0, %v561
    %563 = vmatmul.bf16.gmra.mxu0 %v523
    %v564 = vpop.f32.mrf.mxu0
    %v565 = vadd.f32 0.0, %v564
    %v566 = vpop.f32.mrf.mxu0
    %v567 = vadd.f32 0.0, %v566
    %568 = vmatmul.bf16.gmra.mxu0 %v524
    %v569 = vpop.f32.mrf.mxu0
    %v570 = vadd.f32 0.0, %v569
    %v571 = vpop.f32.mrf.mxu0
    %v572 = vadd.f32 0.0, %v571
    %573 = vmatmul.bf16.gmra.mxu0 %v525
    %v574 = vpop.f32.mrf.mxu0
    %v575 = vadd.f32 0.0, %v574
    %v576 = vpop.f32.mrf.mxu0
    %v577 = vadd.f32 0.0, %v576
    %578 = vmatmul.bf16.gmra.mxu0 %v526
    %v579 = vpop.f32.mrf.mxu0
    %v580 = vadd.f32 0.0, %v579
    %v581 = vpop.f32.mrf.mxu0
    %v582 = vadd.f32 0.0, %v581
    %583 = vdwg.mxu0
    %v584 = vmul.f32 %v545, 0.1
    %v585 = vmul.f32 %v547, 0.1
    %v586 = vmul.f32 %v550, 0.1
    %v587 = vmul.f32 %v552, 0.1
    %v588 = vmul.f32 %v555, 0.1
    %v589 = vmul.f32 %v557, 0.1
    %v590 = vmul.f32 %v560, 0.1
    %v591 = vmul.f32 %v562, 0.1
    %v592 = vmul.f32 %v565, 0.1
    %v593 = vmul.f32 %v567, 0.1
    %v594 = vmul.f32 %v570, 0.1
    %v595 = vmul.f32 %v572, 0.1
    %v596 = vmul.f32 %v575, 0.1
    %v597 = vmul.f32 %v577, 0.1
    %v598 = vmul.f32 %v580, 0.1
    %v599 = vmul.f32 %v582, 0.1
    %v600 = vsub.f32 0.0, %v584
    %v601 = vsub.f32 0.0, %v585
    %v602 = vsub.f32 0.0, %v586
    %v603 = vsub.f32 0.0, %v587
    %v604 = vsub.f32 0.0, %v588
    %v605 = vsub.f32 0.0, %v589
    %v606 = vsub.f32 0.0, %v590
    %v607 = vsub.f32 0.0, %v591
    %v608 = vsub.f32 0.0, %v592
    %v609 = vsub.f32 0.0, %v593
    %v610 = vsub.f32 0.0, %v594
    %v611 = vsub.f32 0.0, %v595
    %v612 = vsub.f32 0.0, %v596
    %v613 = vsub.f32 0.0, %v597
    %v614 = vsub.f32 0.0, %v598
    %v615 = vsub.f32 0.0, %v599
    %v616 = vmul.f32 %v600, 0.1
    %v617 = vmul.f32 %v601, 0.1
    %v618 = vmul.f32 %v602, 0.1
    %v619 = vmul.f32 %v603, 0.1
    %v620 = vmul.f32 %v604, 0.1
    %v621 = vmul.f32 %v605, 0.1
    %v622 = vmul.f32 %v606, 0.1
    %v623 = vmul.f32 %v607, 0.1
    %v624 = vmul.f32 %v608, 0.1
    %v625 = vmul.f32 %v609, 0.1
    %v626 = vmul.f32 %v610, 0.1
    %v627 = vmul.f32 %v611, 0.1
    %v628 = vmul.f32 %v612, 0.1
    %v629 = vmul.f32 %v613, 0.1
    %v630 = vmul.f32 %v614, 0.1
    %v631 = vmul.f32 %v615, 0.1
    %v632 = vadd.f32 %v463, %v616
    %v633 = vadd.f32 %v464, %v617
    %v634 = vadd.f32 %v465, %v618
    %v635 = vadd.f32 %v466, %v619
    %v636 = vadd.f32 %v467, %v620
    %v637 = vadd.f32 %v468, %v621
    %v638 = vadd.f32 %v469, %v622
    %v639 = vadd.f32 %v470, %v623
    %v640 = vadd.f32 %v471, %v624
    %v641 = vadd.f32 %v472, %v625
    %v642 = vadd.f32 %v473, %v626
    %v643 = vadd.f32 %v474, %v627
    %v644 = vadd.f32 %v475, %v628
    %v645 = vadd.f32 %v476, %v629
    %v646 = vadd.f32 %v477, %v630
    %v647 = vadd.f32 %v478, %v631
    %v648 = vpack.c.bf16 %v633, %v632
    %v649 = vpack.c.bf16 %v635, %v634
    %v650 = vpack.c.bf16 %v637, %v636
    %v651 = vpack.c.bf16 %v639, %v638
    %v652 = vpack.c.bf16 %v641, %v640
    %v653 = vpack.c.bf16 %v643, %v642
    %v654 = vpack.c.bf16 %v645, %v644
    %v655 = vpack.c.bf16 %v647, %v646
    %656 = vmatpush.bf16.msra.mxu0 %v655
    %657 = vmatpush.bf16.msra.mxu0 %v654
    %658 = vmatpush.bf16.msra.mxu0 %v653
    %659 = vmatpush.bf16.msra.mxu0 %v652
    %660 = vmatpush.bf16.msra.mxu0 %v651
    %661 = vmatpush.bf16.msra.mxu0 %v650
    %662 = vmatpush.bf16.msra.mxu0 %v649
    %663 = vmatpush.bf16.msra.mxu0 %v648
    %664 = vmatmul.bf16.gmra.mxu0 %v519
    %v665 = vpop.f32.mrf.mxu0
    %v666 = vadd.f32 0.0, %v665
    %v667 = vpop.f32.mrf.mxu0
    %v668 = vadd.f32 0.0, %v667
    %669 = vmatmul.bf16.gmra.mxu0 %v520
    %v670 = vpop.f32.mrf.mxu0
    %v671 = vadd.f32 0.0, %v670
    %v672 = vpop.f32.mrf.mxu0
    %v673 = vadd.f32 0.0, %v672
    %674 = vmatmul.bf16.gmra.mxu0 %v521
    %v675 = vpop.f32.mrf.mxu0
    %v676 = vadd.f32 0.0, %v675
    %v677 = vpop.f32.mrf.mxu0
    %v678 = vadd.f32 0.0, %v677
    %679 = vmatmul.bf16.gmra.mxu0 %v522
    %v680 = vpop.f32.mrf.mxu0
    %v681 = vadd.f32 0.0, %v680
    %v682 = vpop.f32.mrf.mxu0
    %v683 = vadd.f32 0.0, %v682
    %684 = vmatmul.bf16.gmra.mxu0 %v523
    %v685 = vpop.f32.mrf.mxu0
    %v686 = vadd.f32 0.0, %v685
    %v687 = vpop.f32.mrf.mxu0
    %v688 = vadd.f32 0.0, %v687
    %689 = vmatmul.bf16.gmra.mxu0 %v524
    %v690 = vpop.f32.mrf.mxu0
    %v691 = vadd.f32 0.0, %v690
    %v692 = vpop.f32.mrf.mxu0
    %v693 = vadd.f32 0.0, %v692
    %694 = vmatmul.bf16.gmra.mxu0 %v525
    %v695 = vpop.f32.mrf.mxu0
    %v696 = vadd.f32 0.0, %v695
    %v697 = vpop.f32.mrf.mxu0
    %v698 = vadd.f32 0.0, %v697
    %699 = vmatmul.bf16.gmra.mxu0 %v526
    %v700 = vpop.f32.mrf.mxu0
    %v701 = vadd.f32 0.0, %v700
    %v702 = vpop.f32.mrf.mxu0
    %v703 = vadd.f32 0.0, %v702
    %704 = vdwg.mxu0
    %v721 = vunpack.c.l.b16 %v167
    %v722 = vunpack.c.l.b16 %v168
    %v723 = vunpack.c.l.b16 %v169
    %v724 = vunpack.c.l.b16 %v170
    %v725 = vunpack.c.l.b16 %v171
    %v726 = vunpack.c.l.b16 %v172
    %v727 = vunpack.c.l.b16 %v173
    %v728 = vunpack.c.l.b16 %v174
    %v729 = vunpack.c.l.b16 %v175
    %v730 = vunpack.c.l.b16 %v176
    %v731 = vunpack.c.l.b16 %v177
    %v732 = vunpack.c.l.b16 %v178
    %v733 = vunpack.c.l.b16 %v179
    %v734 = vunpack.c.l.b16 %v180
    %v735 = vunpack.c.l.b16 %v181
    %v736 = vunpack.c.l.b16 %v182
    %v737 = vpack.c.b16 %v722, %v721
    %v738 = vpack.c.b16 %v724, %v723
    %v739 = vpack.c.b16 %v726, %v725
    %v740 = vpack.c.b16 %v728, %v727
    %v741 = vpack.c.b16 %v730, %v729
    %v742 = vpack.c.b16 %v732, %v731
    %v743 = vpack.c.b16 %v734, %v733
    %v744 = vpack.c.b16 %v736, %v735
    %753 = vmatpush.bf16.msra.mxu0 %v744
    %754 = vmatpush.bf16.msra.mxu0 %v743
    %755 = vmatpush.bf16.msra.mxu0 %v742
    %756 = vmatpush.bf16.msra.mxu0 %v741
    %757 = vmatpush.bf16.msra.mxu0 %v740
    %758 = vmatpush.bf16.msra.mxu0 %v739
    %759 = vmatpush.bf16.msra.mxu0 %v738
    %760 = vmatpush.bf16.msra.mxu0 %v737
    %761 = vmatmul.bf16.gmra.mxu0 %v648
    %v762 = vpop.f32.mrf.mxu0
    %v763 = vadd.f32 0.0, %v762
    %v764 = vpop.f32.mrf.mxu0
    %v765 = vadd.f32 0.0, %v764
    %766 = vmatmul.bf16.gmra.mxu0 %v649
    %v767 = vpop.f32.mrf.mxu0
    %v768 = vadd.f32 0.0, %v767
    %v769 = vpop.f32.mrf.mxu0
    %v770 = vadd.f32 0.0, %v769
    %771 = vmatmul.bf16.gmra.mxu0 %v650
    %v772 = vpop.f32.mrf.mxu0
    %v773 = vadd.f32 0.0, %v772
    %v774 = vpop.f32.mrf.mxu0
    %v775 = vadd.f32 0.0, %v774
    %776 = vmatmul.bf16.gmra.mxu0 %v651
    %v777 = vpop.f32.mrf.mxu0
    %v778 = vadd.f32 0.0, %v777
    %v779 = vpop.f32.mrf.mxu0
    %v780 = vadd.f32 0.0, %v779
    %781 = vmatmul.bf16.gmra.mxu0 %v652
    %v782 = vpop.f32.mrf.mxu0
    %v783 = vadd.f32 0.0, %v782
    %v784 = vpop.f32.mrf.mxu0
    %v785 = vadd.f32 0.0, %v784
    %786 = vmatmul.bf16.gmra.mxu0 %v653
    %v787 = vpop.f32.mrf.mxu0
    %v788 = vadd.f32 0.0, %v787
    %v789 = vpop.f32.mrf.mxu0
    %v790 = vadd.f32 0.0, %v789
    %791 = vmatmul.bf16.gmra.mxu0 %v654
    %v792 = vpop.f32.mrf.mxu0
    %v793 = vadd.f32 0.0, %v792
    %v794 = vpop.f32.mrf.mxu0
    %v795 = vadd.f32 0.0, %v794
    %796 = vmatmul.bf16.gmra.mxu0 %v655
    %v797 = vpop.f32.mrf.mxu0
    %v798 = vadd.f32 0.0, %v797
    %v799 = vpop.f32.mrf.mxu0
    %v800 = vadd.f32 0.0, %v799
    %801 = vdwg.mxu0
    %v818 = vunpack.c.l.b16 %v201
    %v819 = vunpack.c.l.b16 %v202
    %v820 = vunpack.c.l.b16 %v203
    %v821 = vunpack.c.l.b16 %v204
    %v822 = vunpack.c.l.b16 %v205
    %v823 = vunpack.c.l.b16 %v206
    %v824 = vunpack.c.l.b16 %v207
    %v825 = vunpack.c.l.b16 %v208
    %v826 = vunpack.c.l.b16 %v209
    %v827 = vunpack.c.l.b16 %v210
    %v828 = vunpack.c.l.b16 %v211
    %v829 = vunpack.c.l.b16 %v212
    %v830 = vunpack.c.l.b16 %v213
    %v831 = vunpack.c.l.b16 %v214
    %v832 = vunpack.c.l.b16 %v215
    %v833 = vunpack.c.l.b16 %v216
    %v834 = vpack.c.b16 %v819, %v818
    %v835 = vpack.c.b16 %v821, %v820
    %v836 = vpack.c.b16 %v823, %v822
    %v837 = vpack.c.b16 %v825, %v824
    %v838 = vpack.c.b16 %v827, %v826
    %v839 = vpack.c.b16 %v829, %v828
    %v840 = vpack.c.b16 %v831, %v830
    %v841 = vpack.c.b16 %v833, %v832
    %850 = vmatpush.bf16.msra.mxu0 %v841
    %851 = vmatpush.bf16.msra.mxu0 %v840
    %852 = vmatpush.bf16.msra.mxu0 %v839
    %853 = vmatpush.bf16.msra.mxu0 %v838
    %854 = vmatpush.bf16.msra.mxu0 %v837
    %855 = vmatpush.bf16.msra.mxu0 %v836
    %856 = vmatpush.bf16.msra.mxu0 %v835
    %857 = vmatpush.bf16.msra.mxu0 %v834
    %858 = vmatmul.bf16.gmra.mxu0 0
    %v859 = vpop.f32.mrf.mxu0
    %v860 = vadd.f32 0.0, %v859
    %v861 = vpop.f32.mrf.mxu0
    %v862 = vadd.f32 0.0, %v861
    %863 = vmatmul.bf16.gmra.mxu0 0
    %v864 = vpop.f32.mrf.mxu0
    %v865 = vadd.f32 0.0, %v864
    %v866 = vpop.f32.mrf.mxu0
    %v867 = vadd.f32 0.0, %v866
    %868 = vmatmul.bf16.gmra.mxu0 0
    %v869 = vpop.f32.mrf.mxu0
    %v870 = vadd.f32 0.0, %v869
    %v871 = vpop.f32.mrf.mxu0
    %v872 = vadd.f32 0.0, %v871
    %873 = vmatmul.bf16.gmra.mxu0 0
    %v874 = vpop.f32.mrf.mxu0
    %v875 = vadd.f32 0.0, %v874
    %v876 = vpop.f32.mrf.mxu0
    %v877 = vadd.f32 0.0, %v876
    %878 = vmatmul.bf16.gmra.mxu0 0
    %v879 = vpop.f32.mrf.mxu0
    %v880 = vadd.f32 0.0, %v879
    %v881 = vpop.f32.mrf.mxu0
    %v882 = vadd.f32 0.0, %v881
    %883 = vmatmul.bf16.gmra.mxu0 0
    %v884 = vpop.f32.mrf.mxu0
    %v885 = vadd.f32 0.0, %v884
    %v886 = vpop.f32.mrf.mxu0
    %v887 = vadd.f32 0.0, %v886
    %888 = vmatmul.bf16.gmra.mxu0 0
    %v889 = vpop.f32.mrf.mxu0
    %v890 = vadd.f32 0.0, %v889
    %v891 = vpop.f32.mrf.mxu0
    %v892 = vadd.f32 0.0, %v891
    %893 = vmatmul.bf16.gmra.mxu0 0
    %v894 = vpop.f32.mrf.mxu0
    %v895 = vadd.f32 0.0, %v894
    %v896 = vpop.f32.mrf.mxu0
    %v897 = vadd.f32 0.0, %v896
    %898 = vdwg.mxu0
    %v900 = vperm.slane %v157, 0
    %v902 = vmul.f32 %v900, 0.0
    %v903 = vadd.f32 %v902, %v763
    %v904 = vadd.f32 %v902, %v765
    %v905 = vadd.f32 %v902, %v768
    %v906 = vadd.f32 %v902, %v770
    %v907 = vadd.f32 %v902, %v773
    %v908 = vadd.f32 %v902, %v775
    %v909 = vadd.f32 %v902, %v778
    %v910 = vadd.f32 %v902, %v780
    %v911 = vadd.f32 %v902, %v783
    %v912 = vadd.f32 %v902, %v785
    %v913 = vadd.f32 %v902, %v788
    %v914 = vadd.f32 %v902, %v790
    %v915 = vadd.f32 %v902, %v793
    %v916 = vadd.f32 %v902, %v795
    %v917 = vadd.f32 %v902, %v798
    %v918 = vadd.f32 %v902, %v800
    %v920 = vperm.slane %v162, 0
    %v922 = vadd.f32 %v903, %v920
    %v923 = vadd.f32 %v904, %v920
    %v924 = vadd.f32 %v905, %v920
    %v925 = vadd.f32 %v906, %v920
    %v926 = vadd.f32 %v907, %v920
    %v927 = vadd.f32 %v908, %v920
    %v928 = vadd.f32 %v909, %v920
    %v929 = vadd.f32 %v910, %v920
    %v930 = vadd.f32 %v911, %v920
    %v931 = vadd.f32 %v912, %v920
    %v932 = vadd.f32 %v913, %v920
    %v933 = vadd.f32 %v914, %v920
    %v934 = vadd.f32 %v915, %v920
    %v935 = vadd.f32 %v916, %v920
    %v936 = vadd.f32 %v917, %v920
    %v937 = vadd.f32 %v918, %v920
    %v938 = vmax.f32 %v922, 0.0
    %v939 = vmax.f32 %v923, 0.0
    %v940 = vmax.f32 %v924, 0.0
    %v941 = vmax.f32 %v925, 0.0
    %v942 = vmax.f32 %v926, 0.0
    %v943 = vmax.f32 %v927, 0.0
    %v944 = vmax.f32 %v928, 0.0
    %v945 = vmax.f32 %v929, 0.0
    %v946 = vmax.f32 %v930, 0.0
    %v947 = vmax.f32 %v931, 0.0
    %v948 = vmax.f32 %v932, 0.0
    %v949 = vmax.f32 %v933, 0.0
    %v950 = vmax.f32 %v934, 0.0
    %v951 = vmax.f32 %v935, 0.0
    %v952 = vmax.f32 %v936, 0.0
    %v953 = vmax.f32 %v937, 0.0
    %v954 = vmul.f32 %v938, 0.1
    %v955 = vmul.f32 %v939, 0.1
    %v956 = vmul.f32 %v940, 0.1
    %v957 = vmul.f32 %v941, 0.1
    %v958 = vmul.f32 %v942, 0.1
    %v959 = vmul.f32 %v943, 0.1
    %v960 = vmul.f32 %v944, 0.1
    %v961 = vmul.f32 %v945, 0.1
    %v962 = vmul.f32 %v946, 0.1
    %v963 = vmul.f32 %v947, 0.1
    %v964 = vmul.f32 %v948, 0.1
    %v965 = vmul.f32 %v949, 0.1
    %v966 = vmul.f32 %v950, 0.1
    %v967 = vmul.f32 %v951, 0.1
    %v968 = vmul.f32 %v952, 0.1
    %v969 = vmul.f32 %v953, 0.1
    %v970 = vadd.f32 %v954, 0.0
    %v971 = vadd.f32 %v955, 0.0
    %v972 = vadd.f32 %v956, 0.0
    %v973 = vadd.f32 %v957, 0.0
    %v974 = vadd.f32 %v958, 0.0
    %v975 = vadd.f32 %v959, 0.0
    %v976 = vadd.f32 %v960, 0.0
    %v977 = vadd.f32 %v961, 0.0
    %v978 = vadd.f32 %v962, 0.0
    %v979 = vadd.f32 %v963, 0.0
    %v980 = vadd.f32 %v964, 0.0
    %v981 = vadd.f32 %v965, 0.0
    %v982 = vadd.f32 %v966, 0.0
    %v983 = vadd.f32 %v967, 0.0
    %v984 = vadd.f32 %v968, 0.0
    %v985 = vadd.f32 %v969, 0.0
    %v986 = vmul.f32 %v970, 0.1
    %v987 = vmul.f32 %v971, 0.1
    %v988 = vmul.f32 %v972, 0.1
    %v989 = vmul.f32 %v973, 0.1
    %v990 = vmul.f32 %v974, 0.1
    %v991 = vmul.f32 %v975, 0.1
    %v992 = vmul.f32 %v976, 0.1
    %v993 = vmul.f32 %v977, 0.1
    %v994 = vmul.f32 %v978, 0.1
    %v995 = vmul.f32 %v979, 0.1
    %v996 = vmul.f32 %v980, 0.1
    %v997 = vmul.f32 %v981, 0.1
    %v998 = vmul.f32 %v982, 0.1
    %v999 = vmul.f32 %v983, 0.1
    %v1000 = vmul.f32 %v984, 0.1
    %v1001 = vmul.f32 %v985, 0.1
    %v1002 = vadd.f32 %v986, 0.0
    %v1003 = vadd.f32 %v987, 0.0
    %v1004 = vadd.f32 %v988, 0.0
    %v1005 = vadd.f32 %v989, 0.0
    %v1006 = vadd.f32 %v990, 0.0
    %v1007 = vadd.f32 %v991, 0.0
    %v1008 = vadd.f32 %v992, 0.0
    %v1009 = vadd.f32 %v993, 0.0
    %v1010 = vadd.f32 %v994, 0.0
    %v1011 = vadd.f32 %v995, 0.0
    %v1012 = vadd.f32 %v996, 0.0
    %v1013 = vadd.f32 %v997, 0.0
    %v1014 = vadd.f32 %v998, 0.0
    %v1015 = vadd.f32 %v999, 0.0
    %v1016 = vadd.f32 %v1000, 0.0
    %v1017 = vadd.f32 %v1001, 0.0
    %v1019 = vperm.slane %v161, 0
    %v1021 = vmul.f32 %v1019, 0.0
    %v1022 = vadd.f32 %v1021, %v860
    %v1023 = vadd.f32 %v1021, %v862
    %v1024 = vadd.f32 %v1021, %v865
    %v1025 = vadd.f32 %v1021, %v867
    %v1026 = vadd.f32 %v1021, %v870
    %v1027 = vadd.f32 %v1021, %v872
    %v1028 = vadd.f32 %v1021, %v875
    %v1029 = vadd.f32 %v1021, %v877
    %v1030 = vadd.f32 %v1021, %v880
    %v1031 = vadd.f32 %v1021, %v882
    %v1032 = vadd.f32 %v1021, %v885
    %v1033 = vadd.f32 %v1021, %v887
    %v1034 = vadd.f32 %v1021, %v890
    %v1035 = vadd.f32 %v1021, %v892
    %v1036 = vadd.f32 %v1021, %v895
    %v1037 = vadd.f32 %v1021, %v897
    %v1039 = vperm.slane %v166, 0
    %v1041 = vadd.f32 %v1022, %v1039
    %v1042 = vadd.f32 %v1023, %v1039
    %v1043 = vadd.f32 %v1024, %v1039
    %v1044 = vadd.f32 %v1025, %v1039
    %v1045 = vadd.f32 %v1026, %v1039
    %v1046 = vadd.f32 %v1027, %v1039
    %v1047 = vadd.f32 %v1028, %v1039
    %v1048 = vadd.f32 %v1029, %v1039
    %v1049 = vadd.f32 %v1030, %v1039
    %v1050 = vadd.f32 %v1031, %v1039
    %v1051 = vadd.f32 %v1032, %v1039
    %v1052 = vadd.f32 %v1033, %v1039
    %v1053 = vadd.f32 %v1034, %v1039
    %v1054 = vadd.f32 %v1035, %v1039
    %v1055 = vadd.f32 %v1036, %v1039
    %v1056 = vadd.f32 %v1037, %v1039
    %v1057 = vmax.f32 %v1041, 0.0
    %v1058 = vmax.f32 %v1042, 0.0
    %v1059 = vmax.f32 %v1043, 0.0
    %v1060 = vmax.f32 %v1044, 0.0
    %v1061 = vmax.f32 %v1045, 0.0
    %v1062 = vmax.f32 %v1046, 0.0
    %v1063 = vmax.f32 %v1047, 0.0
    %v1064 = vmax.f32 %v1048, 0.0
    %v1065 = vmax.f32 %v1049, 0.0
    %v1066 = vmax.f32 %v1050, 0.0
    %v1067 = vmax.f32 %v1051, 0.0
    %v1068 = vmax.f32 %v1052, 0.0
    %v1069 = vmax.f32 %v1053, 0.0
    %v1070 = vmax.f32 %v1054, 0.0
    %v1071 = vmax.f32 %v1055, 0.0
    %v1072 = vmax.f32 %v1056, 0.0
    %v1073 = vmul.f32 %v1057, 0.1
    %v1074 = vmul.f32 %v1058, 0.1
    %v1075 = vmul.f32 %v1059, 0.1
    %v1076 = vmul.f32 %v1060, 0.1
    %v1077 = vmul.f32 %v1061, 0.1
    %v1078 = vmul.f32 %v1062, 0.1
    %v1079 = vmul.f32 %v1063, 0.1
    %v1080 = vmul.f32 %v1064, 0.1
    %v1081 = vmul.f32 %v1065, 0.1
    %v1082 = vmul.f32 %v1066, 0.1
    %v1083 = vmul.f32 %v1067, 0.1
    %v1084 = vmul.f32 %v1068, 0.1
    %v1085 = vmul.f32 %v1069, 0.1
    %v1086 = vmul.f32 %v1070, 0.1
    %v1087 = vmul.f32 %v1071, 0.1
    %v1088 = vmul.f32 %v1072, 0.1
    %v1089 = vadd.f32 %v1073, 0.0
    %v1090 = vadd.f32 %v1074, 0.0
    %v1091 = vadd.f32 %v1075, 0.0
    %v1092 = vadd.f32 %v1076, 0.0
    %v1093 = vadd.f32 %v1077, 0.0
    %v1094 = vadd.f32 %v1078, 0.0
    %v1095 = vadd.f32 %v1079, 0.0
    %v1096 = vadd.f32 %v1080, 0.0
    %v1097 = vadd.f32 %v1081, 0.0
    %v1098 = vadd.f32 %v1082, 0.0
    %v1099 = vadd.f32 %v1083, 0.0
    %v1100 = vadd.f32 %v1084, 0.0
    %v1101 = vadd.f32 %v1085, 0.0
    %v1102 = vadd.f32 %v1086, 0.0
    %v1103 = vadd.f32 %v1087, 0.0
    %v1104 = vadd.f32 %v1088, 0.0
    %v1105 = vmul.f32 %v1089, 0.1
    %v1106 = vmul.f32 %v1090, 0.1
    %v1107 = vmul.f32 %v1091, 0.1
    %v1108 = vmul.f32 %v1092, 0.1
    %v1109 = vmul.f32 %v1093, 0.1
    %v1110 = vmul.f32 %v1094, 0.1
    %v1111 = vmul.f32 %v1095, 0.1
    %v1112 = vmul.f32 %v1096, 0.1
    %v1113 = vmul.f32 %v1097, 0.1
    %v1114 = vmul.f32 %v1098, 0.1
    %v1115 = vmul.f32 %v1099, 0.1
    %v1116 = vmul.f32 %v1100, 0.1
    %v1117 = vmul.f32 %v1101, 0.1
    %v1118 = vmul.f32 %v1102, 0.1
    %v1119 = vmul.f32 %v1103, 0.1
    %v1120 = vmul.f32 %v1104, 0.1
    %v1121 = vadd.f32 %v1105, 0.0
    %v1122 = vadd.f32 %v1106, 0.0
    %v1123 = vadd.f32 %v1107, 0.0
    %v1124 = vadd.f32 %v1108, 0.0
    %v1125 = vadd.f32 %v1109, 0.0
    %v1126 = vadd.f32 %v1110, 0.0
    %v1127 = vadd.f32 %v1111, 0.0
    %v1128 = vadd.f32 %v1112, 0.0
    %v1129 = vadd.f32 %v1113, 0.0
    %v1130 = vadd.f32 %v1114, 0.0
    %v1131 = vadd.f32 %v1115, 0.0
    %v1132 = vadd.f32 %v1116, 0.0
    %v1133 = vadd.f32 %v1117, 0.0
    %v1134 = vadd.f32 %v1118, 0.0
    %v1135 = vadd.f32 %v1119, 0.0
    %v1136 = vadd.f32 %v1120, 0.0
    %v1137 = vpack.c.bf16 %v1003, %v1002
    %v1138 = vpack.c.bf16 %v1005, %v1004
    %v1139 = vpack.c.bf16 %v1007, %v1006
    %v1140 = vpack.c.bf16 %v1009, %v1008
    %v1141 = vpack.c.bf16 %v1011, %v1010
    %v1142 = vpack.c.bf16 %v1013, %v1012
    %v1143 = vpack.c.bf16 %v1015, %v1014
    %v1144 = vpack.c.bf16 %v1017, %v1016
    %v1161 = vunpack.c.l.b16 %v184
    %v1162 = vunpack.c.l.b16 %v185
    %v1163 = vunpack.c.l.b16 %v186
    %v1164 = vunpack.c.l.b16 %v187
    %v1165 = vunpack.c.l.b16 %v188
    %v1166 = vunpack.c.l.b16 %v189
    %v1167 = vunpack.c.l.b16 %v190
    %v1168 = vunpack.c.l.b16 %v191
    %v1169 = vunpack.c.l.b16 %v192
    %v1170 = vunpack.c.l.b16 %v193
    %v1171 = vunpack.c.l.b16 %v194
    %v1172 = vunpack.c.l.b16 %v195
    %v1173 = vunpack.c.l.b16 %v196
    %v1174 = vunpack.c.l.b16 %v197
    %v1175 = vunpack.c.l.b16 %v198
    %v1176 = vunpack.c.l.b16 %v199
    %v1177 = vpack.c.b16 %v1162, %v1161
    %v1178 = vpack.c.b16 %v1164, %v1163
    %v1179 = vpack.c.b16 %v1166, %v1165
    %v1180 = vpack.c.b16 %v1168, %v1167
    %v1181 = vpack.c.b16 %v1170, %v1169
    %v1182 = vpack.c.b16 %v1172, %v1171
    %v1183 = vpack.c.b16 %v1174, %v1173
    %v1184 = vpack.c.b16 %v1176, %v1175
    %1193 = vmatpush.bf16.msra.mxu0 %v1184
    %1194 = vmatpush.bf16.msra.mxu0 %v1183
    %1195 = vmatpush.bf16.msra.mxu0 %v1182
    %1196 = vmatpush.bf16.msra.mxu0 %v1181
    %1197 = vmatpush.bf16.msra.mxu0 %v1180
    %1198 = vmatpush.bf16.msra.mxu0 %v1179
    %1199 = vmatpush.bf16.msra.mxu0 %v1178
    %1200 = vmatpush.bf16.msra.mxu0 %v1177
    %1201 = vmatmul.bf16.gmra.mxu0 %v1137
    %v1202 = vpop.f32.mrf.mxu0
    %v1203 = vadd.f32 0.0, %v1202
    %v1204 = vpop.f32.mrf.mxu0
    %v1205 = vadd.f32 0.0, %v1204
    %1206 = vmatmul.bf16.gmra.mxu0 %v1138
    %v1207 = vpop.f32.mrf.mxu0
    %v1208 = vadd.f32 0.0, %v1207
    %v1209 = vpop.f32.mrf.mxu0
    %v1210 = vadd.f32 0.0, %v1209
    %1211 = vmatmul.bf16.gmra.mxu0 %v1139
    %v1212 = vpop.f32.mrf.mxu0
    %v1213 = vadd.f32 0.0, %v1212
    %v1214 = vpop.f32.mrf.mxu0
    %v1215 = vadd.f32 0.0, %v1214
    %1216 = vmatmul.bf16.gmra.mxu0 %v1140
    %v1217 = vpop.f32.mrf.mxu0
    %v1218 = vadd.f32 0.0, %v1217
    %v1219 = vpop.f32.mrf.mxu0
    %v1220 = vadd.f32 0.0, %v1219
    %1221 = vmatmul.bf16.gmra.mxu0 %v1141
    %v1222 = vpop.f32.mrf.mxu0
    %v1223 = vadd.f32 0.0, %v1222
    %v1224 = vpop.f32.mrf.mxu0
    %v1225 = vadd.f32 0.0, %v1224
    %1226 = vmatmul.bf16.gmra.mxu0 %v1142
    %v1227 = vpop.f32.mrf.mxu0
    %v1228 = vadd.f32 0.0, %v1227
    %v1229 = vpop.f32.mrf.mxu0
    %v1230 = vadd.f32 0.0, %v1229
    %1231 = vmatmul.bf16.gmra.mxu0 %v1143
    %v1232 = vpop.f32.mrf.mxu0
    %v1233 = vadd.f32 0.0, %v1232
    %v1234 = vpop.f32.mrf.mxu0
    %v1235 = vadd.f32 0.0, %v1234
    %1236 = vmatmul.bf16.gmra.mxu0 %v1144
    %v1237 = vpop.f32.mrf.mxu0
    %v1238 = vadd.f32 0.0, %v1237
    %v1239 = vpop.f32.mrf.mxu0
    %v1240 = vadd.f32 0.0, %v1239
    %1241 = vdwg.mxu0
    %v1243 = vperm.slane %v159, 0
    %v1245 = vmul.f32 %v1243, 0.0
    %v1246 = vadd.f32 %v1245, %v1203
    %v1247 = vadd.f32 %v1245, %v1205
    %v1248 = vadd.f32 %v1245, %v1208
    %v1249 = vadd.f32 %v1245, %v1210
    %v1250 = vadd.f32 %v1245, %v1213
    %v1251 = vadd.f32 %v1245, %v1215
    %v1252 = vadd.f32 %v1245, %v1218
    %v1253 = vadd.f32 %v1245, %v1220
    %v1254 = vadd.f32 %v1245, %v1223
    %v1255 = vadd.f32 %v1245, %v1225
    %v1256 = vadd.f32 %v1245, %v1228
    %v1257 = vadd.f32 %v1245, %v1230
    %v1258 = vadd.f32 %v1245, %v1233
    %v1259 = vadd.f32 %v1245, %v1235
    %v1260 = vadd.f32 %v1245, %v1238
    %v1261 = vadd.f32 %v1245, %v1240
    %v1263 = vperm.slane %v164, 0
    %v1265 = vadd.f32 %v1246, %v1263
    %v1266 = vadd.f32 %v1247, %v1263
    %v1267 = vadd.f32 %v1248, %v1263
    %v1268 = vadd.f32 %v1249, %v1263
    %v1269 = vadd.f32 %v1250, %v1263
    %v1270 = vadd.f32 %v1251, %v1263
    %v1271 = vadd.f32 %v1252, %v1263
    %v1272 = vadd.f32 %v1253, %v1263
    %v1273 = vadd.f32 %v1254, %v1263
    %v1274 = vadd.f32 %v1255, %v1263
    %v1275 = vadd.f32 %v1256, %v1263
    %v1276 = vadd.f32 %v1257, %v1263
    %v1277 = vadd.f32 %v1258, %v1263
    %v1278 = vadd.f32 %v1259, %v1263
    %v1279 = vadd.f32 %v1260, %v1263
    %v1280 = vadd.f32 %v1261, %v1263
    %v1281 = vmax.f32 %v1265, 0.0
    %v1282 = vmax.f32 %v1266, 0.0
    %v1283 = vmax.f32 %v1267, 0.0
    %v1284 = vmax.f32 %v1268, 0.0
    %v1285 = vmax.f32 %v1269, 0.0
    %v1286 = vmax.f32 %v1270, 0.0
    %v1287 = vmax.f32 %v1271, 0.0
    %v1288 = vmax.f32 %v1272, 0.0
    %v1289 = vmax.f32 %v1273, 0.0
    %v1290 = vmax.f32 %v1274, 0.0
    %v1291 = vmax.f32 %v1275, 0.0
    %v1292 = vmax.f32 %v1276, 0.0
    %v1293 = vmax.f32 %v1277, 0.0
    %v1294 = vmax.f32 %v1278, 0.0
    %v1295 = vmax.f32 %v1279, 0.0
    %v1296 = vmax.f32 %v1280, 0.0
    %v1297 = vmul.f32 %v1281, 0.1
    %v1298 = vmul.f32 %v1282, 0.1
    %v1299 = vmul.f32 %v1283, 0.1
    %v1300 = vmul.f32 %v1284, 0.1
    %v1301 = vmul.f32 %v1285, 0.1
    %v1302 = vmul.f32 %v1286, 0.1
    %v1303 = vmul.f32 %v1287, 0.1
    %v1304 = vmul.f32 %v1288, 0.1
    %v1305 = vmul.f32 %v1289, 0.1
    %v1306 = vmul.f32 %v1290, 0.1
    %v1307 = vmul.f32 %v1291, 0.1
    %v1308 = vmul.f32 %v1292, 0.1
    %v1309 = vmul.f32 %v1293, 0.1
    %v1310 = vmul.f32 %v1294, 0.1
    %v1311 = vmul.f32 %v1295, 0.1
    %v1312 = vmul.f32 %v1296, 0.1
    %v1313 = vadd.f32 %v1297, 0.0
    %v1314 = vadd.f32 %v1298, 0.0
    %v1315 = vadd.f32 %v1299, 0.0
    %v1316 = vadd.f32 %v1300, 0.0
    %v1317 = vadd.f32 %v1301, 0.0
    %v1318 = vadd.f32 %v1302, 0.0
    %v1319 = vadd.f32 %v1303, 0.0
    %v1320 = vadd.f32 %v1304, 0.0
    %v1321 = vadd.f32 %v1305, 0.0
    %v1322 = vadd.f32 %v1306, 0.0
    %v1323 = vadd.f32 %v1307, 0.0
    %v1324 = vadd.f32 %v1308, 0.0
    %v1325 = vadd.f32 %v1309, 0.0
    %v1326 = vadd.f32 %v1310, 0.0
    %v1327 = vadd.f32 %v1311, 0.0
    %v1328 = vadd.f32 %v1312, 0.0
    %v1329 = vmul.f32 %v1313, 0.1
    %v1330 = vmul.f32 %v1314, 0.1
    %v1331 = vmul.f32 %v1315, 0.1
    %v1332 = vmul.f32 %v1316, 0.1
    %v1333 = vmul.f32 %v1317, 0.1
    %v1334 = vmul.f32 %v1318, 0.1
    %v1335 = vmul.f32 %v1319, 0.1
    %v1336 = vmul.f32 %v1320, 0.1
    %v1337 = vmul.f32 %v1321, 0.1
    %v1338 = vmul.f32 %v1322, 0.1
    %v1339 = vmul.f32 %v1323, 0.1
    %v1340 = vmul.f32 %v1324, 0.1
    %v1341 = vmul.f32 %v1325, 0.1
    %v1342 = vmul.f32 %v1326, 0.1
    %v1343 = vmul.f32 %v1327, 0.1
    %v1344 = vmul.f32 %v1328, 0.1
    %v1345 = vadd.f32 %v1329, 0.0
    %v1346 = vadd.f32 %v1330, 0.0
    %v1347 = vadd.f32 %v1331, 0.0
    %v1348 = vadd.f32 %v1332, 0.0
    %v1349 = vadd.f32 %v1333, 0.0
    %v1350 = vadd.f32 %v1334, 0.0
    %v1351 = vadd.f32 %v1335, 0.0
    %v1352 = vadd.f32 %v1336, 0.0
    %v1353 = vadd.f32 %v1337, 0.0
    %v1354 = vadd.f32 %v1338, 0.0
    %v1355 = vadd.f32 %v1339, 0.0
    %v1356 = vadd.f32 %v1340, 0.0
    %v1357 = vadd.f32 %v1341, 0.0
    %v1358 = vadd.f32 %v1342, 0.0
    %v1359 = vadd.f32 %v1343, 0.0
    %v1360 = vadd.f32 %v1344, 0.0
    %v1361 = vmul.f32 %v666, 0.1
    %v1362 = vmul.f32 %v668, 0.1
    %v1363 = vmul.f32 %v671, 0.1
    %v1364 = vmul.f32 %v673, 0.1
    %v1365 = vmul.f32 %v676, 0.1
    %v1366 = vmul.f32 %v678, 0.1
    %v1367 = vmul.f32 %v681, 0.1
    %v1368 = vmul.f32 %v683, 0.1
    %v1369 = vmul.f32 %v686, 0.1
    %v1370 = vmul.f32 %v688, 0.1
    %v1371 = vmul.f32 %v691, 0.1
    %v1372 = vmul.f32 %v693, 0.1
    %v1373 = vmul.f32 %v696, 0.1
    %v1374 = vmul.f32 %v698, 0.1
    %v1375 = vmul.f32 %v701, 0.1
    %v1376 = vmul.f32 %v703, 0.1
    %v1377 = vsub.f32 %v600, %v1361
    %v1378 = vsub.f32 %v601, %v1362
    %v1379 = vsub.f32 %v602, %v1363
    %v1380 = vsub.f32 %v603, %v1364
    %v1381 = vsub.f32 %v604, %v1365
    %v1382 = vsub.f32 %v605, %v1366
    %v1383 = vsub.f32 %v606, %v1367
    %v1384 = vsub.f32 %v607, %v1368
    %v1385 = vsub.f32 %v608, %v1369
    %v1386 = vsub.f32 %v609, %v1370
    %v1387 = vsub.f32 %v610, %v1371
    %v1388 = vsub.f32 %v611, %v1372
    %v1389 = vsub.f32 %v612, %v1373
    %v1390 = vsub.f32 %v613, %v1374
    %v1391 = vsub.f32 %v614, %v1375
    %v1392 = vsub.f32 %v615, %v1376
    %v1393 = vmul.f32 %v1377, 0.1
    %v1394 = vmul.f32 %v1378, 0.1
    %v1395 = vmul.f32 %v1379, 0.1
    %v1396 = vmul.f32 %v1380, 0.1
    %v1397 = vmul.f32 %v1381, 0.1
    %v1398 = vmul.f32 %v1382, 0.1
    %v1399 = vmul.f32 %v1383, 0.1
    %v1400 = vmul.f32 %v1384, 0.1
    %v1401 = vmul.f32 %v1385, 0.1
    %v1402 = vmul.f32 %v1386, 0.1
    %v1403 = vmul.f32 %v1387, 0.1
    %v1404 = vmul.f32 %v1388, 0.1
    %v1405 = vmul.f32 %v1389, 0.1
    %v1406 = vmul.f32 %v1390, 0.1
    %v1407 = vmul.f32 %v1391, 0.1
    %v1408 = vmul.f32 %v1392, 0.1
    %v1409 = vadd.f32 %v632, %v1393
    %v1410 = vadd.f32 %v633, %v1394
    %v1411 = vadd.f32 %v634, %v1395
    %v1412 = vadd.f32 %v635, %v1396
    %v1413 = vadd.f32 %v636, %v1397
    %v1414 = vadd.f32 %v637, %v1398
    %v1415 = vadd.f32 %v638, %v1399
    %v1416 = vadd.f32 %v639, %v1400
    %v1417 = vadd.f32 %v640, %v1401
    %v1418 = vadd.f32 %v641, %v1402
    %v1419 = vadd.f32 %v642, %v1403
    %v1420 = vadd.f32 %v643, %v1404
    %v1421 = vadd.f32 %v644, %v1405
    %v1422 = vadd.f32 %v645, %v1406
    %v1423 = vadd.f32 %v646, %v1407
    %v1424 = vadd.f32 %v647, %v1408
    %v1425 = vpack.c.bf16 %v1410, %v1409
    %v1426 = vpack.c.bf16 %v1412, %v1411
    %v1427 = vpack.c.bf16 %v1414, %v1413
    %v1428 = vpack.c.bf16 %v1416, %v1415
    %v1429 = vpack.c.bf16 %v1418, %v1417
    %v1430 = vpack.c.bf16 %v1420, %v1419
    %v1431 = vpack.c.bf16 %v1422, %v1421
    %v1432 = vpack.c.bf16 %v1424, %v1423
    %1433 = vmatpush.bf16.msra.mxu0 %v1432
    %1434 = vmatpush.bf16.msra.mxu0 %v1431
    %1435 = vmatpush.bf16.msra.mxu0 %v1430
    %1436 = vmatpush.bf16.msra.mxu0 %v1429
    %1437 = vmatpush.bf16.msra.mxu0 %v1428
    %1438 = vmatpush.bf16.msra.mxu0 %v1427
    %1439 = vmatpush.bf16.msra.mxu0 %v1426
    %1440 = vmatpush.bf16.msra.mxu0 %v1425
    %1441 = vmatmul.bf16.gmra.mxu0 %v519
    %v1442 = vpop.f32.mrf.mxu0
    %v1443 = vadd.f32 0.0, %v1442
    %v1444 = vpop.f32.mrf.mxu0
    %v1445 = vadd.f32 0.0, %v1444
    %1446 = vmatmul.bf16.gmra.mxu0 %v520
    %v1447 = vpop.f32.mrf.mxu0
    %v1448 = vadd.f32 0.0, %v1447
    %v1449 = vpop.f32.mrf.mxu0
    %v1450 = vadd.f32 0.0, %v1449
    %1451 = vmatmul.bf16.gmra.mxu0 %v521
    %v1452 = vpop.f32.mrf.mxu0
    %v1453 = vadd.f32 0.0, %v1452
    %v1454 = vpop.f32.mrf.mxu0
    %v1455 = vadd.f32 0.0, %v1454
    %1456 = vmatmul.bf16.gmra.mxu0 %v522
    %v1457 = vpop.f32.mrf.mxu0
    %v1458 = vadd.f32 0.0, %v1457
    %v1459 = vpop.f32.mrf.mxu0
    %v1460 = vadd.f32 0.0, %v1459
    %1461 = vmatmul.bf16.gmra.mxu0 %v523
    %v1462 = vpop.f32.mrf.mxu0
    %v1463 = vadd.f32 0.0, %v1462
    %v1464 = vpop.f32.mrf.mxu0
    %v1465 = vadd.f32 0.0, %v1464
    %1466 = vmatmul.bf16.gmra.mxu0 %v524
    %v1467 = vpop.f32.mrf.mxu0
    %v1468 = vadd.f32 0.0, %v1467
    %v1469 = vpop.f32.mrf.mxu0
    %v1470 = vadd.f32 0.0, %v1469
    %1471 = vmatmul.bf16.gmra.mxu0 %v525
    %v1472 = vpop.f32.mrf.mxu0
    %v1473 = vadd.f32 0.0, %v1472
    %v1474 = vpop.f32.mrf.mxu0
    %v1475 = vadd.f32 0.0, %v1474
    %1476 = vmatmul.bf16.gmra.mxu0 %v526
    %v1477 = vpop.f32.mrf.mxu0
    %v1478 = vadd.f32 0.0, %v1477
    %v1479 = vpop.f32.mrf.mxu0
    %v1480 = vadd.f32 0.0, %v1479
    %1481 = vdwg.mxu0
    %1482 = vmatpush.bf16.msra.mxu0 %v744
    %1483 = vmatpush.bf16.msra.mxu0 %v743
    %1484 = vmatpush.bf16.msra.mxu0 %v742
    %1485 = vmatpush.bf16.msra.mxu0 %v741
    %1486 = vmatpush.bf16.msra.mxu0 %v740
    %1487 = vmatpush.bf16.msra.mxu0 %v739
    %1488 = vmatpush.bf16.msra.mxu0 %v738
    %1489 = vmatpush.bf16.msra.mxu0 %v737
    %1490 = vmatmul.bf16.gmra.mxu0 %v1425
    %v1491 = vpop.f32.mrf.mxu0
    %v1492 = vadd.f32 0.0, %v1491
    %v1493 = vpop.f32.mrf.mxu0
    %v1494 = vadd.f32 0.0, %v1493
    %1495 = vmatmul.bf16.gmra.mxu0 %v1426
    %v1496 = vpop.f32.mrf.mxu0
    %v1497 = vadd.f32 0.0, %v1496
    %v1498 = vpop.f32.mrf.mxu0
    %v1499 = vadd.f32 0.0, %v1498
    %1500 = vmatmul.bf16.gmra.mxu0 %v1427
    %v1501 = vpop.f32.mrf.mxu0
    %v1502 = vadd.f32 0.0, %v1501
    %v1503 = vpop.f32.mrf.mxu0
    %v1504 = vadd.f32 0.0, %v1503
    %1505 = vmatmul.bf16.gmra.mxu0 %v1428
    %v1506 = vpop.f32.mrf.mxu0
    %v1507 = vadd.f32 0.0, %v1506
    %v1508 = vpop.f32.mrf.mxu0
    %v1509 = vadd.f32 0.0, %v1508
    %1510 = vmatmul.bf16.gmra.mxu0 %v1429
    %v1511 = vpop.f32.mrf.mxu0
    %v1512 = vadd.f32 0.0, %v1511
    %v1513 = vpop.f32.mrf.mxu0
    %v1514 = vadd.f32 0.0, %v1513
    %1515 = vmatmul.bf16.gmra.mxu0 %v1430
    %v1516 = vpop.f32.mrf.mxu0
    %v1517 = vadd.f32 0.0, %v1516
    %v1518 = vpop.f32.mrf.mxu0
    %v1519 = vadd.f32 0.0, %v1518
    %1520 = vmatmul.bf16.gmra.mxu0 %v1431
    %v1521 = vpop.f32.mrf.mxu0
    %v1522 = vadd.f32 0.0, %v1521
    %v1523 = vpop.f32.mrf.mxu0
    %v1524 = vadd.f32 0.0, %v1523
    %1525 = vmatmul.bf16.gmra.mxu0 %v1432
    %v1526 = vpop.f32.mrf.mxu0
    %v1527 = vadd.f32 0.0, %v1526
    %v1528 = vpop.f32.mrf.mxu0
    %v1529 = vadd.f32 0.0, %v1528
    %1530 = vdwg.mxu0
    %v1531 = vpack.c.bf16 %v1346, %v1345
    %v1532 = vpack.c.bf16 %v1348, %v1347
    %v1533 = vpack.c.bf16 %v1350, %v1349
    %v1534 = vpack.c.bf16 %v1352, %v1351
    %v1535 = vpack.c.bf16 %v1354, %v1353
    %v1536 = vpack.c.bf16 %v1356, %v1355
    %v1537 = vpack.c.bf16 %v1358, %v1357
    %v1538 = vpack.c.bf16 %v1360, %v1359
    %1539 = vmatpush.bf16.msra.mxu0 %v841
    %1540 = vmatpush.bf16.msra.mxu0 %v840
    %1541 = vmatpush.bf16.msra.mxu0 %v839
    %1542 = vmatpush.bf16.msra.mxu0 %v838
    %1543 = vmatpush.bf16.msra.mxu0 %v837
    %1544 = vmatpush.bf16.msra.mxu0 %v836
    %1545 = vmatpush.bf16.msra.mxu0 %v835
    %1546 = vmatpush.bf16.msra.mxu0 %v834
    %1547 = vmatmul.bf16.gmra.mxu0 %v1531
    %v1548 = vpop.f32.mrf.mxu0
    %v1549 = vadd.f32 0.0, %v1548
    %v1550 = vpop.f32.mrf.mxu0
    %v1551 = vadd.f32 0.0, %v1550
    %1552 = vmatmul.bf16.gmra.mxu0 %v1532
    %v1553 = vpop.f32.mrf.mxu0
    %v1554 = vadd.f32 0.0, %v1553
    %v1555 = vpop.f32.mrf.mxu0
    %v1556 = vadd.f32 0.0, %v1555
    %1557 = vmatmul.bf16.gmra.mxu0 %v1533
    %v1558 = vpop.f32.mrf.mxu0
    %v1559 = vadd.f32 0.0, %v1558
    %v1560 = vpop.f32.mrf.mxu0
    %v1561 = vadd.f32 0.0, %v1560
    %1562 = vmatmul.bf16.gmra.mxu0 %v1534
    %v1563 = vpop.f32.mrf.mxu0
    %v1564 = vadd.f32 0.0, %v1563
    %v1565 = vpop.f32.mrf.mxu0
    %v1566 = vadd.f32 0.0, %v1565
    %1567 = vmatmul.bf16.gmra.mxu0 %v1535
    %v1568 = vpop.f32.mrf.mxu0
    %v1569 = vadd.f32 0.0, %v1568
    %v1570 = vpop.f32.mrf.mxu0
    %v1571 = vadd.f32 0.0, %v1570
    %1572 = vmatmul.bf16.gmra.mxu0 %v1536
    %v1573 = vpop.f32.mrf.mxu0
    %v1574 = vadd.f32 0.0, %v1573
    %v1575 = vpop.f32.mrf.mxu0
    %v1576 = vadd.f32 0.0, %v1575
    %1577 = vmatmul.bf16.gmra.mxu0 %v1537
    %v1578 = vpop.f32.mrf.mxu0
    %v1579 = vadd.f32 0.0, %v1578
    %v1580 = vpop.f32.mrf.mxu0
    %v1581 = vadd.f32 0.0, %v1580
    %1582 = vmatmul.bf16.gmra.mxu0 %v1538
    %v1583 = vpop.f32.mrf.mxu0
    %v1584 = vadd.f32 0.0, %v1583
    %v1585 = vpop.f32.mrf.mxu0
    %v1586 = vadd.f32 0.0, %v1585
    %1587 = vdwg.mxu0
    %v1588 = vmul.f32 %v900, %v1002
    %v1589 = vmul.f32 %v900, %v1003
    %v1590 = vmul.f32 %v900, %v1004
    %v1591 = vmul.f32 %v900, %v1005
    %v1592 = vmul.f32 %v900, %v1006
    %v1593 = vmul.f32 %v900, %v1007
    %v1594 = vmul.f32 %v900, %v1008
    %v1595 = vmul.f32 %v900, %v1009
    %v1596 = vmul.f32 %v900, %v1010
    %v1597 = vmul.f32 %v900, %v1011
    %v1598 = vmul.f32 %v900, %v1012
    %v1599 = vmul.f32 %v900, %v1013
    %v1600 = vmul.f32 %v900, %v1014
    %v1601 = vmul.f32 %v900, %v1015
    %v1602 = vmul.f32 %v900, %v1016
    %v1603 = vmul.f32 %v900, %v1017
    %v1604 = vadd.f32 %v1588, %v1492
    %v1605 = vadd.f32 %v1589, %v1494
    %v1606 = vadd.f32 %v1590, %v1497
    %v1607 = vadd.f32 %v1591, %v1499
    %v1608 = vadd.f32 %v1592, %v1502
    %v1609 = vadd.f32 %v1593, %v1504
    %v1610 = vadd.f32 %v1594, %v1507
    %v1611 = vadd.f32 %v1595, %v1509
    %v1612 = vadd.f32 %v1596, %v1512
    %v1613 = vadd.f32 %v1597, %v1514
    %v1614 = vadd.f32 %v1598, %v1517
    %v1615 = vadd.f32 %v1599, %v1519
    %v1616 = vadd.f32 %v1600, %v1522
    %v1617 = vadd.f32 %v1601, %v1524
    %v1618 = vadd.f32 %v1602, %v1527
    %v1619 = vadd.f32 %v1603, %v1529
    %v1620 = vadd.f32 %v1604, %v920
    %v1621 = vadd.f32 %v1605, %v920
    %v1622 = vadd.f32 %v1606, %v920
    %v1623 = vadd.f32 %v1607, %v920
    %v1624 = vadd.f32 %v1608, %v920
    %v1625 = vadd.f32 %v1609, %v920
    %v1626 = vadd.f32 %v1610, %v920
    %v1627 = vadd.f32 %v1611, %v920
    %v1628 = vadd.f32 %v1612, %v920
    %v1629 = vadd.f32 %v1613, %v920
    %v1630 = vadd.f32 %v1614, %v920
    %v1631 = vadd.f32 %v1615, %v920
    %v1632 = vadd.f32 %v1616, %v920
    %v1633 = vadd.f32 %v1617, %v920
    %v1634 = vadd.f32 %v1618, %v920
    %v1635 = vadd.f32 %v1619, %v920
    %v1636 = vmax.f32 %v1620, 0.0
    %v1637 = vmax.f32 %v1621, 0.0
    %v1638 = vmax.f32 %v1622, 0.0
    %v1639 = vmax.f32 %v1623, 0.0
    %v1640 = vmax.f32 %v1624, 0.0
    %v1641 = vmax.f32 %v1625, 0.0
    %v1642 = vmax.f32 %v1626, 0.0
    %v1643 = vmax.f32 %v1627, 0.0
    %v1644 = vmax.f32 %v1628, 0.0
    %v1645 = vmax.f32 %v1629, 0.0
    %v1646 = vmax.f32 %v1630, 0.0
    %v1647 = vmax.f32 %v1631, 0.0
    %v1648 = vmax.f32 %v1632, 0.0
    %v1649 = vmax.f32 %v1633, 0.0
    %v1650 = vmax.f32 %v1634, 0.0
    %v1651 = vmax.f32 %v1635, 0.0
    %v1652 = vmul.f32 %v1636, 0.1
    %v1653 = vmul.f32 %v1637, 0.1
    %v1654 = vmul.f32 %v1638, 0.1
    %v1655 = vmul.f32 %v1639, 0.1
    %v1656 = vmul.f32 %v1640, 0.1
    %v1657 = vmul.f32 %v1641, 0.1
    %v1658 = vmul.f32 %v1642, 0.1
    %v1659 = vmul.f32 %v1643, 0.1
    %v1660 = vmul.f32 %v1644, 0.1
    %v1661 = vmul.f32 %v1645, 0.1
    %v1662 = vmul.f32 %v1646, 0.1
    %v1663 = vmul.f32 %v1647, 0.1
    %v1664 = vmul.f32 %v1648, 0.1
    %v1665 = vmul.f32 %v1649, 0.1
    %v1666 = vmul.f32 %v1650, 0.1
    %v1667 = vmul.f32 %v1651, 0.1
    %v1668 = vadd.f32 %v970, %v1652
    %v1669 = vadd.f32 %v971, %v1653
    %v1670 = vadd.f32 %v972, %v1654
    %v1671 = vadd.f32 %v973, %v1655
    %v1672 = vadd.f32 %v974, %v1656
    %v1673 = vadd.f32 %v975, %v1657
    %v1674 = vadd.f32 %v976, %v1658
    %v1675 = vadd.f32 %v977, %v1659
    %v1676 = vadd.f32 %v978, %v1660
    %v1677 = vadd.f32 %v979, %v1661
    %v1678 = vadd.f32 %v980, %v1662
    %v1679 = vadd.f32 %v981, %v1663
    %v1680 = vadd.f32 %v982, %v1664
    %v1681 = vadd.f32 %v983, %v1665
    %v1682 = vadd.f32 %v984, %v1666
    %v1683 = vadd.f32 %v985, %v1667
    %v1684 = vmul.f32 %v1668, 0.1
    %v1685 = vmul.f32 %v1669, 0.1
    %v1686 = vmul.f32 %v1670, 0.1
    %v1687 = vmul.f32 %v1671, 0.1
    %v1688 = vmul.f32 %v1672, 0.1
    %v1689 = vmul.f32 %v1673, 0.1
    %v1690 = vmul.f32 %v1674, 0.1
    %v1691 = vmul.f32 %v1675, 0.1
    %v1692 = vmul.f32 %v1676, 0.1
    %v1693 = vmul.f32 %v1677, 0.1
    %v1694 = vmul.f32 %v1678, 0.1
    %v1695 = vmul.f32 %v1679, 0.1
    %v1696 = vmul.f32 %v1680, 0.1
    %v1697 = vmul.f32 %v1681, 0.1
    %v1698 = vmul.f32 %v1682, 0.1
    %v1699 = vmul.f32 %v1683, 0.1
    %v1700 = vadd.f32 %v1002, %v1684
    %v1701 = vadd.f32 %v1003, %v1685
    %v1702 = vadd.f32 %v1004, %v1686
    %v1703 = vadd.f32 %v1005, %v1687
    %v1704 = vadd.f32 %v1006, %v1688
    %v1705 = vadd.f32 %v1007, %v1689
    %v1706 = vadd.f32 %v1008, %v1690
    %v1707 = vadd.f32 %v1009, %v1691
    %v1708 = vadd.f32 %v1010, %v1692
    %v1709 = vadd.f32 %v1011, %v1693
    %v1710 = vadd.f32 %v1012, %v1694
    %v1711 = vadd.f32 %v1013, %v1695
    %v1712 = vadd.f32 %v1014, %v1696
    %v1713 = vadd.f32 %v1015, %v1697
    %v1714 = vadd.f32 %v1016, %v1698
    %v1715 = vadd.f32 %v1017, %v1699
    %v1716 = vmul.f32 %v1019, %v1121
    %v1717 = vmul.f32 %v1019, %v1122
    %v1718 = vmul.f32 %v1019, %v1123
    %v1719 = vmul.f32 %v1019, %v1124
    %v1720 = vmul.f32 %v1019, %v1125
    %v1721 = vmul.f32 %v1019, %v1126
    %v1722 = vmul.f32 %v1019, %v1127
    %v1723 = vmul.f32 %v1019, %v1128
    %v1724 = vmul.f32 %v1019, %v1129
    %v1725 = vmul.f32 %v1019, %v1130
    %v1726 = vmul.f32 %v1019, %v1131
    %v1727 = vmul.f32 %v1019, %v1132
    %v1728 = vmul.f32 %v1019, %v1133
    %v1729 = vmul.f32 %v1019, %v1134
    %v1730 = vmul.f32 %v1019, %v1135
    %v1731 = vmul.f32 %v1019, %v1136
    %v1732 = vadd.f32 %v1716, %v1549
    %v1733 = vadd.f32 %v1717, %v1551
    %v1734 = vadd.f32 %v1718, %v1554
    %v1735 = vadd.f32 %v1719, %v1556
    %v1736 = vadd.f32 %v1720, %v1559
    %v1737 = vadd.f32 %v1721, %v1561
    %v1738 = vadd.f32 %v1722, %v1564
    %v1739 = vadd.f32 %v1723, %v1566
    %v1740 = vadd.f32 %v1724, %v1569
    %v1741 = vadd.f32 %v1725, %v1571
    %v1742 = vadd.f32 %v1726, %v1574
    %v1743 = vadd.f32 %v1727, %v1576
    %v1744 = vadd.f32 %v1728, %v1579
    %v1745 = vadd.f32 %v1729, %v1581
    %v1746 = vadd.f32 %v1730, %v1584
    %v1747 = vadd.f32 %v1731, %v1586
    %v1748 = vadd.f32 %v1732, %v1039
    %v1749 = vadd.f32 %v1733, %v1039
    %v1750 = vadd.f32 %v1734, %v1039
    %v1751 = vadd.f32 %v1735, %v1039
    %v1752 = vadd.f32 %v1736, %v1039
    %v1753 = vadd.f32 %v1737, %v1039
    %v1754 = vadd.f32 %v1738, %v1039
    %v1755 = vadd.f32 %v1739, %v1039
    %v1756 = vadd.f32 %v1740, %v1039
    %v1757 = vadd.f32 %v1741, %v1039
    %v1758 = vadd.f32 %v1742, %v1039
    %v1759 = vadd.f32 %v1743, %v1039
    %v1760 = vadd.f32 %v1744, %v1039
    %v1761 = vadd.f32 %v1745, %v1039
    %v1762 = vadd.f32 %v1746, %v1039
    %v1763 = vadd.f32 %v1747, %v1039
    %v1764 = vmax.f32 %v1748, 0.0
    %v1765 = vmax.f32 %v1749, 0.0
    %v1766 = vmax.f32 %v1750, 0.0
    %v1767 = vmax.f32 %v1751, 0.0
    %v1768 = vmax.f32 %v1752, 0.0
    %v1769 = vmax.f32 %v1753, 0.0
    %v1770 = vmax.f32 %v1754, 0.0
    %v1771 = vmax.f32 %v1755, 0.0
    %v1772 = vmax.f32 %v1756, 0.0
    %v1773 = vmax.f32 %v1757, 0.0
    %v1774 = vmax.f32 %v1758, 0.0
    %v1775 = vmax.f32 %v1759, 0.0
    %v1776 = vmax.f32 %v1760, 0.0
    %v1777 = vmax.f32 %v1761, 0.0
    %v1778 = vmax.f32 %v1762, 0.0
    %v1779 = vmax.f32 %v1763, 0.0
    %v1780 = vmul.f32 %v1764, 0.1
    %v1781 = vmul.f32 %v1765, 0.1
    %v1782 = vmul.f32 %v1766, 0.1
    %v1783 = vmul.f32 %v1767, 0.1
    %v1784 = vmul.f32 %v1768, 0.1
    %v1785 = vmul.f32 %v1769, 0.1
    %v1786 = vmul.f32 %v1770, 0.1
    %v1787 = vmul.f32 %v1771, 0.1
    %v1788 = vmul.f32 %v1772, 0.1
    %v1789 = vmul.f32 %v1773, 0.1
    %v1790 = vmul.f32 %v1774, 0.1
    %v1791 = vmul.f32 %v1775, 0.1
    %v1792 = vmul.f32 %v1776, 0.1
    %v1793 = vmul.f32 %v1777, 0.1
    %v1794 = vmul.f32 %v1778, 0.1
    %v1795 = vmul.f32 %v1779, 0.1
    %v1796 = vadd.f32 %v1089, %v1780
    %v1797 = vadd.f32 %v1090, %v1781
    %v1798 = vadd.f32 %v1091, %v1782
    %v1799 = vadd.f32 %v1092, %v1783
    %v1800 = vadd.f32 %v1093, %v1784
    %v1801 = vadd.f32 %v1094, %v1785
    %v1802 = vadd.f32 %v1095, %v1786
    %v1803 = vadd.f32 %v1096, %v1787
    %v1804 = vadd.f32 %v1097, %v1788
    %v1805 = vadd.f32 %v1098, %v1789
    %v1806 = vadd.f32 %v1099, %v1790
    %v1807 = vadd.f32 %v1100, %v1791
    %v1808 = vadd.f32 %v1101, %v1792
    %v1809 = vadd.f32 %v1102, %v1793
    %v1810 = vadd.f32 %v1103, %v1794
    %v1811 = vadd.f32 %v1104, %v1795
    %v1812 = vmul.f32 %v1796, 0.1
    %v1813 = vmul.f32 %v1797, 0.1
    %v1814 = vmul.f32 %v1798, 0.1
    %v1815 = vmul.f32 %v1799, 0.1
    %v1816 = vmul.f32 %v1800, 0.1
    %v1817 = vmul.f32 %v1801, 0.1
    %v1818 = vmul.f32 %v1802, 0.1
    %v1819 = vmul.f32 %v1803, 0.1
    %v1820 = vmul.f32 %v1804, 0.1
    %v1821 = vmul.f32 %v1805, 0.1
    %v1822 = vmul.f32 %v1806, 0.1
    %v1823 = vmul.f32 %v1807, 0.1
    %v1824 = vmul.f32 %v1808, 0.1
    %v1825 = vmul.f32 %v1809, 0.1
    %v1826 = vmul.f32 %v1810, 0.1
    %v1827 = vmul.f32 %v1811, 0.1
    %v1828 = vadd.f32 %v1121, %v1812
    %v1829 = vadd.f32 %v1122, %v1813
    %v1830 = vadd.f32 %v1123, %v1814
    %v1831 = vadd.f32 %v1124, %v1815
    %v1832 = vadd.f32 %v1125, %v1816
    %v1833 = vadd.f32 %v1126, %v1817
    %v1834 = vadd.f32 %v1127, %v1818
    %v1835 = vadd.f32 %v1128, %v1819
    %v1836 = vadd.f32 %v1129, %v1820
    %v1837 = vadd.f32 %v1130, %v1821
    %v1838 = vadd.f32 %v1131, %v1822
    %v1839 = vadd.f32 %v1132, %v1823
    %v1840 = vadd.f32 %v1133, %v1824
    %v1841 = vadd.f32 %v1134, %v1825
    %v1842 = vadd.f32 %v1135, %v1826
    %v1843 = vadd.f32 %v1136, %v1827
    %v1844 = vpack.c.bf16 %v1701, %v1700
    %v1845 = vpack.c.bf16 %v1703, %v1702
    %v1846 = vpack.c.bf16 %v1705, %v1704
    %v1847 = vpack.c.bf16 %v1707, %v1706
    %v1848 = vpack.c.bf16 %v1709, %v1708
    %v1849 = vpack.c.bf16 %v1711, %v1710
    %v1850 = vpack.c.bf16 %v1713, %v1712
    %v1851 = vpack.c.bf16 %v1715, %v1714
    %1852 = vmatpush.bf16.msra.mxu0 %v1184
    %1853 = vmatpush.bf16.msra.mxu0 %v1183
    %1854 = vmatpush.bf16.msra.mxu0 %v1182
    %1855 = vmatpush.bf16.msra.mxu0 %v1181
    %1856 = vmatpush.bf16.msra.mxu0 %v1180
    %1857 = vmatpush.bf16.msra.mxu0 %v1179
    %1858 = vmatpush.bf16.msra.mxu0 %v1178
    %1859 = vmatpush.bf16.msra.mxu0 %v1177
    %1860 = vmatmul.bf16.gmra.mxu0 %v1844
    %v1861 = vpop.f32.mrf.mxu0
    %v1862 = vadd.f32 0.0, %v1861
    %v1863 = vpop.f32.mrf.mxu0
    %v1864 = vadd.f32 0.0, %v1863
    %1865 = vmatmul.bf16.gmra.mxu0 %v1845
    %v1866 = vpop.f32.mrf.mxu0
    %v1867 = vadd.f32 0.0, %v1866
    %v1868 = vpop.f32.mrf.mxu0
    %v1869 = vadd.f32 0.0, %v1868
    %1870 = vmatmul.bf16.gmra.mxu0 %v1846
    %v1871 = vpop.f32.mrf.mxu0
    %v1872 = vadd.f32 0.0, %v1871
    %v1873 = vpop.f32.mrf.mxu0
    %v1874 = vadd.f32 0.0, %v1873
    %1875 = vmatmul.bf16.gmra.mxu0 %v1847
    %v1876 = vpop.f32.mrf.mxu0
    %v1877 = vadd.f32 0.0, %v1876
    %v1878 = vpop.f32.mrf.mxu0
    %v1879 = vadd.f32 0.0, %v1878
    %1880 = vmatmul.bf16.gmra.mxu0 %v1848
    %v1881 = vpop.f32.mrf.mxu0
    %v1882 = vadd.f32 0.0, %v1881
    %v1883 = vpop.f32.mrf.mxu0
    %v1884 = vadd.f32 0.0, %v1883
    %1885 = vmatmul.bf16.gmra.mxu0 %v1849
    %v1886 = vpop.f32.mrf.mxu0
    %v1887 = vadd.f32 0.0, %v1886
    %v1888 = vpop.f32.mrf.mxu0
    %v1889 = vadd.f32 0.0, %v1888
    %1890 = vmatmul.bf16.gmra.mxu0 %v1850
    %v1891 = vpop.f32.mrf.mxu0
    %v1892 = vadd.f32 0.0, %v1891
    %v1893 = vpop.f32.mrf.mxu0
    %v1894 = vadd.f32 0.0, %v1893
    %1895 = vmatmul.bf16.gmra.mxu0 %v1851
    %v1896 = vpop.f32.mrf.mxu0
    %v1897 = vadd.f32 0.0, %v1896
    %v1898 = vpop.f32.mrf.mxu0
    %v1899 = vadd.f32 0.0, %v1898
    %1900 = vdwg.mxu0
    %v1901 = vmul.f32 %v1243, %v1345
    %v1902 = vmul.f32 %v1243, %v1346
    %v1903 = vmul.f32 %v1243, %v1347
    %v1904 = vmul.f32 %v1243, %v1348
    %v1905 = vmul.f32 %v1243, %v1349
    %v1906 = vmul.f32 %v1243, %v1350
    %v1907 = vmul.f32 %v1243, %v1351
    %v1908 = vmul.f32 %v1243, %v1352
    %v1909 = vmul.f32 %v1243, %v1353
    %v1910 = vmul.f32 %v1243, %v1354
    %v1911 = vmul.f32 %v1243, %v1355
    %v1912 = vmul.f32 %v1243, %v1356
    %v1913 = vmul.f32 %v1243, %v1357
    %v1914 = vmul.f32 %v1243, %v1358
    %v1915 = vmul.f32 %v1243, %v1359
    %v1916 = vmul.f32 %v1243, %v1360
    %v1917 = vadd.f32 %v1901, %v1862
    %v1918 = vadd.f32 %v1902, %v1864
    %v1919 = vadd.f32 %v1903, %v1867
    %v1920 = vadd.f32 %v1904, %v1869
    %v1921 = vadd.f32 %v1905, %v1872
    %v1922 = vadd.f32 %v1906, %v1874
    %v1923 = vadd.f32 %v1907, %v1877
    %v1924 = vadd.f32 %v1908, %v1879
    %v1925 = vadd.f32 %v1909, %v1882
    %v1926 = vadd.f32 %v1910, %v1884
    %v1927 = vadd.f32 %v1911, %v1887
    %v1928 = vadd.f32 %v1912, %v1889
    %v1929 = vadd.f32 %v1913, %v1892
    %v1930 = vadd.f32 %v1914, %v1894
    %v1931 = vadd.f32 %v1915, %v1897
    %v1932 = vadd.f32 %v1916, %v1899
    %v1933 = vadd.f32 %v1917, %v1263
    %v1934 = vadd.f32 %v1918, %v1263
    %v1935 = vadd.f32 %v1919, %v1263
    %v1936 = vadd.f32 %v1920, %v1263
    %v1937 = vadd.f32 %v1921, %v1263
    %v1938 = vadd.f32 %v1922, %v1263
    %v1939 = vadd.f32 %v1923, %v1263
    %v1940 = vadd.f32 %v1924, %v1263
    %v1941 = vadd.f32 %v1925, %v1263
    %v1942 = vadd.f32 %v1926, %v1263
    %v1943 = vadd.f32 %v1927, %v1263
    %v1944 = vadd.f32 %v1928, %v1263
    %v1945 = vadd.f32 %v1929, %v1263
    %v1946 = vadd.f32 %v1930, %v1263
    %v1947 = vadd.f32 %v1931, %v1263
    %v1948 = vadd.f32 %v1932, %v1263
    %v1949 = vmax.f32 %v1933, 0.0
    %v1950 = vmax.f32 %v1934, 0.0
    %v1951 = vmax.f32 %v1935, 0.0
    %v1952 = vmax.f32 %v1936, 0.0
    %v1953 = vmax.f32 %v1937, 0.0
    %v1954 = vmax.f32 %v1938, 0.0
    %v1955 = vmax.f32 %v1939, 0.0
    %v1956 = vmax.f32 %v1940, 0.0
    %v1957 = vmax.f32 %v1941, 0.0
    %v1958 = vmax.f32 %v1942, 0.0
    %v1959 = vmax.f32 %v1943, 0.0
    %v1960 = vmax.f32 %v1944, 0.0
    %v1961 = vmax.f32 %v1945, 0.0
    %v1962 = vmax.f32 %v1946, 0.0
    %v1963 = vmax.f32 %v1947, 0.0
    %v1964 = vmax.f32 %v1948, 0.0
    %v1965 = vmul.f32 %v1949, 0.1
    %v1966 = vmul.f32 %v1950, 0.1
    %v1967 = vmul.f32 %v1951, 0.1
    %v1968 = vmul.f32 %v1952, 0.1
    %v1969 = vmul.f32 %v1953, 0.1
    %v1970 = vmul.f32 %v1954, 0.1
    %v1971 = vmul.f32 %v1955, 0.1
    %v1972 = vmul.f32 %v1956, 0.1
    %v1973 = vmul.f32 %v1957, 0.1
    %v1974 = vmul.f32 %v1958, 0.1
    %v1975 = vmul.f32 %v1959, 0.1
    %v1976 = vmul.f32 %v1960, 0.1
    %v1977 = vmul.f32 %v1961, 0.1
    %v1978 = vmul.f32 %v1962, 0.1
    %v1979 = vmul.f32 %v1963, 0.1
    %v1980 = vmul.f32 %v1964, 0.1
    %v1981 = vadd.f32 %v1313, %v1965
    %v1982 = vadd.f32 %v1314, %v1966
    %v1983 = vadd.f32 %v1315, %v1967
    %v1984 = vadd.f32 %v1316, %v1968
    %v1985 = vadd.f32 %v1317, %v1969
    %v1986 = vadd.f32 %v1318, %v1970
    %v1987 = vadd.f32 %v1319, %v1971
    %v1988 = vadd.f32 %v1320, %v1972
    %v1989 = vadd.f32 %v1321, %v1973
    %v1990 = vadd.f32 %v1322, %v1974
    %v1991 = vadd.f32 %v1323, %v1975
    %v1992 = vadd.f32 %v1324, %v1976
    %v1993 = vadd.f32 %v1325, %v1977
    %v1994 = vadd.f32 %v1326, %v1978
    %v1995 = vadd.f32 %v1327, %v1979
    %v1996 = vadd.f32 %v1328, %v1980
    %v1997 = vmul.f32 %v1981, 0.1
    %v1998 = vmul.f32 %v1982, 0.1
    %v1999 = vmul.f32 %v1983, 0.1
    %v2000 = vmul.f32 %v1984, 0.1
    %v2001 = vmul.f32 %v1985, 0.1
    %v2002 = vmul.f32 %v1986, 0.1
    %v2003 = vmul.f32 %v1987, 0.1
    %v2004 = vmul.f32 %v1988, 0.1
    %v2005 = vmul.f32 %v1989, 0.1
    %v2006 = vmul.f32 %v1990, 0.1
    %v2007 = vmul.f32 %v1991, 0.1
    %v2008 = vmul.f32 %v1992, 0.1
    %v2009 = vmul.f32 %v1993, 0.1
    %v2010 = vmul.f32 %v1994, 0.1
    %v2011 = vmul.f32 %v1995, 0.1
    %v2012 = vmul.f32 %v1996, 0.1
    %v2013 = vadd.f32 %v1345, %v1997
    %v2014 = vadd.f32 %v1346, %v1998
    %v2015 = vadd.f32 %v1347, %v1999
    %v2016 = vadd.f32 %v1348, %v2000
    %v2017 = vadd.f32 %v1349, %v2001
    %v2018 = vadd.f32 %v1350, %v2002
    %v2019 = vadd.f32 %v1351, %v2003
    %v2020 = vadd.f32 %v1352, %v2004
    %v2021 = vadd.f32 %v1353, %v2005
    %v2022 = vadd.f32 %v1354, %v2006
    %v2023 = vadd.f32 %v1355, %v2007
    %v2024 = vadd.f32 %v1356, %v2008
    %v2025 = vadd.f32 %v1357, %v2009
    %v2026 = vadd.f32 %v1358, %v2010
    %v2027 = vadd.f32 %v1359, %v2011
    %v2028 = vadd.f32 %v1360, %v2012
    %v2029 = vmul.f32 %v1443, 0.1
    %v2030 = vmul.f32 %v1445, 0.1
    %v2031 = vmul.f32 %v1448, 0.1
    %v2032 = vmul.f32 %v1450, 0.1
    %v2033 = vmul.f32 %v1453, 0.1
    %v2034 = vmul.f32 %v1455, 0.1
    %v2035 = vmul.f32 %v1458, 0.1
    %v2036 = vmul.f32 %v1460, 0.1
    %v2037 = vmul.f32 %v1463, 0.1
    %v2038 = vmul.f32 %v1465, 0.1
    %v2039 = vmul.f32 %v1468, 0.1
    %v2040 = vmul.f32 %v1470, 0.1
    %v2041 = vmul.f32 %v1473, 0.1
    %v2042 = vmul.f32 %v1475, 0.1
    %v2043 = vmul.f32 %v1478, 0.1
    %v2044 = vmul.f32 %v1480, 0.1
    %v2045 = vsub.f32 %v1377, %v2029
    %v2046 = vsub.f32 %v1378, %v2030
    %v2047 = vsub.f32 %v1379, %v2031
    %v2048 = vsub.f32 %v1380, %v2032
    %v2049 = vsub.f32 %v1381, %v2033
    %v2050 = vsub.f32 %v1382, %v2034
    %v2051 = vsub.f32 %v1383, %v2035
    %v2052 = vsub.f32 %v1384, %v2036
    %v2053 = vsub.f32 %v1385, %v2037
    %v2054 = vsub.f32 %v1386, %v2038
    %v2055 = vsub.f32 %v1387, %v2039
    %v2056 = vsub.f32 %v1388, %v2040
    %v2057 = vsub.f32 %v1389, %v2041
    %v2058 = vsub.f32 %v1390, %v2042
    %v2059 = vsub.f32 %v1391, %v2043
    %v2060 = vsub.f32 %v1392, %v2044
    %v2061 = vmul.f32 %v2045, 0.1
    %v2062 = vmul.f32 %v2046, 0.1
    %v2063 = vmul.f32 %v2047, 0.1
    %v2064 = vmul.f32 %v2048, 0.1
    %v2065 = vmul.f32 %v2049, 0.1
    %v2066 = vmul.f32 %v2050, 0.1
    %v2067 = vmul.f32 %v2051, 0.1
    %v2068 = vmul.f32 %v2052, 0.1
    %v2069 = vmul.f32 %v2053, 0.1
    %v2070 = vmul.f32 %v2054, 0.1
    %v2071 = vmul.f32 %v2055, 0.1
    %v2072 = vmul.f32 %v2056, 0.1
    %v2073 = vmul.f32 %v2057, 0.1
    %v2074 = vmul.f32 %v2058, 0.1
    %v2075 = vmul.f32 %v2059, 0.1
    %v2076 = vmul.f32 %v2060, 0.1
    %v2077 = vadd.f32 %v1409, %v2061
    %v2078 = vadd.f32 %v1410, %v2062
    %v2079 = vadd.f32 %v1411, %v2063
    %v2080 = vadd.f32 %v1412, %v2064
    %v2081 = vadd.f32 %v1413, %v2065
    %v2082 = vadd.f32 %v1414, %v2066
    %v2083 = vadd.f32 %v1415, %v2067
    %v2084 = vadd.f32 %v1416, %v2068
    %v2085 = vadd.f32 %v1417, %v2069
    %v2086 = vadd.f32 %v1418, %v2070
    %v2087 = vadd.f32 %v1419, %v2071
    %v2088 = vadd.f32 %v1420, %v2072
    %v2089 = vadd.f32 %v1421, %v2073
    %v2090 = vadd.f32 %v1422, %v2074
    %v2091 = vadd.f32 %v1423, %v2075
    %v2092 = vadd.f32 %v1424, %v2076
    %v2093 = vpack.c.bf16 %v2078, %v2077
    %v2094 = vpack.c.bf16 %v2080, %v2079
    %v2095 = vpack.c.bf16 %v2082, %v2081
    %v2096 = vpack.c.bf16 %v2084, %v2083
    %v2097 = vpack.c.bf16 %v2086, %v2085
    %v2098 = vpack.c.bf16 %v2088, %v2087
    %v2099 = vpack.c.bf16 %v2090, %v2089
    %v2100 = vpack.c.bf16 %v2092, %v2091
    %2101 = vmatpush.bf16.msra.mxu0 %v2100
    %2102 = vmatpush.bf16.msra.mxu0 %v2099
    %2103 = vmatpush.bf16.msra.mxu0 %v2098
    %2104 = vmatpush.bf16.msra.mxu0 %v2097
    %2105 = vmatpush.bf16.msra.mxu0 %v2096
    %2106 = vmatpush.bf16.msra.mxu0 %v2095
    %2107 = vmatpush.bf16.msra.mxu0 %v2094
    %2108 = vmatpush.bf16.msra.mxu0 %v2093
    %2109 = vmatmul.bf16.gmra.mxu0 %v519
    %v2110 = vpop.f32.mrf.mxu0
    %v2111 = vadd.f32 0.0, %v2110
    %v2112 = vpop.f32.mrf.mxu0
    %v2113 = vadd.f32 0.0, %v2112
    %2114 = vmatmul.bf16.gmra.mxu0 %v520
    %v2115 = vpop.f32.mrf.mxu0
    %v2116 = vadd.f32 0.0, %v2115
    %v2117 = vpop.f32.mrf.mxu0
    %v2118 = vadd.f32 0.0, %v2117
    %2119 = vmatmul.bf16.gmra.mxu0 %v521
    %v2120 = vpop.f32.mrf.mxu0
    %v2121 = vadd.f32 0.0, %v2120
    %v2122 = vpop.f32.mrf.mxu0
    %v2123 = vadd.f32 0.0, %v2122
    %2124 = vmatmul.bf16.gmra.mxu0 %v522
    %v2125 = vpop.f32.mrf.mxu0
    %v2126 = vadd.f32 0.0, %v2125
    %v2127 = vpop.f32.mrf.mxu0
    %v2128 = vadd.f32 0.0, %v2127
    %2129 = vmatmul.bf16.gmra.mxu0 %v523
    %v2130 = vpop.f32.mrf.mxu0
    %v2131 = vadd.f32 0.0, %v2130
    %v2132 = vpop.f32.mrf.mxu0
    %v2133 = vadd.f32 0.0, %v2132
    %2134 = vmatmul.bf16.gmra.mxu0 %v524
    %v2135 = vpop.f32.mrf.mxu0
    %v2136 = vadd.f32 0.0, %v2135
    %v2137 = vpop.f32.mrf.mxu0
    %v2138 = vadd.f32 0.0, %v2137
    %2139 = vmatmul.bf16.gmra.mxu0 %v525
    %v2140 = vpop.f32.mrf.mxu0
    %v2141 = vadd.f32 0.0, %v2140
    %v2142 = vpop.f32.mrf.mxu0
    %v2143 = vadd.f32 0.0, %v2142
    %2144 = vmatmul.bf16.gmra.mxu0 %v526
    %v2145 = vpop.f32.mrf.mxu0
    %v2146 = vadd.f32 0.0, %v2145
    %v2147 = vpop.f32.mrf.mxu0
    %v2148 = vadd.f32 0.0, %v2147
    %2149 = vdwg.mxu0
    %2150 = vmatpush.bf16.msra.mxu0 %v744
    %2151 = vmatpush.bf16.msra.mxu0 %v743
    %2152 = vmatpush.bf16.msra.mxu0 %v742
    %2153 = vmatpush.bf16.msra.mxu0 %v741
    %2154 = vmatpush.bf16.msra.mxu0 %v740
    %2155 = vmatpush.bf16.msra.mxu0 %v739
    %2156 = vmatpush.bf16.msra.mxu0 %v738
    %2157 = vmatpush.bf16.msra.mxu0 %v737
    %2158 = vmatmul.bf16.gmra.mxu0 %v2093
    %v2159 = vpop.f32.mrf.mxu0
    %v2160 = vadd.f32 0.0, %v2159
    %v2161 = vpop.f32.mrf.mxu0
    %v2162 = vadd.f32 0.0, %v2161
    %2163 = vmatmul.bf16.gmra.mxu0 %v2094
    %v2164 = vpop.f32.mrf.mxu0
    %v2165 = vadd.f32 0.0, %v2164
    %v2166 = vpop.f32.mrf.mxu0
    %v2167 = vadd.f32 0.0, %v2166
    %2168 = vmatmul.bf16.gmra.mxu0 %v2095
    %v2169 = vpop.f32.mrf.mxu0
    %v2170 = vadd.f32 0.0, %v2169
    %v2171 = vpop.f32.mrf.mxu0
    %v2172 = vadd.f32 0.0, %v2171
    %2173 = vmatmul.bf16.gmra.mxu0 %v2096
    %v2174 = vpop.f32.mrf.mxu0
    %v2175 = vadd.f32 0.0, %v2174
    %v2176 = vpop.f32.mrf.mxu0
    %v2177 = vadd.f32 0.0, %v2176
    %2178 = vmatmul.bf16.gmra.mxu0 %v2097
    %v2179 = vpop.f32.mrf.mxu0
    %v2180 = vadd.f32 0.0, %v2179
    %v2181 = vpop.f32.mrf.mxu0
    %v2182 = vadd.f32 0.0, %v2181
    %2183 = vmatmul.bf16.gmra.mxu0 %v2098
    %v2184 = vpop.f32.mrf.mxu0
    %v2185 = vadd.f32 0.0, %v2184
    %v2186 = vpop.f32.mrf.mxu0
    %v2187 = vadd.f32 0.0, %v2186
    %2188 = vmatmul.bf16.gmra.mxu0 %v2099
    %v2189 = vpop.f32.mrf.mxu0
    %v2190 = vadd.f32 0.0, %v2189
    %v2191 = vpop.f32.mrf.mxu0
    %v2192 = vadd.f32 0.0, %v2191
    %2193 = vmatmul.bf16.gmra.mxu0 %v2100
    %v2194 = vpop.f32.mrf.mxu0
    %v2195 = vadd.f32 0.0, %v2194
    %v2196 = vpop.f32.mrf.mxu0
    %v2197 = vadd.f32 0.0, %v2196
    %2198 = vdwg.mxu0
    %v2199 = vpack.c.bf16 %v2014, %v2013
    %v2200 = vpack.c.bf16 %v2016, %v2015
    %v2201 = vpack.c.bf16 %v2018, %v2017
    %v2202 = vpack.c.bf16 %v2020, %v2019
    %v2203 = vpack.c.bf16 %v2022, %v2021
    %v2204 = vpack.c.bf16 %v2024, %v2023
    %v2205 = vpack.c.bf16 %v2026, %v2025
    %v2206 = vpack.c.bf16 %v2028, %v2027
    %2207 = vmatpush.bf16.msra.mxu0 %v841
    %2208 = vmatpush.bf16.msra.mxu0 %v840
    %2209 = vmatpush.bf16.msra.mxu0 %v839
    %2210 = vmatpush.bf16.msra.mxu0 %v838
    %2211 = vmatpush.bf16.msra.mxu0 %v837
    %2212 = vmatpush.bf16.msra.mxu0 %v836
    %2213 = vmatpush.bf16.msra.mxu0 %v835
    %2214 = vmatpush.bf16.msra.mxu0 %v834
    %2215 = vmatmul.bf16.gmra.mxu0 %v2199
    %v2216 = vpop.f32.mrf.mxu0
    %v2217 = vadd.f32 0.0, %v2216
    %v2218 = vpop.f32.mrf.mxu0
    %v2219 = vadd.f32 0.0, %v2218
    %2220 = vmatmul.bf16.gmra.mxu0 %v2200
    %v2221 = vpop.f32.mrf.mxu0
    %v2222 = vadd.f32 0.0, %v2221
    %v2223 = vpop.f32.mrf.mxu0
    %v2224 = vadd.f32 0.0, %v2223
    %2225 = vmatmul.bf16.gmra.mxu0 %v2201
    %v2226 = vpop.f32.mrf.mxu0
    %v2227 = vadd.f32 0.0, %v2226
    %v2228 = vpop.f32.mrf.mxu0
    %v2229 = vadd.f32 0.0, %v2228
    %2230 = vmatmul.bf16.gmra.mxu0 %v2202
    %v2231 = vpop.f32.mrf.mxu0
    %v2232 = vadd.f32 0.0, %v2231
    %v2233 = vpop.f32.mrf.mxu0
    %v2234 = vadd.f32 0.0, %v2233
    %2235 = vmatmul.bf16.gmra.mxu0 %v2203
    %v2236 = vpop.f32.mrf.mxu0
    %v2237 = vadd.f32 0.0, %v2236
    %v2238 = vpop.f32.mrf.mxu0
    %v2239 = vadd.f32 0.0, %v2238
    %2240 = vmatmul.bf16.gmra.mxu0 %v2204
    %v2241 = vpop.f32.mrf.mxu0
    %v2242 = vadd.f32 0.0, %v2241
    %v2243 = vpop.f32.mrf.mxu0
    %v2244 = vadd.f32 0.0, %v2243
    %2245 = vmatmul.bf16.gmra.mxu0 %v2205
    %v2246 = vpop.f32.mrf.mxu0
    %v2247 = vadd.f32 0.0, %v2246
    %v2248 = vpop.f32.mrf.mxu0
    %v2249 = vadd.f32 0.0, %v2248
    %2250 = vmatmul.bf16.gmra.mxu0 %v2206
    %v2251 = vpop.f32.mrf.mxu0
    %v2252 = vadd.f32 0.0, %v2251
    %v2253 = vpop.f32.mrf.mxu0
    %v2254 = vadd.f32 0.0, %v2253
    %2255 = vdwg.mxu0
    %v2256 = vmul.f32 %v900, %v1700
    %v2257 = vmul.f32 %v900, %v1701
    %v2258 = vmul.f32 %v900, %v1702
    %v2259 = vmul.f32 %v900, %v1703
    %v2260 = vmul.f32 %v900, %v1704
    %v2261 = vmul.f32 %v900, %v1705
    %v2262 = vmul.f32 %v900, %v1706
    %v2263 = vmul.f32 %v900, %v1707
    %v2264 = vmul.f32 %v900, %v1708
    %v2265 = vmul.f32 %v900, %v1709
    %v2266 = vmul.f32 %v900, %v1710
    %v2267 = vmul.f32 %v900, %v1711
    %v2268 = vmul.f32 %v900, %v1712
    %v2269 = vmul.f32 %v900, %v1713
    %v2270 = vmul.f32 %v900, %v1714
    %v2271 = vmul.f32 %v900, %v1715
    %v2272 = vadd.f32 %v2256, %v2160
    %v2273 = vadd.f32 %v2257, %v2162
    %v2274 = vadd.f32 %v2258, %v2165
    %v2275 = vadd.f32 %v2259, %v2167
    %v2276 = vadd.f32 %v2260, %v2170
    %v2277 = vadd.f32 %v2261, %v2172
    %v2278 = vadd.f32 %v2262, %v2175
    %v2279 = vadd.f32 %v2263, %v2177
    %v2280 = vadd.f32 %v2264, %v2180
    %v2281 = vadd.f32 %v2265, %v2182
    %v2282 = vadd.f32 %v2266, %v2185
    %v2283 = vadd.f32 %v2267, %v2187
    %v2284 = vadd.f32 %v2268, %v2190
    %v2285 = vadd.f32 %v2269, %v2192
    %v2286 = vadd.f32 %v2270, %v2195
    %v2287 = vadd.f32 %v2271, %v2197
    %v2288 = vadd.f32 %v2272, %v920
    %v2289 = vadd.f32 %v2273, %v920
    %v2290 = vadd.f32 %v2274, %v920
    %v2291 = vadd.f32 %v2275, %v920
    %v2292 = vadd.f32 %v2276, %v920
    %v2293 = vadd.f32 %v2277, %v920
    %v2294 = vadd.f32 %v2278, %v920
    %v2295 = vadd.f32 %v2279, %v920
    %v2296 = vadd.f32 %v2280, %v920
    %v2297 = vadd.f32 %v2281, %v920
    %v2298 = vadd.f32 %v2282, %v920
    %v2299 = vadd.f32 %v2283, %v920
    %v2300 = vadd.f32 %v2284, %v920
    %v2301 = vadd.f32 %v2285, %v920
    %v2302 = vadd.f32 %v2286, %v920
    %v2303 = vadd.f32 %v2287, %v920
    %v2304 = vmax.f32 %v2288, 0.0
    %v2305 = vmax.f32 %v2289, 0.0
    %v2306 = vmax.f32 %v2290, 0.0
    %v2307 = vmax.f32 %v2291, 0.0
    %v2308 = vmax.f32 %v2292, 0.0
    %v2309 = vmax.f32 %v2293, 0.0
    %v2310 = vmax.f32 %v2294, 0.0
    %v2311 = vmax.f32 %v2295, 0.0
    %v2312 = vmax.f32 %v2296, 0.0
    %v2313 = vmax.f32 %v2297, 0.0
    %v2314 = vmax.f32 %v2298, 0.0
    %v2315 = vmax.f32 %v2299, 0.0
    %v2316 = vmax.f32 %v2300, 0.0
    %v2317 = vmax.f32 %v2301, 0.0
    %v2318 = vmax.f32 %v2302, 0.0
    %v2319 = vmax.f32 %v2303, 0.0
    %v2320 = vmul.f32 %v2304, 0.1
    %v2321 = vmul.f32 %v2305, 0.1
    %v2322 = vmul.f32 %v2306, 0.1
    %v2323 = vmul.f32 %v2307, 0.1
    %v2324 = vmul.f32 %v2308, 0.1
    %v2325 = vmul.f32 %v2309, 0.1
    %v2326 = vmul.f32 %v2310, 0.1
    %v2327 = vmul.f32 %v2311, 0.1
    %v2328 = vmul.f32 %v2312, 0.1
    %v2329 = vmul.f32 %v2313, 0.1
    %v2330 = vmul.f32 %v2314, 0.1
    %v2331 = vmul.f32 %v2315, 0.1
    %v2332 = vmul.f32 %v2316, 0.1
    %v2333 = vmul.f32 %v2317, 0.1
    %v2334 = vmul.f32 %v2318, 0.1
    %v2335 = vmul.f32 %v2319, 0.1
    %v2336 = vadd.f32 %v1668, %v2320
    %v2337 = vadd.f32 %v1669, %v2321
    %v2338 = vadd.f32 %v1670, %v2322
    %v2339 = vadd.f32 %v1671, %v2323
    %v2340 = vadd.f32 %v1672, %v2324
    %v2341 = vadd.f32 %v1673, %v2325
    %v2342 = vadd.f32 %v1674, %v2326
    %v2343 = vadd.f32 %v1675, %v2327
    %v2344 = vadd.f32 %v1676, %v2328
    %v2345 = vadd.f32 %v1677, %v2329
    %v2346 = vadd.f32 %v1678, %v2330
    %v2347 = vadd.f32 %v1679, %v2331
    %v2348 = vadd.f32 %v1680, %v2332
    %v2349 = vadd.f32 %v1681, %v2333
    %v2350 = vadd.f32 %v1682, %v2334
    %v2351 = vadd.f32 %v1683, %v2335
    %v2352 = vmul.f32 %v2336, 0.1
    %v2353 = vmul.f32 %v2337, 0.1
    %v2354 = vmul.f32 %v2338, 0.1
    %v2355 = vmul.f32 %v2339, 0.1
    %v2356 = vmul.f32 %v2340, 0.1
    %v2357 = vmul.f32 %v2341, 0.1
    %v2358 = vmul.f32 %v2342, 0.1
    %v2359 = vmul.f32 %v2343, 0.1
    %v2360 = vmul.f32 %v2344, 0.1
    %v2361 = vmul.f32 %v2345, 0.1
    %v2362 = vmul.f32 %v2346, 0.1
    %v2363 = vmul.f32 %v2347, 0.1
    %v2364 = vmul.f32 %v2348, 0.1
    %v2365 = vmul.f32 %v2349, 0.1
    %v2366 = vmul.f32 %v2350, 0.1
    %v2367 = vmul.f32 %v2351, 0.1
    %v2368 = vadd.f32 %v1700, %v2352
    %v2369 = vadd.f32 %v1701, %v2353
    %v2370 = vadd.f32 %v1702, %v2354
    %v2371 = vadd.f32 %v1703, %v2355
    %v2372 = vadd.f32 %v1704, %v2356
    %v2373 = vadd.f32 %v1705, %v2357
    %v2374 = vadd.f32 %v1706, %v2358
    %v2375 = vadd.f32 %v1707, %v2359
    %v2376 = vadd.f32 %v1708, %v2360
    %v2377 = vadd.f32 %v1709, %v2361
    %v2378 = vadd.f32 %v1710, %v2362
    %v2379 = vadd.f32 %v1711, %v2363
    %v2380 = vadd.f32 %v1712, %v2364
    %v2381 = vadd.f32 %v1713, %v2365
    %v2382 = vadd.f32 %v1714, %v2366
    %v2383 = vadd.f32 %v1715, %v2367
    %v2384 = vmul.f32 %v1019, %v1828
    %v2385 = vmul.f32 %v1019, %v1829
    %v2386 = vmul.f32 %v1019, %v1830
    %v2387 = vmul.f32 %v1019, %v1831
    %v2388 = vmul.f32 %v1019, %v1832
    %v2389 = vmul.f32 %v1019, %v1833
    %v2390 = vmul.f32 %v1019, %v1834
    %v2391 = vmul.f32 %v1019, %v1835
    %v2392 = vmul.f32 %v1019, %v1836
    %v2393 = vmul.f32 %v1019, %v1837
    %v2394 = vmul.f32 %v1019, %v1838
    %v2395 = vmul.f32 %v1019, %v1839
    %v2396 = vmul.f32 %v1019, %v1840
    %v2397 = vmul.f32 %v1019, %v1841
    %v2398 = vmul.f32 %v1019, %v1842
    %v2399 = vmul.f32 %v1019, %v1843
    %v2400 = vadd.f32 %v2384, %v2217
    %v2401 = vadd.f32 %v2385, %v2219
    %v2402 = vadd.f32 %v2386, %v2222
    %v2403 = vadd.f32 %v2387, %v2224
    %v2404 = vadd.f32 %v2388, %v2227
    %v2405 = vadd.f32 %v2389, %v2229
    %v2406 = vadd.f32 %v2390, %v2232
    %v2407 = vadd.f32 %v2391, %v2234
    %v2408 = vadd.f32 %v2392, %v2237
    %v2409 = vadd.f32 %v2393, %v2239
    %v2410 = vadd.f32 %v2394, %v2242
    %v2411 = vadd.f32 %v2395, %v2244
    %v2412 = vadd.f32 %v2396, %v2247
    %v2413 = vadd.f32 %v2397, %v2249
    %v2414 = vadd.f32 %v2398, %v2252
    %v2415 = vadd.f32 %v2399, %v2254
    %v2416 = vadd.f32 %v2400, %v1039
    %v2417 = vadd.f32 %v2401, %v1039
    %v2418 = vadd.f32 %v2402, %v1039
    %v2419 = vadd.f32 %v2403, %v1039
    %v2420 = vadd.f32 %v2404, %v1039
    %v2421 = vadd.f32 %v2405, %v1039
    %v2422 = vadd.f32 %v2406, %v1039
    %v2423 = vadd.f32 %v2407, %v1039
    %v2424 = vadd.f32 %v2408, %v1039
    %v2425 = vadd.f32 %v2409, %v1039
    %v2426 = vadd.f32 %v2410, %v1039
    %v2427 = vadd.f32 %v2411, %v1039
    %v2428 = vadd.f32 %v2412, %v1039
    %v2429 = vadd.f32 %v2413, %v1039
    %v2430 = vadd.f32 %v2414, %v1039
    %v2431 = vadd.f32 %v2415, %v1039
    %v2432 = vmax.f32 %v2416, 0.0
    %v2433 = vmax.f32 %v2417, 0.0
    %v2434 = vmax.f32 %v2418, 0.0
    %v2435 = vmax.f32 %v2419, 0.0
    %v2436 = vmax.f32 %v2420, 0.0
    %v2437 = vmax.f32 %v2421, 0.0
    %v2438 = vmax.f32 %v2422, 0.0
    %v2439 = vmax.f32 %v2423, 0.0
    %v2440 = vmax.f32 %v2424, 0.0
    %v2441 = vmax.f32 %v2425, 0.0
    %v2442 = vmax.f32 %v2426, 0.0
    %v2443 = vmax.f32 %v2427, 0.0
    %v2444 = vmax.f32 %v2428, 0.0
    %v2445 = vmax.f32 %v2429, 0.0
    %v2446 = vmax.f32 %v2430, 0.0
    %v2447 = vmax.f32 %v2431, 0.0
    %v2448 = vmul.f32 %v2432, 0.1
    %v2449 = vmul.f32 %v2433, 0.1
    %v2450 = vmul.f32 %v2434, 0.1
    %v2451 = vmul.f32 %v2435, 0.1
    %v2452 = vmul.f32 %v2436, 0.1
    %v2453 = vmul.f32 %v2437, 0.1
    %v2454 = vmul.f32 %v2438, 0.1
    %v2455 = vmul.f32 %v2439, 0.1
    %v2456 = vmul.f32 %v2440, 0.1
    %v2457 = vmul.f32 %v2441, 0.1
    %v2458 = vmul.f32 %v2442, 0.1
    %v2459 = vmul.f32 %v2443, 0.1
    %v2460 = vmul.f32 %v2444, 0.1
    %v2461 = vmul.f32 %v2445, 0.1
    %v2462 = vmul.f32 %v2446, 0.1
    %v2463 = vmul.f32 %v2447, 0.1
    %v2464 = vadd.f32 %v1796, %v2448
    %v2465 = vadd.f32 %v1797, %v2449
    %v2466 = vadd.f32 %v1798, %v2450
    %v2467 = vadd.f32 %v1799, %v2451
    %v2468 = vadd.f32 %v1800, %v2452
    %v2469 = vadd.f32 %v1801, %v2453
    %v2470 = vadd.f32 %v1802, %v2454
    %v2471 = vadd.f32 %v1803, %v2455
    %v2472 = vadd.f32 %v1804, %v2456
    %v2473 = vadd.f32 %v1805, %v2457
    %v2474 = vadd.f32 %v1806, %v2458
    %v2475 = vadd.f32 %v1807, %v2459
    %v2476 = vadd.f32 %v1808, %v2460
    %v2477 = vadd.f32 %v1809, %v2461
    %v2478 = vadd.f32 %v1810, %v2462
    %v2479 = vadd.f32 %v1811, %v2463
    %v2480 = vmul.f32 %v2464, 0.1
    %v2481 = vmul.f32 %v2465, 0.1
    %v2482 = vmul.f32 %v2466, 0.1
    %v2483 = vmul.f32 %v2467, 0.1
    %v2484 = vmul.f32 %v2468, 0.1
    %v2485 = vmul.f32 %v2469, 0.1
    %v2486 = vmul.f32 %v2470, 0.1
    %v2487 = vmul.f32 %v2471, 0.1
    %v2488 = vmul.f32 %v2472, 0.1
    %v2489 = vmul.f32 %v2473, 0.1
    %v2490 = vmul.f32 %v2474, 0.1
    %v2491 = vmul.f32 %v2475, 0.1
    %v2492 = vmul.f32 %v2476, 0.1
    %v2493 = vmul.f32 %v2477, 0.1
    %v2494 = vmul.f32 %v2478, 0.1
    %v2495 = vmul.f32 %v2479, 0.1
    %v2496 = vadd.f32 %v1828, %v2480
    %v2497 = vadd.f32 %v1829, %v2481
    %v2498 = vadd.f32 %v1830, %v2482
    %v2499 = vadd.f32 %v1831, %v2483
    %v2500 = vadd.f32 %v1832, %v2484
    %v2501 = vadd.f32 %v1833, %v2485
    %v2502 = vadd.f32 %v1834, %v2486
    %v2503 = vadd.f32 %v1835, %v2487
    %v2504 = vadd.f32 %v1836, %v2488
    %v2505 = vadd.f32 %v1837, %v2489
    %v2506 = vadd.f32 %v1838, %v2490
    %v2507 = vadd.f32 %v1839, %v2491
    %v2508 = vadd.f32 %v1840, %v2492
    %v2509 = vadd.f32 %v1841, %v2493
    %v2510 = vadd.f32 %v1842, %v2494
    %v2511 = vadd.f32 %v1843, %v2495
    %v2512 = vpack.c.bf16 %v2369, %v2368
    %v2513 = vpack.c.bf16 %v2371, %v2370
    %v2514 = vpack.c.bf16 %v2373, %v2372
    %v2515 = vpack.c.bf16 %v2375, %v2374
    %v2516 = vpack.c.bf16 %v2377, %v2376
    %v2517 = vpack.c.bf16 %v2379, %v2378
    %v2518 = vpack.c.bf16 %v2381, %v2380
    %v2519 = vpack.c.bf16 %v2383, %v2382
    %2520 = vmatpush.bf16.msra.mxu0 %v1184
    %2521 = vmatpush.bf16.msra.mxu0 %v1183
    %2522 = vmatpush.bf16.msra.mxu0 %v1182
    %2523 = vmatpush.bf16.msra.mxu0 %v1181
    %2524 = vmatpush.bf16.msra.mxu0 %v1180
    %2525 = vmatpush.bf16.msra.mxu0 %v1179
    %2526 = vmatpush.bf16.msra.mxu0 %v1178
    %2527 = vmatpush.bf16.msra.mxu0 %v1177
    %2528 = vmatmul.bf16.gmra.mxu0 %v2512
    %v2529 = vpop.f32.mrf.mxu0
    %v2530 = vadd.f32 0.0, %v2529
    %v2531 = vpop.f32.mrf.mxu0
    %v2532 = vadd.f32 0.0, %v2531
    %2533 = vmatmul.bf16.gmra.mxu0 %v2513
    %v2534 = vpop.f32.mrf.mxu0
    %v2535 = vadd.f32 0.0, %v2534
    %v2536 = vpop.f32.mrf.mxu0
    %v2537 = vadd.f32 0.0, %v2536
    %2538 = vmatmul.bf16.gmra.mxu0 %v2514
    %v2539 = vpop.f32.mrf.mxu0
    %v2540 = vadd.f32 0.0, %v2539
    %v2541 = vpop.f32.mrf.mxu0
    %v2542 = vadd.f32 0.0, %v2541
    %2543 = vmatmul.bf16.gmra.mxu0 %v2515
    %v2544 = vpop.f32.mrf.mxu0
    %v2545 = vadd.f32 0.0, %v2544
    %v2546 = vpop.f32.mrf.mxu0
    %v2547 = vadd.f32 0.0, %v2546
    %2548 = vmatmul.bf16.gmra.mxu0 %v2516
    %v2549 = vpop.f32.mrf.mxu0
    %v2550 = vadd.f32 0.0, %v2549
    %v2551 = vpop.f32.mrf.mxu0
    %v2552 = vadd.f32 0.0, %v2551
    %2553 = vmatmul.bf16.gmra.mxu0 %v2517
    %v2554 = vpop.f32.mrf.mxu0
    %v2555 = vadd.f32 0.0, %v2554
    %v2556 = vpop.f32.mrf.mxu0
    %v2557 = vadd.f32 0.0, %v2556
    %2558 = vmatmul.bf16.gmra.mxu0 %v2518
    %v2559 = vpop.f32.mrf.mxu0
    %v2560 = vadd.f32 0.0, %v2559
    %v2561 = vpop.f32.mrf.mxu0
    %v2562 = vadd.f32 0.0, %v2561
    %2563 = vmatmul.bf16.gmra.mxu0 %v2519
    %v2564 = vpop.f32.mrf.mxu0
    %v2565 = vadd.f32 0.0, %v2564
    %v2566 = vpop.f32.mrf.mxu0
    %v2567 = vadd.f32 0.0, %v2566
    %2568 = vdwg.mxu0
    %v2569 = vmul.f32 %v1243, %v2013
    %v2570 = vmul.f32 %v1243, %v2014
    %v2571 = vmul.f32 %v1243, %v2015
    %v2572 = vmul.f32 %v1243, %v2016
    %v2573 = vmul.f32 %v1243, %v2017
    %v2574 = vmul.f32 %v1243, %v2018
    %v2575 = vmul.f32 %v1243, %v2019
    %v2576 = vmul.f32 %v1243, %v2020
    %v2577 = vmul.f32 %v1243, %v2021
    %v2578 = vmul.f32 %v1243, %v2022
    %v2579 = vmul.f32 %v1243, %v2023
    %v2580 = vmul.f32 %v1243, %v2024
    %v2581 = vmul.f32 %v1243, %v2025
    %v2582 = vmul.f32 %v1243, %v2026
    %v2583 = vmul.f32 %v1243, %v2027
    %v2584 = vmul.f32 %v1243, %v2028
    %v2585 = vadd.f32 %v2569, %v2530
    %v2586 = vadd.f32 %v2570, %v2532
    %v2587 = vadd.f32 %v2571, %v2535
    %v2588 = vadd.f32 %v2572, %v2537
    %v2589 = vadd.f32 %v2573, %v2540
    %v2590 = vadd.f32 %v2574, %v2542
    %v2591 = vadd.f32 %v2575, %v2545
    %v2592 = vadd.f32 %v2576, %v2547
    %v2593 = vadd.f32 %v2577, %v2550
    %v2594 = vadd.f32 %v2578, %v2552
    %v2595 = vadd.f32 %v2579, %v2555
    %v2596 = vadd.f32 %v2580, %v2557
    %v2597 = vadd.f32 %v2581, %v2560
    %v2598 = vadd.f32 %v2582, %v2562
    %v2599 = vadd.f32 %v2583, %v2565
    %v2600 = vadd.f32 %v2584, %v2567
    %v2601 = vadd.f32 %v2585, %v1263
    %v2602 = vadd.f32 %v2586, %v1263
    %v2603 = vadd.f32 %v2587, %v1263
    %v2604 = vadd.f32 %v2588, %v1263
    %v2605 = vadd.f32 %v2589, %v1263
    %v2606 = vadd.f32 %v2590, %v1263
    %v2607 = vadd.f32 %v2591, %v1263
    %v2608 = vadd.f32 %v2592, %v1263
    %v2609 = vadd.f32 %v2593, %v1263
    %v2610 = vadd.f32 %v2594, %v1263
    %v2611 = vadd.f32 %v2595, %v1263
    %v2612 = vadd.f32 %v2596, %v1263
    %v2613 = vadd.f32 %v2597, %v1263
    %v2614 = vadd.f32 %v2598, %v1263
    %v2615 = vadd.f32 %v2599, %v1263
    %v2616 = vadd.f32 %v2600, %v1263
    %v2617 = vmax.f32 %v2601, 0.0
    %v2618 = vmax.f32 %v2602, 0.0
    %v2619 = vmax.f32 %v2603, 0.0
    %v2620 = vmax.f32 %v2604, 0.0
    %v2621 = vmax.f32 %v2605, 0.0
    %v2622 = vmax.f32 %v2606, 0.0
    %v2623 = vmax.f32 %v2607, 0.0
    %v2624 = vmax.f32 %v2608, 0.0
    %v2625 = vmax.f32 %v2609, 0.0
    %v2626 = vmax.f32 %v2610, 0.0
    %v2627 = vmax.f32 %v2611, 0.0
    %v2628 = vmax.f32 %v2612, 0.0
    %v2629 = vmax.f32 %v2613, 0.0
    %v2630 = vmax.f32 %v2614, 0.0
    %v2631 = vmax.f32 %v2615, 0.0
    %v2632 = vmax.f32 %v2616, 0.0
    %v2633 = vmul.f32 %v2617, 0.1
    %v2634 = vmul.f32 %v2618, 0.1
    %v2635 = vmul.f32 %v2619, 0.1
    %v2636 = vmul.f32 %v2620, 0.1
    %v2637 = vmul.f32 %v2621, 0.1
    %v2638 = vmul.f32 %v2622, 0.1
    %v2639 = vmul.f32 %v2623, 0.1
    %v2640 = vmul.f32 %v2624, 0.1
    %v2641 = vmul.f32 %v2625, 0.1
    %v2642 = vmul.f32 %v2626, 0.1
    %v2643 = vmul.f32 %v2627, 0.1
    %v2644 = vmul.f32 %v2628, 0.1
    %v2645 = vmul.f32 %v2629, 0.1
    %v2646 = vmul.f32 %v2630, 0.1
    %v2647 = vmul.f32 %v2631, 0.1
    %v2648 = vmul.f32 %v2632, 0.1
    %v2649 = vadd.f32 %v1981, %v2633
    %v2650 = vadd.f32 %v1982, %v2634
    %v2651 = vadd.f32 %v1983, %v2635
    %v2652 = vadd.f32 %v1984, %v2636
    %v2653 = vadd.f32 %v1985, %v2637
    %v2654 = vadd.f32 %v1986, %v2638
    %v2655 = vadd.f32 %v1987, %v2639
    %v2656 = vadd.f32 %v1988, %v2640
    %v2657 = vadd.f32 %v1989, %v2641
    %v2658 = vadd.f32 %v1990, %v2642
    %v2659 = vadd.f32 %v1991, %v2643
    %v2660 = vadd.f32 %v1992, %v2644
    %v2661 = vadd.f32 %v1993, %v2645
    %v2662 = vadd.f32 %v1994, %v2646
    %v2663 = vadd.f32 %v1995, %v2647
    %v2664 = vadd.f32 %v1996, %v2648
    %v2665 = vmul.f32 %v2649, 0.1
    %v2666 = vmul.f32 %v2650, 0.1
    %v2667 = vmul.f32 %v2651, 0.1
    %v2668 = vmul.f32 %v2652, 0.1
    %v2669 = vmul.f32 %v2653, 0.1
    %v2670 = vmul.f32 %v2654, 0.1
    %v2671 = vmul.f32 %v2655, 0.1
    %v2672 = vmul.f32 %v2656, 0.1
    %v2673 = vmul.f32 %v2657, 0.1
    %v2674 = vmul.f32 %v2658, 0.1
    %v2675 = vmul.f32 %v2659, 0.1
    %v2676 = vmul.f32 %v2660, 0.1
    %v2677 = vmul.f32 %v2661, 0.1
    %v2678 = vmul.f32 %v2662, 0.1
    %v2679 = vmul.f32 %v2663, 0.1
    %v2680 = vmul.f32 %v2664, 0.1
    %v2681 = vadd.f32 %v2013, %v2665
    %v2682 = vadd.f32 %v2014, %v2666
    %v2683 = vadd.f32 %v2015, %v2667
    %v2684 = vadd.f32 %v2016, %v2668
    %v2685 = vadd.f32 %v2017, %v2669
    %v2686 = vadd.f32 %v2018, %v2670
    %v2687 = vadd.f32 %v2019, %v2671
    %v2688 = vadd.f32 %v2020, %v2672
    %v2689 = vadd.f32 %v2021, %v2673
    %v2690 = vadd.f32 %v2022, %v2674
    %v2691 = vadd.f32 %v2023, %v2675
    %v2692 = vadd.f32 %v2024, %v2676
    %v2693 = vadd.f32 %v2025, %v2677
    %v2694 = vadd.f32 %v2026, %v2678
    %v2695 = vadd.f32 %v2027, %v2679
    %v2696 = vadd.f32 %v2028, %v2680
    %v2697 = vmul.f32 %v2111, 0.1
    %v2698 = vmul.f32 %v2113, 0.1
    %v2699 = vmul.f32 %v2116, 0.1
    %v2700 = vmul.f32 %v2118, 0.1
    %v2701 = vmul.f32 %v2121, 0.1
    %v2702 = vmul.f32 %v2123, 0.1
    %v2703 = vmul.f32 %v2126, 0.1
    %v2704 = vmul.f32 %v2128, 0.1
    %v2705 = vmul.f32 %v2131, 0.1
    %v2706 = vmul.f32 %v2133, 0.1
    %v2707 = vmul.f32 %v2136, 0.1
    %v2708 = vmul.f32 %v2138, 0.1
    %v2709 = vmul.f32 %v2141, 0.1
    %v2710 = vmul.f32 %v2143, 0.1
    %v2711 = vmul.f32 %v2146, 0.1
    %v2712 = vmul.f32 %v2148, 0.1
    %v2713 = vsub.f32 %v2045, %v2697
    %v2714 = vsub.f32 %v2046, %v2698
    %v2715 = vsub.f32 %v2047, %v2699
    %v2716 = vsub.f32 %v2048, %v2700
    %v2717 = vsub.f32 %v2049, %v2701
    %v2718 = vsub.f32 %v2050, %v2702
    %v2719 = vsub.f32 %v2051, %v2703
    %v2720 = vsub.f32 %v2052, %v2704
    %v2721 = vsub.f32 %v2053, %v2705
    %v2722 = vsub.f32 %v2054, %v2706
    %v2723 = vsub.f32 %v2055, %v2707
    %v2724 = vsub.f32 %v2056, %v2708
    %v2725 = vsub.f32 %v2057, %v2709
    %v2726 = vsub.f32 %v2058, %v2710
    %v2727 = vsub.f32 %v2059, %v2711
    %v2728 = vsub.f32 %v2060, %v2712
    %v2729 = vmul.f32 %v2713, 0.1
    %v2730 = vmul.f32 %v2714, 0.1
    %v2731 = vmul.f32 %v2715, 0.1
    %v2732 = vmul.f32 %v2716, 0.1
    %v2733 = vmul.f32 %v2717, 0.1
    %v2734 = vmul.f32 %v2718, 0.1
    %v2735 = vmul.f32 %v2719, 0.1
    %v2736 = vmul.f32 %v2720, 0.1
    %v2737 = vmul.f32 %v2721, 0.1
    %v2738 = vmul.f32 %v2722, 0.1
    %v2739 = vmul.f32 %v2723, 0.1
    %v2740 = vmul.f32 %v2724, 0.1
    %v2741 = vmul.f32 %v2725, 0.1
    %v2742 = vmul.f32 %v2726, 0.1
    %v2743 = vmul.f32 %v2727, 0.1
    %v2744 = vmul.f32 %v2728, 0.1
    %v2745 = vadd.f32 %v2077, %v2729
    %v2746 = vadd.f32 %v2078, %v2730
    %v2747 = vadd.f32 %v2079, %v2731
    %v2748 = vadd.f32 %v2080, %v2732
    %v2749 = vadd.f32 %v2081, %v2733
    %v2750 = vadd.f32 %v2082, %v2734
    %v2751 = vadd.f32 %v2083, %v2735
    %v2752 = vadd.f32 %v2084, %v2736
    %v2753 = vadd.f32 %v2085, %v2737
    %v2754 = vadd.f32 %v2086, %v2738
    %v2755 = vadd.f32 %v2087, %v2739
    %v2756 = vadd.f32 %v2088, %v2740
    %v2757 = vadd.f32 %v2089, %v2741
    %v2758 = vadd.f32 %v2090, %v2742
    %v2759 = vadd.f32 %v2091, %v2743
    %v2760 = vadd.f32 %v2092, %v2744
    %v2761 = vpack.c.bf16 %v2746, %v2745
    %v2762 = vpack.c.bf16 %v2748, %v2747
    %v2763 = vpack.c.bf16 %v2750, %v2749
    %v2764 = vpack.c.bf16 %v2752, %v2751
    %v2765 = vpack.c.bf16 %v2754, %v2753
    %v2766 = vpack.c.bf16 %v2756, %v2755
    %v2767 = vpack.c.bf16 %v2758, %v2757
    %v2768 = vpack.c.bf16 %v2760, %v2759
    %2769 = vmatpush.bf16.msra.mxu0 %v2768
    %2770 = vmatpush.bf16.msra.mxu0 %v2767
    %2771 = vmatpush.bf16.msra.mxu0 %v2766
    %2772 = vmatpush.bf16.msra.mxu0 %v2765
    %2773 = vmatpush.bf16.msra.mxu0 %v2764
    %2774 = vmatpush.bf16.msra.mxu0 %v2763
    %2775 = vmatpush.bf16.msra.mxu0 %v2762
    %2776 = vmatpush.bf16.msra.mxu0 %v2761
    %2777 = vmatmul.bf16.gmra.mxu0 %v519
    %v2778 = vpop.f32.mrf.mxu0
    %v2779 = vadd.f32 0.0, %v2778
    %v2780 = vpop.f32.mrf.mxu0
    %v2781 = vadd.f32 0.0, %v2780
    %2782 = vmatmul.bf16.gmra.mxu0 %v520
    %v2783 = vpop.f32.mrf.mxu0
    %v2784 = vadd.f32 0.0, %v2783
    %v2785 = vpop.f32.mrf.mxu0
    %v2786 = vadd.f32 0.0, %v2785
    %2787 = vmatmul.bf16.gmra.mxu0 %v521
    %v2788 = vpop.f32.mrf.mxu0
    %v2789 = vadd.f32 0.0, %v2788
    %v2790 = vpop.f32.mrf.mxu0
    %v2791 = vadd.f32 0.0, %v2790
    %2792 = vmatmul.bf16.gmra.mxu0 %v522
    %v2793 = vpop.f32.mrf.mxu0
    %v2794 = vadd.f32 0.0, %v2793
    %v2795 = vpop.f32.mrf.mxu0
    %v2796 = vadd.f32 0.0, %v2795
    %2797 = vmatmul.bf16.gmra.mxu0 %v523
    %v2798 = vpop.f32.mrf.mxu0
    %v2799 = vadd.f32 0.0, %v2798
    %v2800 = vpop.f32.mrf.mxu0
    %v2801 = vadd.f32 0.0, %v2800
    %2802 = vmatmul.bf16.gmra.mxu0 %v524
    %v2803 = vpop.f32.mrf.mxu0
    %v2804 = vadd.f32 0.0, %v2803
    %v2805 = vpop.f32.mrf.mxu0
    %v2806 = vadd.f32 0.0, %v2805
    %2807 = vmatmul.bf16.gmra.mxu0 %v525
    %v2808 = vpop.f32.mrf.mxu0
    %v2809 = vadd.f32 0.0, %v2808
    %v2810 = vpop.f32.mrf.mxu0
    %v2811 = vadd.f32 0.0, %v2810
    %2812 = vmatmul.bf16.gmra.mxu0 %v526
    %v2813 = vpop.f32.mrf.mxu0
    %v2814 = vadd.f32 0.0, %v2813
    %v2815 = vpop.f32.mrf.mxu0
    %v2816 = vadd.f32 0.0, %v2815
    %2817 = vdwg.mxu0
    %2818 = vmatpush.bf16.msra.mxu0 %v744
    %2819 = vmatpush.bf16.msra.mxu0 %v743
    %2820 = vmatpush.bf16.msra.mxu0 %v742
    %2821 = vmatpush.bf16.msra.mxu0 %v741
    %2822 = vmatpush.bf16.msra.mxu0 %v740
    %2823 = vmatpush.bf16.msra.mxu0 %v739
    %2824 = vmatpush.bf16.msra.mxu0 %v738
    %2825 = vmatpush.bf16.msra.mxu0 %v737
    %2826 = vmatmul.bf16.gmra.mxu0 %v2761
    %v2827 = vpop.f32.mrf.mxu0
    %v2828 = vadd.f32 0.0, %v2827
    %v2829 = vpop.f32.mrf.mxu0
    %v2830 = vadd.f32 0.0, %v2829
    %2831 = vmatmul.bf16.gmra.mxu0 %v2762
    %v2832 = vpop.f32.mrf.mxu0
    %v2833 = vadd.f32 0.0, %v2832
    %v2834 = vpop.f32.mrf.mxu0
    %v2835 = vadd.f32 0.0, %v2834
    %2836 = vmatmul.bf16.gmra.mxu0 %v2763
    %v2837 = vpop.f32.mrf.mxu0
    %v2838 = vadd.f32 0.0, %v2837
    %v2839 = vpop.f32.mrf.mxu0
    %v2840 = vadd.f32 0.0, %v2839
    %2841 = vmatmul.bf16.gmra.mxu0 %v2764
    %v2842 = vpop.f32.mrf.mxu0
    %v2843 = vadd.f32 0.0, %v2842
    %v2844 = vpop.f32.mrf.mxu0
    %v2845 = vadd.f32 0.0, %v2844
    %2846 = vmatmul.bf16.gmra.mxu0 %v2765
    %v2847 = vpop.f32.mrf.mxu0
    %v2848 = vadd.f32 0.0, %v2847
    %v2849 = vpop.f32.mrf.mxu0
    %v2850 = vadd.f32 0.0, %v2849
    %2851 = vmatmul.bf16.gmra.mxu0 %v2766
    %v2852 = vpop.f32.mrf.mxu0
    %v2853 = vadd.f32 0.0, %v2852
    %v2854 = vpop.f32.mrf.mxu0
    %v2855 = vadd.f32 0.0, %v2854
    %2856 = vmatmul.bf16.gmra.mxu0 %v2767
    %v2857 = vpop.f32.mrf.mxu0
    %v2858 = vadd.f32 0.0, %v2857
    %v2859 = vpop.f32.mrf.mxu0
    %v2860 = vadd.f32 0.0, %v2859
    %2861 = vmatmul.bf16.gmra.mxu0 %v2768
    %v2862 = vpop.f32.mrf.mxu0
    %v2863 = vadd.f32 0.0, %v2862
    %v2864 = vpop.f32.mrf.mxu0
    %v2865 = vadd.f32 0.0, %v2864
    %2866 = vdwg.mxu0
    %v2867 = vpack.c.bf16 %v2682, %v2681
    %v2868 = vpack.c.bf16 %v2684, %v2683
    %v2869 = vpack.c.bf16 %v2686, %v2685
    %v2870 = vpack.c.bf16 %v2688, %v2687
    %v2871 = vpack.c.bf16 %v2690, %v2689
    %v2872 = vpack.c.bf16 %v2692, %v2691
    %v2873 = vpack.c.bf16 %v2694, %v2693
    %v2874 = vpack.c.bf16 %v2696, %v2695
    %2875 = vmatpush.bf16.msra.mxu0 %v841
    %2876 = vmatpush.bf16.msra.mxu0 %v840
    %2877 = vmatpush.bf16.msra.mxu0 %v839
    %2878 = vmatpush.bf16.msra.mxu0 %v838
    %2879 = vmatpush.bf16.msra.mxu0 %v837
    %2880 = vmatpush.bf16.msra.mxu0 %v836
    %2881 = vmatpush.bf16.msra.mxu0 %v835
    %2882 = vmatpush.bf16.msra.mxu0 %v834
    %2883 = vmatmul.bf16.gmra.mxu0 %v2867
    %v2884 = vpop.f32.mrf.mxu0
    %v2885 = vadd.f32 0.0, %v2884
    %v2886 = vpop.f32.mrf.mxu0
    %v2887 = vadd.f32 0.0, %v2886
    %2888 = vmatmul.bf16.gmra.mxu0 %v2868
    %v2889 = vpop.f32.mrf.mxu0
    %v2890 = vadd.f32 0.0, %v2889
    %v2891 = vpop.f32.mrf.mxu0
    %v2892 = vadd.f32 0.0, %v2891
    %2893 = vmatmul.bf16.gmra.mxu0 %v2869
    %v2894 = vpop.f32.mrf.mxu0
    %v2895 = vadd.f32 0.0, %v2894
    %v2896 = vpop.f32.mrf.mxu0
    %v2897 = vadd.f32 0.0, %v2896
    %2898 = vmatmul.bf16.gmra.mxu0 %v2870
    %v2899 = vpop.f32.mrf.mxu0
    %v2900 = vadd.f32 0.0, %v2899
    %v2901 = vpop.f32.mrf.mxu0
    %v2902 = vadd.f32 0.0, %v2901
    %2903 = vmatmul.bf16.gmra.mxu0 %v2871
    %v2904 = vpop.f32.mrf.mxu0
    %v2905 = vadd.f32 0.0, %v2904
    %v2906 = vpop.f32.mrf.mxu0
    %v2907 = vadd.f32 0.0, %v2906
    %2908 = vmatmul.bf16.gmra.mxu0 %v2872
    %v2909 = vpop.f32.mrf.mxu0
    %v2910 = vadd.f32 0.0, %v2909
    %v2911 = vpop.f32.mrf.mxu0
    %v2912 = vadd.f32 0.0, %v2911
    %2913 = vmatmul.bf16.gmra.mxu0 %v2873
    %v2914 = vpop.f32.mrf.mxu0
    %v2915 = vadd.f32 0.0, %v2914
    %v2916 = vpop.f32.mrf.mxu0
    %v2917 = vadd.f32 0.0, %v2916
    %2918 = vmatmul.bf16.gmra.mxu0 %v2874
    %v2919 = vpop.f32.mrf.mxu0
    %v2920 = vadd.f32 0.0, %v2919
    %v2921 = vpop.f32.mrf.mxu0
    %v2922 = vadd.f32 0.0, %v2921
    %2923 = vdwg.mxu0
    %v2924 = vmul.f32 %v900, %v2368
    %v2925 = vmul.f32 %v900, %v2369
    %v2926 = vmul.f32 %v900, %v2370
    %v2927 = vmul.f32 %v900, %v2371
    %v2928 = vmul.f32 %v900, %v2372
    %v2929 = vmul.f32 %v900, %v2373
    %v2930 = vmul.f32 %v900, %v2374
    %v2931 = vmul.f32 %v900, %v2375
    %v2932 = vmul.f32 %v900, %v2376
    %v2933 = vmul.f32 %v900, %v2377
    %v2934 = vmul.f32 %v900, %v2378
    %v2935 = vmul.f32 %v900, %v2379
    %v2936 = vmul.f32 %v900, %v2380
    %v2937 = vmul.f32 %v900, %v2381
    %v2938 = vmul.f32 %v900, %v2382
    %v2939 = vmul.f32 %v900, %v2383
    %v2940 = vadd.f32 %v2924, %v2828
    %v2941 = vadd.f32 %v2925, %v2830
    %v2942 = vadd.f32 %v2926, %v2833
    %v2943 = vadd.f32 %v2927, %v2835
    %v2944 = vadd.f32 %v2928, %v2838
    %v2945 = vadd.f32 %v2929, %v2840
    %v2946 = vadd.f32 %v2930, %v2843
    %v2947 = vadd.f32 %v2931, %v2845
    %v2948 = vadd.f32 %v2932, %v2848
    %v2949 = vadd.f32 %v2933, %v2850
    %v2950 = vadd.f32 %v2934, %v2853
    %v2951 = vadd.f32 %v2935, %v2855
    %v2952 = vadd.f32 %v2936, %v2858
    %v2953 = vadd.f32 %v2937, %v2860
    %v2954 = vadd.f32 %v2938, %v2863
    %v2955 = vadd.f32 %v2939, %v2865
    %v2956 = vadd.f32 %v2940, %v920
    %v2957 = vadd.f32 %v2941, %v920
    %v2958 = vadd.f32 %v2942, %v920
    %v2959 = vadd.f32 %v2943, %v920
    %v2960 = vadd.f32 %v2944, %v920
    %v2961 = vadd.f32 %v2945, %v920
    %v2962 = vadd.f32 %v2946, %v920
    %v2963 = vadd.f32 %v2947, %v920
    %v2964 = vadd.f32 %v2948, %v920
    %v2965 = vadd.f32 %v2949, %v920
    %v2966 = vadd.f32 %v2950, %v920
    %v2967 = vadd.f32 %v2951, %v920
    %v2968 = vadd.f32 %v2952, %v920
    %v2969 = vadd.f32 %v2953, %v920
    %v2970 = vadd.f32 %v2954, %v920
    %v2971 = vadd.f32 %v2955, %v920
    %v2972 = vmax.f32 %v2956, 0.0
    %v2973 = vmax.f32 %v2957, 0.0
    %v2974 = vmax.f32 %v2958, 0.0
    %v2975 = vmax.f32 %v2959, 0.0
    %v2976 = vmax.f32 %v2960, 0.0
    %v2977 = vmax.f32 %v2961, 0.0
    %v2978 = vmax.f32 %v2962, 0.0
    %v2979 = vmax.f32 %v2963, 0.0
    %v2980 = vmax.f32 %v2964, 0.0
    %v2981 = vmax.f32 %v2965, 0.0
    %v2982 = vmax.f32 %v2966, 0.0
    %v2983 = vmax.f32 %v2967, 0.0
    %v2984 = vmax.f32 %v2968, 0.0
    %v2985 = vmax.f32 %v2969, 0.0
    %v2986 = vmax.f32 %v2970, 0.0
    %v2987 = vmax.f32 %v2971, 0.0
    %v2988 = vmul.f32 %v2972, 0.1
    %v2989 = vmul.f32 %v2973, 0.1
    %v2990 = vmul.f32 %v2974, 0.1
    %v2991 = vmul.f32 %v2975, 0.1
    %v2992 = vmul.f32 %v2976, 0.1
    %v2993 = vmul.f32 %v2977, 0.1
    %v2994 = vmul.f32 %v2978, 0.1
    %v2995 = vmul.f32 %v2979, 0.1
    %v2996 = vmul.f32 %v2980, 0.1
    %v2997 = vmul.f32 %v2981, 0.1
    %v2998 = vmul.f32 %v2982, 0.1
    %v2999 = vmul.f32 %v2983, 0.1
    %v3000 = vmul.f32 %v2984, 0.1
    %v3001 = vmul.f32 %v2985, 0.1
    %v3002 = vmul.f32 %v2986, 0.1
    %v3003 = vmul.f32 %v2987, 0.1
    %v3004 = vadd.f32 %v2336, %v2988
    %v3005 = vadd.f32 %v2337, %v2989
    %v3006 = vadd.f32 %v2338, %v2990
    %v3007 = vadd.f32 %v2339, %v2991
    %v3008 = vadd.f32 %v2340, %v2992
    %v3009 = vadd.f32 %v2341, %v2993
    %v3010 = vadd.f32 %v2342, %v2994
    %v3011 = vadd.f32 %v2343, %v2995
    %v3012 = vadd.f32 %v2344, %v2996
    %v3013 = vadd.f32 %v2345, %v2997
    %v3014 = vadd.f32 %v2346, %v2998
    %v3015 = vadd.f32 %v2347, %v2999
    %v3016 = vadd.f32 %v2348, %v3000
    %v3017 = vadd.f32 %v2349, %v3001
    %v3018 = vadd.f32 %v2350, %v3002
    %v3019 = vadd.f32 %v2351, %v3003
    %v3020 = vmul.f32 %v3004, 0.1
    %v3021 = vmul.f32 %v3005, 0.1
    %v3022 = vmul.f32 %v3006, 0.1
    %v3023 = vmul.f32 %v3007, 0.1
    %v3024 = vmul.f32 %v3008, 0.1
    %v3025 = vmul.f32 %v3009, 0.1
    %v3026 = vmul.f32 %v3010, 0.1
    %v3027 = vmul.f32 %v3011, 0.1
    %v3028 = vmul.f32 %v3012, 0.1
    %v3029 = vmul.f32 %v3013, 0.1
    %v3030 = vmul.f32 %v3014, 0.1
    %v3031 = vmul.f32 %v3015, 0.1
    %v3032 = vmul.f32 %v3016, 0.1
    %v3033 = vmul.f32 %v3017, 0.1
    %v3034 = vmul.f32 %v3018, 0.1
    %v3035 = vmul.f32 %v3019, 0.1
    %v3036 = vadd.f32 %v2368, %v3020
    %v3037 = vadd.f32 %v2369, %v3021
    %v3038 = vadd.f32 %v2370, %v3022
    %v3039 = vadd.f32 %v2371, %v3023
    %v3040 = vadd.f32 %v2372, %v3024
    %v3041 = vadd.f32 %v2373, %v3025
    %v3042 = vadd.f32 %v2374, %v3026
    %v3043 = vadd.f32 %v2375, %v3027
    %v3044 = vadd.f32 %v2376, %v3028
    %v3045 = vadd.f32 %v2377, %v3029
    %v3046 = vadd.f32 %v2378, %v3030
    %v3047 = vadd.f32 %v2379, %v3031
    %v3048 = vadd.f32 %v2380, %v3032
    %v3049 = vadd.f32 %v2381, %v3033
    %v3050 = vadd.f32 %v2382, %v3034
    %v3051 = vadd.f32 %v2383, %v3035
    %v3052 = vmul.f32 %v1019, %v2496
    %v3053 = vmul.f32 %v1019, %v2497
    %v3054 = vmul.f32 %v1019, %v2498
    %v3055 = vmul.f32 %v1019, %v2499
    %v3056 = vmul.f32 %v1019, %v2500
    %v3057 = vmul.f32 %v1019, %v2501
    %v3058 = vmul.f32 %v1019, %v2502
    %v3059 = vmul.f32 %v1019, %v2503
    %v3060 = vmul.f32 %v1019, %v2504
    %v3061 = vmul.f32 %v1019, %v2505
    %v3062 = vmul.f32 %v1019, %v2506
    %v3063 = vmul.f32 %v1019, %v2507
    %v3064 = vmul.f32 %v1019, %v2508
    %v3065 = vmul.f32 %v1019, %v2509
    %v3066 = vmul.f32 %v1019, %v2510
    %v3067 = vmul.f32 %v1019, %v2511
    %v3068 = vadd.f32 %v3052, %v2885
    %v3069 = vadd.f32 %v3053, %v2887
    %v3070 = vadd.f32 %v3054, %v2890
    %v3071 = vadd.f32 %v3055, %v2892
    %v3072 = vadd.f32 %v3056, %v2895
    %v3073 = vadd.f32 %v3057, %v2897
    %v3074 = vadd.f32 %v3058, %v2900
    %v3075 = vadd.f32 %v3059, %v2902
    %v3076 = vadd.f32 %v3060, %v2905
    %v3077 = vadd.f32 %v3061, %v2907
    %v3078 = vadd.f32 %v3062, %v2910
    %v3079 = vadd.f32 %v3063, %v2912
    %v3080 = vadd.f32 %v3064, %v2915
    %v3081 = vadd.f32 %v3065, %v2917
    %v3082 = vadd.f32 %v3066, %v2920
    %v3083 = vadd.f32 %v3067, %v2922
    %v3084 = vadd.f32 %v3068, %v1039
    %v3085 = vadd.f32 %v3069, %v1039
    %v3086 = vadd.f32 %v3070, %v1039
    %v3087 = vadd.f32 %v3071, %v1039
    %v3088 = vadd.f32 %v3072, %v1039
    %v3089 = vadd.f32 %v3073, %v1039
    %v3090 = vadd.f32 %v3074, %v1039
    %v3091 = vadd.f32 %v3075, %v1039
    %v3092 = vadd.f32 %v3076, %v1039
    %v3093 = vadd.f32 %v3077, %v1039
    %v3094 = vadd.f32 %v3078, %v1039
    %v3095 = vadd.f32 %v3079, %v1039
    %v3096 = vadd.f32 %v3080, %v1039
    %v3097 = vadd.f32 %v3081, %v1039
    %v3098 = vadd.f32 %v3082, %v1039
    %v3099 = vadd.f32 %v3083, %v1039
    %v3100 = vmax.f32 %v3084, 0.0
    %v3101 = vmax.f32 %v3085, 0.0
    %v3102 = vmax.f32 %v3086, 0.0
    %v3103 = vmax.f32 %v3087, 0.0
    %v3104 = vmax.f32 %v3088, 0.0
    %v3105 = vmax.f32 %v3089, 0.0
    %v3106 = vmax.f32 %v3090, 0.0
    %v3107 = vmax.f32 %v3091, 0.0
    %v3108 = vmax.f32 %v3092, 0.0
    %v3109 = vmax.f32 %v3093, 0.0
    %v3110 = vmax.f32 %v3094, 0.0
    %v3111 = vmax.f32 %v3095, 0.0
    %v3112 = vmax.f32 %v3096, 0.0
    %v3113 = vmax.f32 %v3097, 0.0
    %v3114 = vmax.f32 %v3098, 0.0
    %v3115 = vmax.f32 %v3099, 0.0
    %v3116 = vmul.f32 %v3100, 0.1
    %v3117 = vmul.f32 %v3101, 0.1
    %v3118 = vmul.f32 %v3102, 0.1
    %v3119 = vmul.f32 %v3103, 0.1
    %v3120 = vmul.f32 %v3104, 0.1
    %v3121 = vmul.f32 %v3105, 0.1
    %v3122 = vmul.f32 %v3106, 0.1
    %v3123 = vmul.f32 %v3107, 0.1
    %v3124 = vmul.f32 %v3108, 0.1
    %v3125 = vmul.f32 %v3109, 0.1
    %v3126 = vmul.f32 %v3110, 0.1
    %v3127 = vmul.f32 %v3111, 0.1
    %v3128 = vmul.f32 %v3112, 0.1
    %v3129 = vmul.f32 %v3113, 0.1
    %v3130 = vmul.f32 %v3114, 0.1
    %v3131 = vmul.f32 %v3115, 0.1
    %v3132 = vadd.f32 %v2464, %v3116
    %v3133 = vadd.f32 %v2465, %v3117
    %v3134 = vadd.f32 %v2466, %v3118
    %v3135 = vadd.f32 %v2467, %v3119
    %v3136 = vadd.f32 %v2468, %v3120
    %v3137 = vadd.f32 %v2469, %v3121
    %v3138 = vadd.f32 %v2470, %v3122
    %v3139 = vadd.f32 %v2471, %v3123
    %v3140 = vadd.f32 %v2472, %v3124
    %v3141 = vadd.f32 %v2473, %v3125
    %v3142 = vadd.f32 %v2474, %v3126
    %v3143 = vadd.f32 %v2475, %v3127
    %v3144 = vadd.f32 %v2476, %v3128
    %v3145 = vadd.f32 %v2477, %v3129
    %v3146 = vadd.f32 %v2478, %v3130
    %v3147 = vadd.f32 %v2479, %v3131
    %v3148 = vmul.f32 %v3132, 0.1
    %v3149 = vmul.f32 %v3133, 0.1
    %v3150 = vmul.f32 %v3134, 0.1
    %v3151 = vmul.f32 %v3135, 0.1
    %v3152 = vmul.f32 %v3136, 0.1
    %v3153 = vmul.f32 %v3137, 0.1
    %v3154 = vmul.f32 %v3138, 0.1
    %v3155 = vmul.f32 %v3139, 0.1
    %v3156 = vmul.f32 %v3140, 0.1
    %v3157 = vmul.f32 %v3141, 0.1
    %v3158 = vmul.f32 %v3142, 0.1
    %v3159 = vmul.f32 %v3143, 0.1
    %v3160 = vmul.f32 %v3144, 0.1
    %v3161 = vmul.f32 %v3145, 0.1
    %v3162 = vmul.f32 %v3146, 0.1
    %v3163 = vmul.f32 %v3147, 0.1
    %v3164 = vadd.f32 %v2496, %v3148
    %v3165 = vadd.f32 %v2497, %v3149
    %v3166 = vadd.f32 %v2498, %v3150
    %v3167 = vadd.f32 %v2499, %v3151
    %v3168 = vadd.f32 %v2500, %v3152
    %v3169 = vadd.f32 %v2501, %v3153
    %v3170 = vadd.f32 %v2502, %v3154
    %v3171 = vadd.f32 %v2503, %v3155
    %v3172 = vadd.f32 %v2504, %v3156
    %v3173 = vadd.f32 %v2505, %v3157
    %v3174 = vadd.f32 %v2506, %v3158
    %v3175 = vadd.f32 %v2507, %v3159
    %v3176 = vadd.f32 %v2508, %v3160
    %v3177 = vadd.f32 %v2509, %v3161
    %v3178 = vadd.f32 %v2510, %v3162
    %v3179 = vadd.f32 %v2511, %v3163
    %v3180 = vpack.c.bf16 %v3037, %v3036
    %v3181 = vpack.c.bf16 %v3039, %v3038
    %v3182 = vpack.c.bf16 %v3041, %v3040
    %v3183 = vpack.c.bf16 %v3043, %v3042
    %v3184 = vpack.c.bf16 %v3045, %v3044
    %v3185 = vpack.c.bf16 %v3047, %v3046
    %v3186 = vpack.c.bf16 %v3049, %v3048
    %v3187 = vpack.c.bf16 %v3051, %v3050
    %3188 = vmatpush.bf16.msra.mxu0 %v1184
    %3189 = vmatpush.bf16.msra.mxu0 %v1183
    %3190 = vmatpush.bf16.msra.mxu0 %v1182
    %3191 = vmatpush.bf16.msra.mxu0 %v1181
    %3192 = vmatpush.bf16.msra.mxu0 %v1180
    %3193 = vmatpush.bf16.msra.mxu0 %v1179
    %3194 = vmatpush.bf16.msra.mxu0 %v1178
    %3195 = vmatpush.bf16.msra.mxu0 %v1177
    %3196 = vmatmul.bf16.gmra.mxu0 %v3180
    %v3197 = vpop.f32.mrf.mxu0
    %v3198 = vadd.f32 0.0, %v3197
    %v3199 = vpop.f32.mrf.mxu0
    %v3200 = vadd.f32 0.0, %v3199
    %3201 = vmatmul.bf16.gmra.mxu0 %v3181
    %v3202 = vpop.f32.mrf.mxu0
    %v3203 = vadd.f32 0.0, %v3202
    %v3204 = vpop.f32.mrf.mxu0
    %v3205 = vadd.f32 0.0, %v3204
    %3206 = vmatmul.bf16.gmra.mxu0 %v3182
    %v3207 = vpop.f32.mrf.mxu0
    %v3208 = vadd.f32 0.0, %v3207
    %v3209 = vpop.f32.mrf.mxu0
    %v3210 = vadd.f32 0.0, %v3209
    %3211 = vmatmul.bf16.gmra.mxu0 %v3183
    %v3212 = vpop.f32.mrf.mxu0
    %v3213 = vadd.f32 0.0, %v3212
    %v3214 = vpop.f32.mrf.mxu0
    %v3215 = vadd.f32 0.0, %v3214
    %3216 = vmatmul.bf16.gmra.mxu0 %v3184
    %v3217 = vpop.f32.mrf.mxu0
    %v3218 = vadd.f32 0.0, %v3217
    %v3219 = vpop.f32.mrf.mxu0
    %v3220 = vadd.f32 0.0, %v3219
    %3221 = vmatmul.bf16.gmra.mxu0 %v3185
    %v3222 = vpop.f32.mrf.mxu0
    %v3223 = vadd.f32 0.0, %v3222
    %v3224 = vpop.f32.mrf.mxu0
    %v3225 = vadd.f32 0.0, %v3224
    %3226 = vmatmul.bf16.gmra.mxu0 %v3186
    %v3227 = vpop.f32.mrf.mxu0
    %v3228 = vadd.f32 0.0, %v3227
    %v3229 = vpop.f32.mrf.mxu0
    %v3230 = vadd.f32 0.0, %v3229
    %3231 = vmatmul.bf16.gmra.mxu0 %v3187
    %v3232 = vpop.f32.mrf.mxu0
    %v3233 = vadd.f32 0.0, %v3232
    %v3234 = vpop.f32.mrf.mxu0
    %v3235 = vadd.f32 0.0, %v3234
    %3236 = vdwg.mxu0
    %v3237 = vmul.f32 %v1243, %v2681
    %v3238 = vmul.f32 %v1243, %v2682
    %v3239 = vmul.f32 %v1243, %v2683
    %v3240 = vmul.f32 %v1243, %v2684
    %v3241 = vmul.f32 %v1243, %v2685
    %v3242 = vmul.f32 %v1243, %v2686
    %v3243 = vmul.f32 %v1243, %v2687
    %v3244 = vmul.f32 %v1243, %v2688
    %v3245 = vmul.f32 %v1243, %v2689
    %v3246 = vmul.f32 %v1243, %v2690
    %v3247 = vmul.f32 %v1243, %v2691
    %v3248 = vmul.f32 %v1243, %v2692
    %v3249 = vmul.f32 %v1243, %v2693
    %v3250 = vmul.f32 %v1243, %v2694
    %v3251 = vmul.f32 %v1243, %v2695
    %v3252 = vmul.f32 %v1243, %v2696
    %v3253 = vadd.f32 %v3237, %v3198
    %v3254 = vadd.f32 %v3238, %v3200
    %v3255 = vadd.f32 %v3239, %v3203
    %v3256 = vadd.f32 %v3240, %v3205
    %v3257 = vadd.f32 %v3241, %v3208
    %v3258 = vadd.f32 %v3242, %v3210
    %v3259 = vadd.f32 %v3243, %v3213
    %v3260 = vadd.f32 %v3244, %v3215
    %v3261 = vadd.f32 %v3245, %v3218
    %v3262 = vadd.f32 %v3246, %v3220
    %v3263 = vadd.f32 %v3247, %v3223
    %v3264 = vadd.f32 %v3248, %v3225
    %v3265 = vadd.f32 %v3249, %v3228
    %v3266 = vadd.f32 %v3250, %v3230
    %v3267 = vadd.f32 %v3251, %v3233
    %v3268 = vadd.f32 %v3252, %v3235
    %v3269 = vadd.f32 %v3253, %v1263
    %v3270 = vadd.f32 %v3254, %v1263
    %v3271 = vadd.f32 %v3255, %v1263
    %v3272 = vadd.f32 %v3256, %v1263
    %v3273 = vadd.f32 %v3257, %v1263
    %v3274 = vadd.f32 %v3258, %v1263
    %v3275 = vadd.f32 %v3259, %v1263
    %v3276 = vadd.f32 %v3260, %v1263
    %v3277 = vadd.f32 %v3261, %v1263
    %v3278 = vadd.f32 %v3262, %v1263
    %v3279 = vadd.f32 %v3263, %v1263
    %v3280 = vadd.f32 %v3264, %v1263
    %v3281 = vadd.f32 %v3265, %v1263
    %v3282 = vadd.f32 %v3266, %v1263
    %v3283 = vadd.f32 %v3267, %v1263
    %v3284 = vadd.f32 %v3268, %v1263
    %v3285 = vmax.f32 %v3269, 0.0
    %v3286 = vmax.f32 %v3270, 0.0
    %v3287 = vmax.f32 %v3271, 0.0
    %v3288 = vmax.f32 %v3272, 0.0
    %v3289 = vmax.f32 %v3273, 0.0
    %v3290 = vmax.f32 %v3274, 0.0
    %v3291 = vmax.f32 %v3275, 0.0
    %v3292 = vmax.f32 %v3276, 0.0
    %v3293 = vmax.f32 %v3277, 0.0
    %v3294 = vmax.f32 %v3278, 0.0
    %v3295 = vmax.f32 %v3279, 0.0
    %v3296 = vmax.f32 %v3280, 0.0
    %v3297 = vmax.f32 %v3281, 0.0
    %v3298 = vmax.f32 %v3282, 0.0
    %v3299 = vmax.f32 %v3283, 0.0
    %v3300 = vmax.f32 %v3284, 0.0
    %v3301 = vmul.f32 %v3285, 0.1
    %v3302 = vmul.f32 %v3286, 0.1
    %v3303 = vmul.f32 %v3287, 0.1
    %v3304 = vmul.f32 %v3288, 0.1
    %v3305 = vmul.f32 %v3289, 0.1
    %v3306 = vmul.f32 %v3290, 0.1
    %v3307 = vmul.f32 %v3291, 0.1
    %v3308 = vmul.f32 %v3292, 0.1
    %v3309 = vmul.f32 %v3293, 0.1
    %v3310 = vmul.f32 %v3294, 0.1
    %v3311 = vmul.f32 %v3295, 0.1
    %v3312 = vmul.f32 %v3296, 0.1
    %v3313 = vmul.f32 %v3297, 0.1
    %v3314 = vmul.f32 %v3298, 0.1
    %v3315 = vmul.f32 %v3299, 0.1
    %v3316 = vmul.f32 %v3300, 0.1
    %v3317 = vadd.f32 %v2649, %v3301
    %v3318 = vadd.f32 %v2650, %v3302
    %v3319 = vadd.f32 %v2651, %v3303
    %v3320 = vadd.f32 %v2652, %v3304
    %v3321 = vadd.f32 %v2653, %v3305
    %v3322 = vadd.f32 %v2654, %v3306
    %v3323 = vadd.f32 %v2655, %v3307
    %v3324 = vadd.f32 %v2656, %v3308
    %v3325 = vadd.f32 %v2657, %v3309
    %v3326 = vadd.f32 %v2658, %v3310
    %v3327 = vadd.f32 %v2659, %v3311
    %v3328 = vadd.f32 %v2660, %v3312
    %v3329 = vadd.f32 %v2661, %v3313
    %v3330 = vadd.f32 %v2662, %v3314
    %v3331 = vadd.f32 %v2663, %v3315
    %v3332 = vadd.f32 %v2664, %v3316
    %v3333 = vmul.f32 %v3317, 0.1
    %v3334 = vmul.f32 %v3318, 0.1
    %v3335 = vmul.f32 %v3319, 0.1
    %v3336 = vmul.f32 %v3320, 0.1
    %v3337 = vmul.f32 %v3321, 0.1
    %v3338 = vmul.f32 %v3322, 0.1
    %v3339 = vmul.f32 %v3323, 0.1
    %v3340 = vmul.f32 %v3324, 0.1
    %v3341 = vmul.f32 %v3325, 0.1
    %v3342 = vmul.f32 %v3326, 0.1
    %v3343 = vmul.f32 %v3327, 0.1
    %v3344 = vmul.f32 %v3328, 0.1
    %v3345 = vmul.f32 %v3329, 0.1
    %v3346 = vmul.f32 %v3330, 0.1
    %v3347 = vmul.f32 %v3331, 0.1
    %v3348 = vmul.f32 %v3332, 0.1
    %v3349 = vadd.f32 %v2681, %v3333
    %v3350 = vadd.f32 %v2682, %v3334
    %v3351 = vadd.f32 %v2683, %v3335
    %v3352 = vadd.f32 %v2684, %v3336
    %v3353 = vadd.f32 %v2685, %v3337
    %v3354 = vadd.f32 %v2686, %v3338
    %v3355 = vadd.f32 %v2687, %v3339
    %v3356 = vadd.f32 %v2688, %v3340
    %v3357 = vadd.f32 %v2689, %v3341
    %v3358 = vadd.f32 %v2690, %v3342
    %v3359 = vadd.f32 %v2691, %v3343
    %v3360 = vadd.f32 %v2692, %v3344
    %v3361 = vadd.f32 %v2693, %v3345
    %v3362 = vadd.f32 %v2694, %v3346
    %v3363 = vadd.f32 %v2695, %v3347
    %v3364 = vadd.f32 %v2696, %v3348
    %v3365 = vmul.f32 %v2779, 0.1
    %v3366 = vmul.f32 %v2781, 0.1
    %v3367 = vmul.f32 %v2784, 0.1
    %v3368 = vmul.f32 %v2786, 0.1
    %v3369 = vmul.f32 %v2789, 0.1
    %v3370 = vmul.f32 %v2791, 0.1
    %v3371 = vmul.f32 %v2794, 0.1
    %v3372 = vmul.f32 %v2796, 0.1
    %v3373 = vmul.f32 %v2799, 0.1
    %v3374 = vmul.f32 %v2801, 0.1
    %v3375 = vmul.f32 %v2804, 0.1
    %v3376 = vmul.f32 %v2806, 0.1
    %v3377 = vmul.f32 %v2809, 0.1
    %v3378 = vmul.f32 %v2811, 0.1
    %v3379 = vmul.f32 %v2814, 0.1
    %v3380 = vmul.f32 %v2816, 0.1
    %v3381 = vsub.f32 %v2713, %v3365
    %v3382 = vsub.f32 %v2714, %v3366
    %v3383 = vsub.f32 %v2715, %v3367
    %v3384 = vsub.f32 %v2716, %v3368
    %v3385 = vsub.f32 %v2717, %v3369
    %v3386 = vsub.f32 %v2718, %v3370
    %v3387 = vsub.f32 %v2719, %v3371
    %v3388 = vsub.f32 %v2720, %v3372
    %v3389 = vsub.f32 %v2721, %v3373
    %v3390 = vsub.f32 %v2722, %v3374
    %v3391 = vsub.f32 %v2723, %v3375
    %v3392 = vsub.f32 %v2724, %v3376
    %v3393 = vsub.f32 %v2725, %v3377
    %v3394 = vsub.f32 %v2726, %v3378
    %v3395 = vsub.f32 %v2727, %v3379
    %v3396 = vsub.f32 %v2728, %v3380
    %v3397 = vmul.f32 %v3381, 0.1
    %v3398 = vmul.f32 %v3382, 0.1
    %v3399 = vmul.f32 %v3383, 0.1
    %v3400 = vmul.f32 %v3384, 0.1
    %v3401 = vmul.f32 %v3385, 0.1
    %v3402 = vmul.f32 %v3386, 0.1
    %v3403 = vmul.f32 %v3387, 0.1
    %v3404 = vmul.f32 %v3388, 0.1
    %v3405 = vmul.f32 %v3389, 0.1
    %v3406 = vmul.f32 %v3390, 0.1
    %v3407 = vmul.f32 %v3391, 0.1
    %v3408 = vmul.f32 %v3392, 0.1
    %v3409 = vmul.f32 %v3393, 0.1
    %v3410 = vmul.f32 %v3394, 0.1
    %v3411 = vmul.f32 %v3395, 0.1
    %v3412 = vmul.f32 %v3396, 0.1
    %v3413 = vadd.f32 %v2745, %v3397
    %v3414 = vadd.f32 %v2746, %v3398
    %v3415 = vadd.f32 %v2747, %v3399
    %v3416 = vadd.f32 %v2748, %v3400
    %v3417 = vadd.f32 %v2749, %v3401
    %v3418 = vadd.f32 %v2750, %v3402
    %v3419 = vadd.f32 %v2751, %v3403
    %v3420 = vadd.f32 %v2752, %v3404
    %v3421 = vadd.f32 %v2753, %v3405
    %v3422 = vadd.f32 %v2754, %v3406
    %v3423 = vadd.f32 %v2755, %v3407
    %v3424 = vadd.f32 %v2756, %v3408
    %v3425 = vadd.f32 %v2757, %v3409
    %v3426 = vadd.f32 %v2758, %v3410
    %v3427 = vadd.f32 %v2759, %v3411
    %v3428 = vadd.f32 %v2760, %v3412
    %v3429 = vpack.c.bf16 %v3414, %v3413
    %v3430 = vpack.c.bf16 %v3416, %v3415
    %v3431 = vpack.c.bf16 %v3418, %v3417
    %v3432 = vpack.c.bf16 %v3420, %v3419
    %v3433 = vpack.c.bf16 %v3422, %v3421
    %v3434 = vpack.c.bf16 %v3424, %v3423
    %v3435 = vpack.c.bf16 %v3426, %v3425
    %v3436 = vpack.c.bf16 %v3428, %v3427
    %3437 = vmatpush.bf16.msra.mxu0 %v3436
    %3438 = vmatpush.bf16.msra.mxu0 %v3435
    %3439 = vmatpush.bf16.msra.mxu0 %v3434
    %3440 = vmatpush.bf16.msra.mxu0 %v3433
    %3441 = vmatpush.bf16.msra.mxu0 %v3432
    %3442 = vmatpush.bf16.msra.mxu0 %v3431
    %3443 = vmatpush.bf16.msra.mxu0 %v3430
    %3444 = vmatpush.bf16.msra.mxu0 %v3429
    %3445 = vmatmul.bf16.gmra.mxu0 %v519
    %v3446 = vpop.f32.mrf.mxu0
    %v3447 = vadd.f32 0.0, %v3446
    %v3448 = vpop.f32.mrf.mxu0
    %v3449 = vadd.f32 0.0, %v3448
    %3450 = vmatmul.bf16.gmra.mxu0 %v520
    %v3451 = vpop.f32.mrf.mxu0
    %v3452 = vadd.f32 0.0, %v3451
    %v3453 = vpop.f32.mrf.mxu0
    %v3454 = vadd.f32 0.0, %v3453
    %3455 = vmatmul.bf16.gmra.mxu0 %v521
    %v3456 = vpop.f32.mrf.mxu0
    %v3457 = vadd.f32 0.0, %v3456
    %v3458 = vpop.f32.mrf.mxu0
    %v3459 = vadd.f32 0.0, %v3458
    %3460 = vmatmul.bf16.gmra.mxu0 %v522
    %v3461 = vpop.f32.mrf.mxu0
    %v3462 = vadd.f32 0.0, %v3461
    %v3463 = vpop.f32.mrf.mxu0
    %v3464 = vadd.f32 0.0, %v3463
    %3465 = vmatmul.bf16.gmra.mxu0 %v523
    %v3466 = vpop.f32.mrf.mxu0
    %v3467 = vadd.f32 0.0, %v3466
    %v3468 = vpop.f32.mrf.mxu0
    %v3469 = vadd.f32 0.0, %v3468
    %3470 = vmatmul.bf16.gmra.mxu0 %v524
    %v3471 = vpop.f32.mrf.mxu0
    %v3472 = vadd.f32 0.0, %v3471
    %v3473 = vpop.f32.mrf.mxu0
    %v3474 = vadd.f32 0.0, %v3473
    %3475 = vmatmul.bf16.gmra.mxu0 %v525
    %v3476 = vpop.f32.mrf.mxu0
    %v3477 = vadd.f32 0.0, %v3476
    %v3478 = vpop.f32.mrf.mxu0
    %v3479 = vadd.f32 0.0, %v3478
    %3480 = vmatmul.bf16.gmra.mxu0 %v526
    %v3481 = vpop.f32.mrf.mxu0
    %v3482 = vadd.f32 0.0, %v3481
    %v3483 = vpop.f32.mrf.mxu0
    %v3484 = vadd.f32 0.0, %v3483
    %3485 = vdwg.mxu0
    %3486 = vmatpush.bf16.msra.mxu0 %v744
    %3487 = vmatpush.bf16.msra.mxu0 %v743
    %3488 = vmatpush.bf16.msra.mxu0 %v742
    %3489 = vmatpush.bf16.msra.mxu0 %v741
    %3490 = vmatpush.bf16.msra.mxu0 %v740
    %3491 = vmatpush.bf16.msra.mxu0 %v739
    %3492 = vmatpush.bf16.msra.mxu0 %v738
    %3493 = vmatpush.bf16.msra.mxu0 %v737
    %3494 = vmatmul.bf16.gmra.mxu0 %v3429
    %v3495 = vpop.f32.mrf.mxu0
    %v3496 = vadd.f32 0.0, %v3495
    %v3497 = vpop.f32.mrf.mxu0
    %v3498 = vadd.f32 0.0, %v3497
    %3499 = vmatmul.bf16.gmra.mxu0 %v3430
    %v3500 = vpop.f32.mrf.mxu0
    %v3501 = vadd.f32 0.0, %v3500
    %v3502 = vpop.f32.mrf.mxu0
    %v3503 = vadd.f32 0.0, %v3502
    %3504 = vmatmul.bf16.gmra.mxu0 %v3431
    %v3505 = vpop.f32.mrf.mxu0
    %v3506 = vadd.f32 0.0, %v3505
    %v3507 = vpop.f32.mrf.mxu0
    %v3508 = vadd.f32 0.0, %v3507
    %3509 = vmatmul.bf16.gmra.mxu0 %v3432
    %v3510 = vpop.f32.mrf.mxu0
    %v3511 = vadd.f32 0.0, %v3510
    %v3512 = vpop.f32.mrf.mxu0
    %v3513 = vadd.f32 0.0, %v3512
    %3514 = vmatmul.bf16.gmra.mxu0 %v3433
    %v3515 = vpop.f32.mrf.mxu0
    %v3516 = vadd.f32 0.0, %v3515
    %v3517 = vpop.f32.mrf.mxu0
    %v3518 = vadd.f32 0.0, %v3517
    %3519 = vmatmul.bf16.gmra.mxu0 %v3434
    %v3520 = vpop.f32.mrf.mxu0
    %v3521 = vadd.f32 0.0, %v3520
    %v3522 = vpop.f32.mrf.mxu0
    %v3523 = vadd.f32 0.0, %v3522
    %3524 = vmatmul.bf16.gmra.mxu0 %v3435
    %v3525 = vpop.f32.mrf.mxu0
    %v3526 = vadd.f32 0.0, %v3525
    %v3527 = vpop.f32.mrf.mxu0
    %v3528 = vadd.f32 0.0, %v3527
    %3529 = vmatmul.bf16.gmra.mxu0 %v3436
    %v3530 = vpop.f32.mrf.mxu0
    %v3531 = vadd.f32 0.0, %v3530
    %v3532 = vpop.f32.mrf.mxu0
    %v3533 = vadd.f32 0.0, %v3532
    %3534 = vdwg.mxu0
    %v3535 = vpack.c.bf16 %v3350, %v3349
    %v3536 = vpack.c.bf16 %v3352, %v3351
    %v3537 = vpack.c.bf16 %v3354, %v3353
    %v3538 = vpack.c.bf16 %v3356, %v3355
    %v3539 = vpack.c.bf16 %v3358, %v3357
    %v3540 = vpack.c.bf16 %v3360, %v3359
    %v3541 = vpack.c.bf16 %v3362, %v3361
    %v3542 = vpack.c.bf16 %v3364, %v3363
    %3543 = vmatpush.bf16.msra.mxu0 %v841
    %3544 = vmatpush.bf16.msra.mxu0 %v840
    %3545 = vmatpush.bf16.msra.mxu0 %v839
    %3546 = vmatpush.bf16.msra.mxu0 %v838
    %3547 = vmatpush.bf16.msra.mxu0 %v837
    %3548 = vmatpush.bf16.msra.mxu0 %v836
    %3549 = vmatpush.bf16.msra.mxu0 %v835
    %3550 = vmatpush.bf16.msra.mxu0 %v834
    %3551 = vmatmul.bf16.gmra.mxu0 %v3535
    %v3552 = vpop.f32.mrf.mxu0
    %v3553 = vadd.f32 0.0, %v3552
    %v3554 = vpop.f32.mrf.mxu0
    %v3555 = vadd.f32 0.0, %v3554
    %3556 = vmatmul.bf16.gmra.mxu0 %v3536
    %v3557 = vpop.f32.mrf.mxu0
    %v3558 = vadd.f32 0.0, %v3557
    %v3559 = vpop.f32.mrf.mxu0
    %v3560 = vadd.f32 0.0, %v3559
    %3561 = vmatmul.bf16.gmra.mxu0 %v3537
    %v3562 = vpop.f32.mrf.mxu0
    %v3563 = vadd.f32 0.0, %v3562
    %v3564 = vpop.f32.mrf.mxu0
    %v3565 = vadd.f32 0.0, %v3564
    %3566 = vmatmul.bf16.gmra.mxu0 %v3538
    %v3567 = vpop.f32.mrf.mxu0
    %v3568 = vadd.f32 0.0, %v3567
    %v3569 = vpop.f32.mrf.mxu0
    %v3570 = vadd.f32 0.0, %v3569
    %3571 = vmatmul.bf16.gmra.mxu0 %v3539
    %v3572 = vpop.f32.mrf.mxu0
    %v3573 = vadd.f32 0.0, %v3572
    %v3574 = vpop.f32.mrf.mxu0
    %v3575 = vadd.f32 0.0, %v3574
    %3576 = vmatmul.bf16.gmra.mxu0 %v3540
    %v3577 = vpop.f32.mrf.mxu0
    %v3578 = vadd.f32 0.0, %v3577
    %v3579 = vpop.f32.mrf.mxu0
    %v3580 = vadd.f32 0.0, %v3579
    %3581 = vmatmul.bf16.gmra.mxu0 %v3541
    %v3582 = vpop.f32.mrf.mxu0
    %v3583 = vadd.f32 0.0, %v3582
    %v3584 = vpop.f32.mrf.mxu0
    %v3585 = vadd.f32 0.0, %v3584
    %3586 = vmatmul.bf16.gmra.mxu0 %v3542
    %v3587 = vpop.f32.mrf.mxu0
    %v3588 = vadd.f32 0.0, %v3587
    %v3589 = vpop.f32.mrf.mxu0
    %v3590 = vadd.f32 0.0, %v3589
    %3591 = vdwg.mxu0
    %v3592 = vmul.f32 %v900, %v3036
    %v3593 = vmul.f32 %v900, %v3037
    %v3594 = vmul.f32 %v900, %v3038
    %v3595 = vmul.f32 %v900, %v3039
    %v3596 = vmul.f32 %v900, %v3040
    %v3597 = vmul.f32 %v900, %v3041
    %v3598 = vmul.f32 %v900, %v3042
    %v3599 = vmul.f32 %v900, %v3043
    %v3600 = vmul.f32 %v900, %v3044
    %v3601 = vmul.f32 %v900, %v3045
    %v3602 = vmul.f32 %v900, %v3046
    %v3603 = vmul.f32 %v900, %v3047
    %v3604 = vmul.f32 %v900, %v3048
    %v3605 = vmul.f32 %v900, %v3049
    %v3606 = vmul.f32 %v900, %v3050
    %v3607 = vmul.f32 %v900, %v3051
    %v3608 = vadd.f32 %v3592, %v3496
    %v3609 = vadd.f32 %v3593, %v3498
    %v3610 = vadd.f32 %v3594, %v3501
    %v3611 = vadd.f32 %v3595, %v3503
    %v3612 = vadd.f32 %v3596, %v3506
    %v3613 = vadd.f32 %v3597, %v3508
    %v3614 = vadd.f32 %v3598, %v3511
    %v3615 = vadd.f32 %v3599, %v3513
    %v3616 = vadd.f32 %v3600, %v3516
    %v3617 = vadd.f32 %v3601, %v3518
    %v3618 = vadd.f32 %v3602, %v3521
    %v3619 = vadd.f32 %v3603, %v3523
    %v3620 = vadd.f32 %v3604, %v3526
    %v3621 = vadd.f32 %v3605, %v3528
    %v3622 = vadd.f32 %v3606, %v3531
    %v3623 = vadd.f32 %v3607, %v3533
    %v3624 = vadd.f32 %v3608, %v920
    %v3625 = vadd.f32 %v3609, %v920
    %v3626 = vadd.f32 %v3610, %v920
    %v3627 = vadd.f32 %v3611, %v920
    %v3628 = vadd.f32 %v3612, %v920
    %v3629 = vadd.f32 %v3613, %v920
    %v3630 = vadd.f32 %v3614, %v920
    %v3631 = vadd.f32 %v3615, %v920
    %v3632 = vadd.f32 %v3616, %v920
    %v3633 = vadd.f32 %v3617, %v920
    %v3634 = vadd.f32 %v3618, %v920
    %v3635 = vadd.f32 %v3619, %v920
    %v3636 = vadd.f32 %v3620, %v920
    %v3637 = vadd.f32 %v3621, %v920
    %v3638 = vadd.f32 %v3622, %v920
    %v3639 = vadd.f32 %v3623, %v920
    %v3640 = vmax.f32 %v3624, 0.0
    %v3641 = vmax.f32 %v3625, 0.0
    %v3642 = vmax.f32 %v3626, 0.0
    %v3643 = vmax.f32 %v3627, 0.0
    %v3644 = vmax.f32 %v3628, 0.0
    %v3645 = vmax.f32 %v3629, 0.0
    %v3646 = vmax.f32 %v3630, 0.0
    %v3647 = vmax.f32 %v3631, 0.0
    %v3648 = vmax.f32 %v3632, 0.0
    %v3649 = vmax.f32 %v3633, 0.0
    %v3650 = vmax.f32 %v3634, 0.0
    %v3651 = vmax.f32 %v3635, 0.0
    %v3652 = vmax.f32 %v3636, 0.0
    %v3653 = vmax.f32 %v3637, 0.0
    %v3654 = vmax.f32 %v3638, 0.0
    %v3655 = vmax.f32 %v3639, 0.0
    %v3656 = vmul.f32 %v3640, 0.1
    %v3657 = vmul.f32 %v3641, 0.1
    %v3658 = vmul.f32 %v3642, 0.1
    %v3659 = vmul.f32 %v3643, 0.1
    %v3660 = vmul.f32 %v3644, 0.1
    %v3661 = vmul.f32 %v3645, 0.1
    %v3662 = vmul.f32 %v3646, 0.1
    %v3663 = vmul.f32 %v3647, 0.1
    %v3664 = vmul.f32 %v3648, 0.1
    %v3665 = vmul.f32 %v3649, 0.1
    %v3666 = vmul.f32 %v3650, 0.1
    %v3667 = vmul.f32 %v3651, 0.1
    %v3668 = vmul.f32 %v3652, 0.1
    %v3669 = vmul.f32 %v3653, 0.1
    %v3670 = vmul.f32 %v3654, 0.1
    %v3671 = vmul.f32 %v3655, 0.1
    %v3672 = vadd.f32 %v3004, %v3656
    %v3673 = vadd.f32 %v3005, %v3657
    %v3674 = vadd.f32 %v3006, %v3658
    %v3675 = vadd.f32 %v3007, %v3659
    %v3676 = vadd.f32 %v3008, %v3660
    %v3677 = vadd.f32 %v3009, %v3661
    %v3678 = vadd.f32 %v3010, %v3662
    %v3679 = vadd.f32 %v3011, %v3663
    %v3680 = vadd.f32 %v3012, %v3664
    %v3681 = vadd.f32 %v3013, %v3665
    %v3682 = vadd.f32 %v3014, %v3666
    %v3683 = vadd.f32 %v3015, %v3667
    %v3684 = vadd.f32 %v3016, %v3668
    %v3685 = vadd.f32 %v3017, %v3669
    %v3686 = vadd.f32 %v3018, %v3670
    %v3687 = vadd.f32 %v3019, %v3671
    %v3688 = vmul.f32 %v3672, 0.1
    %v3689 = vmul.f32 %v3673, 0.1
    %v3690 = vmul.f32 %v3674, 0.1
    %v3691 = vmul.f32 %v3675, 0.1
    %v3692 = vmul.f32 %v3676, 0.1
    %v3693 = vmul.f32 %v3677, 0.1
    %v3694 = vmul.f32 %v3678, 0.1
    %v3695 = vmul.f32 %v3679, 0.1
    %v3696 = vmul.f32 %v3680, 0.1
    %v3697 = vmul.f32 %v3681, 0.1
    %v3698 = vmul.f32 %v3682, 0.1
    %v3699 = vmul.f32 %v3683, 0.1
    %v3700 = vmul.f32 %v3684, 0.1
    %v3701 = vmul.f32 %v3685, 0.1
    %v3702 = vmul.f32 %v3686, 0.1
    %v3703 = vmul.f32 %v3687, 0.1
    %v3704 = vadd.f32 %v3036, %v3688
    %v3705 = vadd.f32 %v3037, %v3689
    %v3706 = vadd.f32 %v3038, %v3690
    %v3707 = vadd.f32 %v3039, %v3691
    %v3708 = vadd.f32 %v3040, %v3692
    %v3709 = vadd.f32 %v3041, %v3693
    %v3710 = vadd.f32 %v3042, %v3694
    %v3711 = vadd.f32 %v3043, %v3695
    %v3712 = vadd.f32 %v3044, %v3696
    %v3713 = vadd.f32 %v3045, %v3697
    %v3714 = vadd.f32 %v3046, %v3698
    %v3715 = vadd.f32 %v3047, %v3699
    %v3716 = vadd.f32 %v3048, %v3700
    %v3717 = vadd.f32 %v3049, %v3701
    %v3718 = vadd.f32 %v3050, %v3702
    %v3719 = vadd.f32 %v3051, %v3703
    %v3720 = vmul.f32 %v1019, %v3164
    %v3721 = vmul.f32 %v1019, %v3165
    %v3722 = vmul.f32 %v1019, %v3166
    %v3723 = vmul.f32 %v1019, %v3167
    %v3724 = vmul.f32 %v1019, %v3168
    %v3725 = vmul.f32 %v1019, %v3169
    %v3726 = vmul.f32 %v1019, %v3170
    %v3727 = vmul.f32 %v1019, %v3171
    %v3728 = vmul.f32 %v1019, %v3172
    %v3729 = vmul.f32 %v1019, %v3173
    %v3730 = vmul.f32 %v1019, %v3174
    %v3731 = vmul.f32 %v1019, %v3175
    %v3732 = vmul.f32 %v1019, %v3176
    %v3733 = vmul.f32 %v1019, %v3177
    %v3734 = vmul.f32 %v1019, %v3178
    %v3735 = vmul.f32 %v1019, %v3179
    %v3736 = vadd.f32 %v3720, %v3553
    %v3737 = vadd.f32 %v3721, %v3555
    %v3738 = vadd.f32 %v3722, %v3558
    %v3739 = vadd.f32 %v3723, %v3560
    %v3740 = vadd.f32 %v3724, %v3563
    %v3741 = vadd.f32 %v3725, %v3565
    %v3742 = vadd.f32 %v3726, %v3568
    %v3743 = vadd.f32 %v3727, %v3570
    %v3744 = vadd.f32 %v3728, %v3573
    %v3745 = vadd.f32 %v3729, %v3575
    %v3746 = vadd.f32 %v3730, %v3578
    %v3747 = vadd.f32 %v3731, %v3580
    %v3748 = vadd.f32 %v3732, %v3583
    %v3749 = vadd.f32 %v3733, %v3585
    %v3750 = vadd.f32 %v3734, %v3588
    %v3751 = vadd.f32 %v3735, %v3590
    %v3752 = vadd.f32 %v3736, %v1039
    %v3753 = vadd.f32 %v3737, %v1039
    %v3754 = vadd.f32 %v3738, %v1039
    %v3755 = vadd.f32 %v3739, %v1039
    %v3756 = vadd.f32 %v3740, %v1039
    %v3757 = vadd.f32 %v3741, %v1039
    %v3758 = vadd.f32 %v3742, %v1039
    %v3759 = vadd.f32 %v3743, %v1039
    %v3760 = vadd.f32 %v3744, %v1039
    %v3761 = vadd.f32 %v3745, %v1039
    %v3762 = vadd.f32 %v3746, %v1039
    %v3763 = vadd.f32 %v3747, %v1039
    %v3764 = vadd.f32 %v3748, %v1039
    %v3765 = vadd.f32 %v3749, %v1039
    %v3766 = vadd.f32 %v3750, %v1039
    %v3767 = vadd.f32 %v3751, %v1039
    %v3768 = vmax.f32 %v3752, 0.0
    %v3769 = vmax.f32 %v3753, 0.0
    %v3770 = vmax.f32 %v3754, 0.0
    %v3771 = vmax.f32 %v3755, 0.0
    %v3772 = vmax.f32 %v3756, 0.0
    %v3773 = vmax.f32 %v3757, 0.0
    %v3774 = vmax.f32 %v3758, 0.0
    %v3775 = vmax.f32 %v3759, 0.0
    %v3776 = vmax.f32 %v3760, 0.0
    %v3777 = vmax.f32 %v3761, 0.0
    %v3778 = vmax.f32 %v3762, 0.0
    %v3779 = vmax.f32 %v3763, 0.0
    %v3780 = vmax.f32 %v3764, 0.0
    %v3781 = vmax.f32 %v3765, 0.0
    %v3782 = vmax.f32 %v3766, 0.0
    %v3783 = vmax.f32 %v3767, 0.0
    %v3784 = vmul.f32 %v3768, 0.1
    %v3785 = vmul.f32 %v3769, 0.1
    %v3786 = vmul.f32 %v3770, 0.1
    %v3787 = vmul.f32 %v3771, 0.1
    %v3788 = vmul.f32 %v3772, 0.1
    %v3789 = vmul.f32 %v3773, 0.1
    %v3790 = vmul.f32 %v3774, 0.1
    %v3791 = vmul.f32 %v3775, 0.1
    %v3792 = vmul.f32 %v3776, 0.1
    %v3793 = vmul.f32 %v3777, 0.1
    %v3794 = vmul.f32 %v3778, 0.1
    %v3795 = vmul.f32 %v3779, 0.1
    %v3796 = vmul.f32 %v3780, 0.1
    %v3797 = vmul.f32 %v3781, 0.1
    %v3798 = vmul.f32 %v3782, 0.1
    %v3799 = vmul.f32 %v3783, 0.1
    %v3800 = vadd.f32 %v3132, %v3784
    %v3801 = vadd.f32 %v3133, %v3785
    %v3802 = vadd.f32 %v3134, %v3786
    %v3803 = vadd.f32 %v3135, %v3787
    %v3804 = vadd.f32 %v3136, %v3788
    %v3805 = vadd.f32 %v3137, %v3789
    %v3806 = vadd.f32 %v3138, %v3790
    %v3807 = vadd.f32 %v3139, %v3791
    %v3808 = vadd.f32 %v3140, %v3792
    %v3809 = vadd.f32 %v3141, %v3793
    %v3810 = vadd.f32 %v3142, %v3794
    %v3811 = vadd.f32 %v3143, %v3795
    %v3812 = vadd.f32 %v3144, %v3796
    %v3813 = vadd.f32 %v3145, %v3797
    %v3814 = vadd.f32 %v3146, %v3798
    %v3815 = vadd.f32 %v3147, %v3799
    %v3816 = vmul.f32 %v3800, 0.1
    %v3817 = vmul.f32 %v3801, 0.1
    %v3818 = vmul.f32 %v3802, 0.1
    %v3819 = vmul.f32 %v3803, 0.1
    %v3820 = vmul.f32 %v3804, 0.1
    %v3821 = vmul.f32 %v3805, 0.1
    %v3822 = vmul.f32 %v3806, 0.1
    %v3823 = vmul.f32 %v3807, 0.1
    %v3824 = vmul.f32 %v3808, 0.1
    %v3825 = vmul.f32 %v3809, 0.1
    %v3826 = vmul.f32 %v3810, 0.1
    %v3827 = vmul.f32 %v3811, 0.1
    %v3828 = vmul.f32 %v3812, 0.1
    %v3829 = vmul.f32 %v3813, 0.1
    %v3830 = vmul.f32 %v3814, 0.1
    %v3831 = vmul.f32 %v3815, 0.1
    %v3832 = vadd.f32 %v3164, %v3816
    %v3833 = vadd.f32 %v3165, %v3817
    %v3834 = vadd.f32 %v3166, %v3818
    %v3835 = vadd.f32 %v3167, %v3819
    %v3836 = vadd.f32 %v3168, %v3820
    %v3837 = vadd.f32 %v3169, %v3821
    %v3838 = vadd.f32 %v3170, %v3822
    %v3839 = vadd.f32 %v3171, %v3823
    %v3840 = vadd.f32 %v3172, %v3824
    %v3841 = vadd.f32 %v3173, %v3825
    %v3842 = vadd.f32 %v3174, %v3826
    %v3843 = vadd.f32 %v3175, %v3827
    %v3844 = vadd.f32 %v3176, %v3828
    %v3845 = vadd.f32 %v3177, %v3829
    %v3846 = vadd.f32 %v3178, %v3830
    %v3847 = vadd.f32 %v3179, %v3831
    %v3848 = vpack.c.bf16 %v3705, %v3704
    %v3849 = vpack.c.bf16 %v3707, %v3706
    %v3850 = vpack.c.bf16 %v3709, %v3708
    %v3851 = vpack.c.bf16 %v3711, %v3710
    %v3852 = vpack.c.bf16 %v3713, %v3712
    %v3853 = vpack.c.bf16 %v3715, %v3714
    %v3854 = vpack.c.bf16 %v3717, %v3716
    %v3855 = vpack.c.bf16 %v3719, %v3718
    %3856 = vmatpush.bf16.msra.mxu0 %v1184
    %3857 = vmatpush.bf16.msra.mxu0 %v1183
    %3858 = vmatpush.bf16.msra.mxu0 %v1182
    %3859 = vmatpush.bf16.msra.mxu0 %v1181
    %3860 = vmatpush.bf16.msra.mxu0 %v1180
    %3861 = vmatpush.bf16.msra.mxu0 %v1179
    %3862 = vmatpush.bf16.msra.mxu0 %v1178
    %3863 = vmatpush.bf16.msra.mxu0 %v1177
    %3864 = vmatmul.bf16.gmra.mxu0 %v3848
    %v3865 = vpop.f32.mrf.mxu0
    %v3866 = vadd.f32 0.0, %v3865
    %v3867 = vpop.f32.mrf.mxu0
    %v3868 = vadd.f32 0.0, %v3867
    %3869 = vmatmul.bf16.gmra.mxu0 %v3849
    %v3870 = vpop.f32.mrf.mxu0
    %v3871 = vadd.f32 0.0, %v3870
    %v3872 = vpop.f32.mrf.mxu0
    %v3873 = vadd.f32 0.0, %v3872
    %3874 = vmatmul.bf16.gmra.mxu0 %v3850
    %v3875 = vpop.f32.mrf.mxu0
    %v3876 = vadd.f32 0.0, %v3875
    %v3877 = vpop.f32.mrf.mxu0
    %v3878 = vadd.f32 0.0, %v3877
    %3879 = vmatmul.bf16.gmra.mxu0 %v3851
    %v3880 = vpop.f32.mrf.mxu0
    %v3881 = vadd.f32 0.0, %v3880
    %v3882 = vpop.f32.mrf.mxu0
    %v3883 = vadd.f32 0.0, %v3882
    %3884 = vmatmul.bf16.gmra.mxu0 %v3852
    %v3885 = vpop.f32.mrf.mxu0
    %v3886 = vadd.f32 0.0, %v3885
    %v3887 = vpop.f32.mrf.mxu0
    %v3888 = vadd.f32 0.0, %v3887
    %3889 = vmatmul.bf16.gmra.mxu0 %v3853
    %v3890 = vpop.f32.mrf.mxu0
    %v3891 = vadd.f32 0.0, %v3890
    %v3892 = vpop.f32.mrf.mxu0
    %v3893 = vadd.f32 0.0, %v3892
    %3894 = vmatmul.bf16.gmra.mxu0 %v3854
    %v3895 = vpop.f32.mrf.mxu0
    %v3896 = vadd.f32 0.0, %v3895
    %v3897 = vpop.f32.mrf.mxu0
    %v3898 = vadd.f32 0.0, %v3897
    %3899 = vmatmul.bf16.gmra.mxu0 %v3855
    %v3900 = vpop.f32.mrf.mxu0
    %v3901 = vadd.f32 0.0, %v3900
    %v3902 = vpop.f32.mrf.mxu0
    %v3903 = vadd.f32 0.0, %v3902
    %3904 = vdwg.mxu0
    %v3905 = vmul.f32 %v1243, %v3349
    %v3906 = vmul.f32 %v1243, %v3350
    %v3907 = vmul.f32 %v1243, %v3351
    %v3908 = vmul.f32 %v1243, %v3352
    %v3909 = vmul.f32 %v1243, %v3353
    %v3910 = vmul.f32 %v1243, %v3354
    %v3911 = vmul.f32 %v1243, %v3355
    %v3912 = vmul.f32 %v1243, %v3356
    %v3913 = vmul.f32 %v1243, %v3357
    %v3914 = vmul.f32 %v1243, %v3358
    %v3915 = vmul.f32 %v1243, %v3359
    %v3916 = vmul.f32 %v1243, %v3360
    %v3917 = vmul.f32 %v1243, %v3361
    %v3918 = vmul.f32 %v1243, %v3362
    %v3919 = vmul.f32 %v1243, %v3363
    %v3920 = vmul.f32 %v1243, %v3364
    %v3921 = vadd.f32 %v3905, %v3866
    %v3922 = vadd.f32 %v3906, %v3868
    %v3923 = vadd.f32 %v3907, %v3871
    %v3924 = vadd.f32 %v3908, %v3873
    %v3925 = vadd.f32 %v3909, %v3876
    %v3926 = vadd.f32 %v3910, %v3878
    %v3927 = vadd.f32 %v3911, %v3881
    %v3928 = vadd.f32 %v3912, %v3883
    %v3929 = vadd.f32 %v3913, %v3886
    %v3930 = vadd.f32 %v3914, %v3888
    %v3931 = vadd.f32 %v3915, %v3891
    %v3932 = vadd.f32 %v3916, %v3893
    %v3933 = vadd.f32 %v3917, %v3896
    %v3934 = vadd.f32 %v3918, %v3898
    %v3935 = vadd.f32 %v3919, %v3901
    %v3936 = vadd.f32 %v3920, %v3903
    %v3937 = vadd.f32 %v3921, %v1263
    %v3938 = vadd.f32 %v3922, %v1263
    %v3939 = vadd.f32 %v3923, %v1263
    %v3940 = vadd.f32 %v3924, %v1263
    %v3941 = vadd.f32 %v3925, %v1263
    %v3942 = vadd.f32 %v3926, %v1263
    %v3943 = vadd.f32 %v3927, %v1263
    %v3944 = vadd.f32 %v3928, %v1263
    %v3945 = vadd.f32 %v3929, %v1263
    %v3946 = vadd.f32 %v3930, %v1263
    %v3947 = vadd.f32 %v3931, %v1263
    %v3948 = vadd.f32 %v3932, %v1263
    %v3949 = vadd.f32 %v3933, %v1263
    %v3950 = vadd.f32 %v3934, %v1263
    %v3951 = vadd.f32 %v3935, %v1263
    %v3952 = vadd.f32 %v3936, %v1263
    %v3953 = vmax.f32 %v3937, 0.0
    %v3954 = vmax.f32 %v3938, 0.0
    %v3955 = vmax.f32 %v3939, 0.0
    %v3956 = vmax.f32 %v3940, 0.0
    %v3957 = vmax.f32 %v3941, 0.0
    %v3958 = vmax.f32 %v3942, 0.0
    %v3959 = vmax.f32 %v3943, 0.0
    %v3960 = vmax.f32 %v3944, 0.0
    %v3961 = vmax.f32 %v3945, 0.0
    %v3962 = vmax.f32 %v3946, 0.0
    %v3963 = vmax.f32 %v3947, 0.0
    %v3964 = vmax.f32 %v3948, 0.0
    %v3965 = vmax.f32 %v3949, 0.0
    %v3966 = vmax.f32 %v3950, 0.0
    %v3967 = vmax.f32 %v3951, 0.0
    %v3968 = vmax.f32 %v3952, 0.0
    %v3969 = vmul.f32 %v3953, 0.1
    %v3970 = vmul.f32 %v3954, 0.1
    %v3971 = vmul.f32 %v3955, 0.1
    %v3972 = vmul.f32 %v3956, 0.1
    %v3973 = vmul.f32 %v3957, 0.1
    %v3974 = vmul.f32 %v3958, 0.1
    %v3975 = vmul.f32 %v3959, 0.1
    %v3976 = vmul.f32 %v3960, 0.1
    %v3977 = vmul.f32 %v3961, 0.1
    %v3978 = vmul.f32 %v3962, 0.1
    %v3979 = vmul.f32 %v3963, 0.1
    %v3980 = vmul.f32 %v3964, 0.1
    %v3981 = vmul.f32 %v3965, 0.1
    %v3982 = vmul.f32 %v3966, 0.1
    %v3983 = vmul.f32 %v3967, 0.1
    %v3984 = vmul.f32 %v3968, 0.1
    %v3985 = vadd.f32 %v3317, %v3969
    %v3986 = vadd.f32 %v3318, %v3970
    %v3987 = vadd.f32 %v3319, %v3971
    %v3988 = vadd.f32 %v3320, %v3972
    %v3989 = vadd.f32 %v3321, %v3973
    %v3990 = vadd.f32 %v3322, %v3974
    %v3991 = vadd.f32 %v3323, %v3975
    %v3992 = vadd.f32 %v3324, %v3976
    %v3993 = vadd.f32 %v3325, %v3977
    %v3994 = vadd.f32 %v3326, %v3978
    %v3995 = vadd.f32 %v3327, %v3979
    %v3996 = vadd.f32 %v3328, %v3980
    %v3997 = vadd.f32 %v3329, %v3981
    %v3998 = vadd.f32 %v3330, %v3982
    %v3999 = vadd.f32 %v3331, %v3983
    %v4000 = vadd.f32 %v3332, %v3984
    %v4001 = vmul.f32 %v3985, 0.1
    %v4002 = vmul.f32 %v3986, 0.1
    %v4003 = vmul.f32 %v3987, 0.1
    %v4004 = vmul.f32 %v3988, 0.1
    %v4005 = vmul.f32 %v3989, 0.1
    %v4006 = vmul.f32 %v3990, 0.1
    %v4007 = vmul.f32 %v3991, 0.1
    %v4008 = vmul.f32 %v3992, 0.1
    %v4009 = vmul.f32 %v3993, 0.1
    %v4010 = vmul.f32 %v3994, 0.1
    %v4011 = vmul.f32 %v3995, 0.1
    %v4012 = vmul.f32 %v3996, 0.1
    %v4013 = vmul.f32 %v3997, 0.1
    %v4014 = vmul.f32 %v3998, 0.1
    %v4015 = vmul.f32 %v3999, 0.1
    %v4016 = vmul.f32 %v4000, 0.1
    %v4017 = vadd.f32 %v3349, %v4001
    %v4018 = vadd.f32 %v3350, %v4002
    %v4019 = vadd.f32 %v3351, %v4003
    %v4020 = vadd.f32 %v3352, %v4004
    %v4021 = vadd.f32 %v3353, %v4005
    %v4022 = vadd.f32 %v3354, %v4006
    %v4023 = vadd.f32 %v3355, %v4007
    %v4024 = vadd.f32 %v3356, %v4008
    %v4025 = vadd.f32 %v3357, %v4009
    %v4026 = vadd.f32 %v3358, %v4010
    %v4027 = vadd.f32 %v3359, %v4011
    %v4028 = vadd.f32 %v3360, %v4012
    %v4029 = vadd.f32 %v3361, %v4013
    %v4030 = vadd.f32 %v3362, %v4014
    %v4031 = vadd.f32 %v3363, %v4015
    %v4032 = vadd.f32 %v3364, %v4016
    %v4033 = vmul.f32 %v3447, 0.1
    %v4034 = vmul.f32 %v3449, 0.1
    %v4035 = vmul.f32 %v3452, 0.1
    %v4036 = vmul.f32 %v3454, 0.1
    %v4037 = vmul.f32 %v3457, 0.1
    %v4038 = vmul.f32 %v3459, 0.1
    %v4039 = vmul.f32 %v3462, 0.1
    %v4040 = vmul.f32 %v3464, 0.1
    %v4041 = vmul.f32 %v3467, 0.1
    %v4042 = vmul.f32 %v3469, 0.1
    %v4043 = vmul.f32 %v3472, 0.1
    %v4044 = vmul.f32 %v3474, 0.1
    %v4045 = vmul.f32 %v3477, 0.1
    %v4046 = vmul.f32 %v3479, 0.1
    %v4047 = vmul.f32 %v3482, 0.1
    %v4048 = vmul.f32 %v3484, 0.1
    %v4049 = vsub.f32 %v3381, %v4033
    %v4050 = vsub.f32 %v3382, %v4034
    %v4051 = vsub.f32 %v3383, %v4035
    %v4052 = vsub.f32 %v3384, %v4036
    %v4053 = vsub.f32 %v3385, %v4037
    %v4054 = vsub.f32 %v3386, %v4038
    %v4055 = vsub.f32 %v3387, %v4039
    %v4056 = vsub.f32 %v3388, %v4040
    %v4057 = vsub.f32 %v3389, %v4041
    %v4058 = vsub.f32 %v3390, %v4042
    %v4059 = vsub.f32 %v3391, %v4043
    %v4060 = vsub.f32 %v3392, %v4044
    %v4061 = vsub.f32 %v3393, %v4045
    %v4062 = vsub.f32 %v3394, %v4046
    %v4063 = vsub.f32 %v3395, %v4047
    %v4064 = vsub.f32 %v3396, %v4048
    %v4065 = vmul.f32 %v4049, 0.1
    %v4066 = vmul.f32 %v4050, 0.1
    %v4067 = vmul.f32 %v4051, 0.1
    %v4068 = vmul.f32 %v4052, 0.1
    %v4069 = vmul.f32 %v4053, 0.1
    %v4070 = vmul.f32 %v4054, 0.1
    %v4071 = vmul.f32 %v4055, 0.1
    %v4072 = vmul.f32 %v4056, 0.1
    %v4073 = vmul.f32 %v4057, 0.1
    %v4074 = vmul.f32 %v4058, 0.1
    %v4075 = vmul.f32 %v4059, 0.1
    %v4076 = vmul.f32 %v4060, 0.1
    %v4077 = vmul.f32 %v4061, 0.1
    %v4078 = vmul.f32 %v4062, 0.1
    %v4079 = vmul.f32 %v4063, 0.1
    %v4080 = vmul.f32 %v4064, 0.1
    %v4081 = vadd.f32 %v3413, %v4065
    %v4082 = vadd.f32 %v3414, %v4066
    %v4083 = vadd.f32 %v3415, %v4067
    %v4084 = vadd.f32 %v3416, %v4068
    %v4085 = vadd.f32 %v3417, %v4069
    %v4086 = vadd.f32 %v3418, %v4070
    %v4087 = vadd.f32 %v3419, %v4071
    %v4088 = vadd.f32 %v3420, %v4072
    %v4089 = vadd.f32 %v3421, %v4073
    %v4090 = vadd.f32 %v3422, %v4074
    %v4091 = vadd.f32 %v3423, %v4075
    %v4092 = vadd.f32 %v3424, %v4076
    %v4093 = vadd.f32 %v3425, %v4077
    %v4094 = vadd.f32 %v3426, %v4078
    %v4095 = vadd.f32 %v3427, %v4079
    %v4096 = vadd.f32 %v3428, %v4080
    %v4097 = vpack.c.bf16 %v4082, %v4081
    %v4098 = vpack.c.bf16 %v4084, %v4083
    %v4099 = vpack.c.bf16 %v4086, %v4085
    %v4100 = vpack.c.bf16 %v4088, %v4087
    %v4101 = vpack.c.bf16 %v4090, %v4089
    %v4102 = vpack.c.bf16 %v4092, %v4091
    %v4103 = vpack.c.bf16 %v4094, %v4093
    %v4104 = vpack.c.bf16 %v4096, %v4095
    %4105 = vmatpush.bf16.msra.mxu0 %v4104
    %4106 = vmatpush.bf16.msra.mxu0 %v4103
    %4107 = vmatpush.bf16.msra.mxu0 %v4102
    %4108 = vmatpush.bf16.msra.mxu0 %v4101
    %4109 = vmatpush.bf16.msra.mxu0 %v4100
    %4110 = vmatpush.bf16.msra.mxu0 %v4099
    %4111 = vmatpush.bf16.msra.mxu0 %v4098
    %4112 = vmatpush.bf16.msra.mxu0 %v4097
    %4113 = vmatmul.bf16.gmra.mxu0 %v519
    %v4114 = vpop.f32.mrf.mxu0
    %v4115 = vadd.f32 0.0, %v4114
    %v4116 = vpop.f32.mrf.mxu0
    %v4117 = vadd.f32 0.0, %v4116
    %4118 = vmatmul.bf16.gmra.mxu0 %v520
    %v4119 = vpop.f32.mrf.mxu0
    %v4120 = vadd.f32 0.0, %v4119
    %v4121 = vpop.f32.mrf.mxu0
    %v4122 = vadd.f32 0.0, %v4121
    %4123 = vmatmul.bf16.gmra.mxu0 %v521
    %v4124 = vpop.f32.mrf.mxu0
    %v4125 = vadd.f32 0.0, %v4124
    %v4126 = vpop.f32.mrf.mxu0
    %v4127 = vadd.f32 0.0, %v4126
    %4128 = vmatmul.bf16.gmra.mxu0 %v522
    %v4129 = vpop.f32.mrf.mxu0
    %v4130 = vadd.f32 0.0, %v4129
    %v4131 = vpop.f32.mrf.mxu0
    %v4132 = vadd.f32 0.0, %v4131
    %4133 = vmatmul.bf16.gmra.mxu0 %v523
    %v4134 = vpop.f32.mrf.mxu0
    %v4135 = vadd.f32 0.0, %v4134
    %v4136 = vpop.f32.mrf.mxu0
    %v4137 = vadd.f32 0.0, %v4136
    %4138 = vmatmul.bf16.gmra.mxu0 %v524
    %v4139 = vpop.f32.mrf.mxu0
    %v4140 = vadd.f32 0.0, %v4139
    %v4141 = vpop.f32.mrf.mxu0
    %v4142 = vadd.f32 0.0, %v4141
    %4143 = vmatmul.bf16.gmra.mxu0 %v525
    %v4144 = vpop.f32.mrf.mxu0
    %v4145 = vadd.f32 0.0, %v4144
    %v4146 = vpop.f32.mrf.mxu0
    %v4147 = vadd.f32 0.0, %v4146
    %4148 = vmatmul.bf16.gmra.mxu0 %v526
    %v4149 = vpop.f32.mrf.mxu0
    %v4150 = vadd.f32 0.0, %v4149
    %v4151 = vpop.f32.mrf.mxu0
    %v4152 = vadd.f32 0.0, %v4151
    %4153 = vdwg.mxu0
    %4154 = vmatpush.bf16.msra.mxu0 %v744
    %4155 = vmatpush.bf16.msra.mxu0 %v743
    %4156 = vmatpush.bf16.msra.mxu0 %v742
    %4157 = vmatpush.bf16.msra.mxu0 %v741
    %4158 = vmatpush.bf16.msra.mxu0 %v740
    %4159 = vmatpush.bf16.msra.mxu0 %v739
    %4160 = vmatpush.bf16.msra.mxu0 %v738
    %4161 = vmatpush.bf16.msra.mxu0 %v737
    %4162 = vmatmul.bf16.gmra.mxu0 %v4097
    %v4163 = vpop.f32.mrf.mxu0
    %v4164 = vadd.f32 0.0, %v4163
    %v4165 = vpop.f32.mrf.mxu0
    %v4166 = vadd.f32 0.0, %v4165
    %4167 = vmatmul.bf16.gmra.mxu0 %v4098
    %v4168 = vpop.f32.mrf.mxu0
    %v4169 = vadd.f32 0.0, %v4168
    %v4170 = vpop.f32.mrf.mxu0
    %v4171 = vadd.f32 0.0, %v4170
    %4172 = vmatmul.bf16.gmra.mxu0 %v4099
    %v4173 = vpop.f32.mrf.mxu0
    %v4174 = vadd.f32 0.0, %v4173
    %v4175 = vpop.f32.mrf.mxu0
    %v4176 = vadd.f32 0.0, %v4175
    %4177 = vmatmul.bf16.gmra.mxu0 %v4100
    %v4178 = vpop.f32.mrf.mxu0
    %v4179 = vadd.f32 0.0, %v4178
    %v4180 = vpop.f32.mrf.mxu0
    %v4181 = vadd.f32 0.0, %v4180
    %4182 = vmatmul.bf16.gmra.mxu0 %v4101
    %v4183 = vpop.f32.mrf.mxu0
    %v4184 = vadd.f32 0.0, %v4183
    %v4185 = vpop.f32.mrf.mxu0
    %v4186 = vadd.f32 0.0, %v4185
    %4187 = vmatmul.bf16.gmra.mxu0 %v4102
    %v4188 = vpop.f32.mrf.mxu0
    %v4189 = vadd.f32 0.0, %v4188
    %v4190 = vpop.f32.mrf.mxu0
    %v4191 = vadd.f32 0.0, %v4190
    %4192 = vmatmul.bf16.gmra.mxu0 %v4103
    %v4193 = vpop.f32.mrf.mxu0
    %v4194 = vadd.f32 0.0, %v4193
    %v4195 = vpop.f32.mrf.mxu0
    %v4196 = vadd.f32 0.0, %v4195
    %4197 = vmatmul.bf16.gmra.mxu0 %v4104
    %v4198 = vpop.f32.mrf.mxu0
    %v4199 = vadd.f32 0.0, %v4198
    %v4200 = vpop.f32.mrf.mxu0
    %v4201 = vadd.f32 0.0, %v4200
    %4202 = vdwg.mxu0
    %v4203 = vpack.c.bf16 %v4018, %v4017
    %v4204 = vpack.c.bf16 %v4020, %v4019
    %v4205 = vpack.c.bf16 %v4022, %v4021
    %v4206 = vpack.c.bf16 %v4024, %v4023
    %v4207 = vpack.c.bf16 %v4026, %v4025
    %v4208 = vpack.c.bf16 %v4028, %v4027
    %v4209 = vpack.c.bf16 %v4030, %v4029
    %v4210 = vpack.c.bf16 %v4032, %v4031
    %4211 = vmatpush.bf16.msra.mxu0 %v841
    %4212 = vmatpush.bf16.msra.mxu0 %v840
    %4213 = vmatpush.bf16.msra.mxu0 %v839
    %4214 = vmatpush.bf16.msra.mxu0 %v838
    %4215 = vmatpush.bf16.msra.mxu0 %v837
    %4216 = vmatpush.bf16.msra.mxu0 %v836
    %4217 = vmatpush.bf16.msra.mxu0 %v835
    %4218 = vmatpush.bf16.msra.mxu0 %v834
    %4219 = vmatmul.bf16.gmra.mxu0 %v4203
    %v4220 = vpop.f32.mrf.mxu0
    %v4221 = vadd.f32 0.0, %v4220
    %v4222 = vpop.f32.mrf.mxu0
    %v4223 = vadd.f32 0.0, %v4222
    %4224 = vmatmul.bf16.gmra.mxu0 %v4204
    %v4225 = vpop.f32.mrf.mxu0
    %v4226 = vadd.f32 0.0, %v4225
    %v4227 = vpop.f32.mrf.mxu0
    %v4228 = vadd.f32 0.0, %v4227
    %4229 = vmatmul.bf16.gmra.mxu0 %v4205
    %v4230 = vpop.f32.mrf.mxu0
    %v4231 = vadd.f32 0.0, %v4230
    %v4232 = vpop.f32.mrf.mxu0
    %v4233 = vadd.f32 0.0, %v4232
    %4234 = vmatmul.bf16.gmra.mxu0 %v4206
    %v4235 = vpop.f32.mrf.mxu0
    %v4236 = vadd.f32 0.0, %v4235
    %v4237 = vpop.f32.mrf.mxu0
    %v4238 = vadd.f32 0.0, %v4237
    %4239 = vmatmul.bf16.gmra.mxu0 %v4207
    %v4240 = vpop.f32.mrf.mxu0
    %v4241 = vadd.f32 0.0, %v4240
    %v4242 = vpop.f32.mrf.mxu0
    %v4243 = vadd.f32 0.0, %v4242
    %4244 = vmatmul.bf16.gmra.mxu0 %v4208
    %v4245 = vpop.f32.mrf.mxu0
    %v4246 = vadd.f32 0.0, %v4245
    %v4247 = vpop.f32.mrf.mxu0
    %v4248 = vadd.f32 0.0, %v4247
    %4249 = vmatmul.bf16.gmra.mxu0 %v4209
    %v4250 = vpop.f32.mrf.mxu0
    %v4251 = vadd.f32 0.0, %v4250
    %v4252 = vpop.f32.mrf.mxu0
    %v4253 = vadd.f32 0.0, %v4252
    %4254 = vmatmul.bf16.gmra.mxu0 %v4210
    %v4255 = vpop.f32.mrf.mxu0
    %v4256 = vadd.f32 0.0, %v4255
    %v4257 = vpop.f32.mrf.mxu0
    %v4258 = vadd.f32 0.0, %v4257
    %4259 = vdwg.mxu0
    %v4260 = vmul.f32 %v900, %v3704
    %v4261 = vmul.f32 %v900, %v3705
    %v4262 = vmul.f32 %v900, %v3706
    %v4263 = vmul.f32 %v900, %v3707
    %v4264 = vmul.f32 %v900, %v3708
    %v4265 = vmul.f32 %v900, %v3709
    %v4266 = vmul.f32 %v900, %v3710
    %v4267 = vmul.f32 %v900, %v3711
    %v4268 = vmul.f32 %v900, %v3712
    %v4269 = vmul.f32 %v900, %v3713
    %v4270 = vmul.f32 %v900, %v3714
    %v4271 = vmul.f32 %v900, %v3715
    %v4272 = vmul.f32 %v900, %v3716
    %v4273 = vmul.f32 %v900, %v3717
    %v4274 = vmul.f32 %v900, %v3718
    %v4275 = vmul.f32 %v900, %v3719
    %v4276 = vadd.f32 %v4260, %v4164
    %v4277 = vadd.f32 %v4261, %v4166
    %v4278 = vadd.f32 %v4262, %v4169
    %v4279 = vadd.f32 %v4263, %v4171
    %v4280 = vadd.f32 %v4264, %v4174
    %v4281 = vadd.f32 %v4265, %v4176
    %v4282 = vadd.f32 %v4266, %v4179
    %v4283 = vadd.f32 %v4267, %v4181
    %v4284 = vadd.f32 %v4268, %v4184
    %v4285 = vadd.f32 %v4269, %v4186
    %v4286 = vadd.f32 %v4270, %v4189
    %v4287 = vadd.f32 %v4271, %v4191
    %v4288 = vadd.f32 %v4272, %v4194
    %v4289 = vadd.f32 %v4273, %v4196
    %v4290 = vadd.f32 %v4274, %v4199
    %v4291 = vadd.f32 %v4275, %v4201
    %v4292 = vadd.f32 %v4276, %v920
    %v4293 = vadd.f32 %v4277, %v920
    %v4294 = vadd.f32 %v4278, %v920
    %v4295 = vadd.f32 %v4279, %v920
    %v4296 = vadd.f32 %v4280, %v920
    %v4297 = vadd.f32 %v4281, %v920
    %v4298 = vadd.f32 %v4282, %v920
    %v4299 = vadd.f32 %v4283, %v920
    %v4300 = vadd.f32 %v4284, %v920
    %v4301 = vadd.f32 %v4285, %v920
    %v4302 = vadd.f32 %v4286, %v920
    %v4303 = vadd.f32 %v4287, %v920
    %v4304 = vadd.f32 %v4288, %v920
    %v4305 = vadd.f32 %v4289, %v920
    %v4306 = vadd.f32 %v4290, %v920
    %v4307 = vadd.f32 %v4291, %v920
    %v4308 = vmax.f32 %v4292, 0.0
    %v4309 = vmax.f32 %v4293, 0.0
    %v4310 = vmax.f32 %v4294, 0.0
    %v4311 = vmax.f32 %v4295, 0.0
    %v4312 = vmax.f32 %v4296, 0.0
    %v4313 = vmax.f32 %v4297, 0.0
    %v4314 = vmax.f32 %v4298, 0.0
    %v4315 = vmax.f32 %v4299, 0.0
    %v4316 = vmax.f32 %v4300, 0.0
    %v4317 = vmax.f32 %v4301, 0.0
    %v4318 = vmax.f32 %v4302, 0.0
    %v4319 = vmax.f32 %v4303, 0.0
    %v4320 = vmax.f32 %v4304, 0.0
    %v4321 = vmax.f32 %v4305, 0.0
    %v4322 = vmax.f32 %v4306, 0.0
    %v4323 = vmax.f32 %v4307, 0.0
    %v4324 = vmul.f32 %v4308, 0.1
    %v4325 = vmul.f32 %v4309, 0.1
    %v4326 = vmul.f32 %v4310, 0.1
    %v4327 = vmul.f32 %v4311, 0.1
    %v4328 = vmul.f32 %v4312, 0.1
    %v4329 = vmul.f32 %v4313, 0.1
    %v4330 = vmul.f32 %v4314, 0.1
    %v4331 = vmul.f32 %v4315, 0.1
    %v4332 = vmul.f32 %v4316, 0.1
    %v4333 = vmul.f32 %v4317, 0.1
    %v4334 = vmul.f32 %v4318, 0.1
    %v4335 = vmul.f32 %v4319, 0.1
    %v4336 = vmul.f32 %v4320, 0.1
    %v4337 = vmul.f32 %v4321, 0.1
    %v4338 = vmul.f32 %v4322, 0.1
    %v4339 = vmul.f32 %v4323, 0.1
    %v4340 = vadd.f32 %v3672, %v4324
    %v4341 = vadd.f32 %v3673, %v4325
    %v4342 = vadd.f32 %v3674, %v4326
    %v4343 = vadd.f32 %v3675, %v4327
    %v4344 = vadd.f32 %v3676, %v4328
    %v4345 = vadd.f32 %v3677, %v4329
    %v4346 = vadd.f32 %v3678, %v4330
    %v4347 = vadd.f32 %v3679, %v4331
    %v4348 = vadd.f32 %v3680, %v4332
    %v4349 = vadd.f32 %v3681, %v4333
    %v4350 = vadd.f32 %v3682, %v4334
    %v4351 = vadd.f32 %v3683, %v4335
    %v4352 = vadd.f32 %v3684, %v4336
    %v4353 = vadd.f32 %v3685, %v4337
    %v4354 = vadd.f32 %v3686, %v4338
    %v4355 = vadd.f32 %v3687, %v4339
    %v4356 = vmul.f32 %v4340, 0.1
    %v4357 = vmul.f32 %v4341, 0.1
    %v4358 = vmul.f32 %v4342, 0.1
    %v4359 = vmul.f32 %v4343, 0.1
    %v4360 = vmul.f32 %v4344, 0.1
    %v4361 = vmul.f32 %v4345, 0.1
    %v4362 = vmul.f32 %v4346, 0.1
    %v4363 = vmul.f32 %v4347, 0.1
    %v4364 = vmul.f32 %v4348, 0.1
    %v4365 = vmul.f32 %v4349, 0.1
    %v4366 = vmul.f32 %v4350, 0.1
    %v4367 = vmul.f32 %v4351, 0.1
    %v4368 = vmul.f32 %v4352, 0.1
    %v4369 = vmul.f32 %v4353, 0.1
    %v4370 = vmul.f32 %v4354, 0.1
    %v4371 = vmul.f32 %v4355, 0.1
    %v4372 = vadd.f32 %v3704, %v4356
    %v4373 = vadd.f32 %v3705, %v4357
    %v4374 = vadd.f32 %v3706, %v4358
    %v4375 = vadd.f32 %v3707, %v4359
    %v4376 = vadd.f32 %v3708, %v4360
    %v4377 = vadd.f32 %v3709, %v4361
    %v4378 = vadd.f32 %v3710, %v4362
    %v4379 = vadd.f32 %v3711, %v4363
    %v4380 = vadd.f32 %v3712, %v4364
    %v4381 = vadd.f32 %v3713, %v4365
    %v4382 = vadd.f32 %v3714, %v4366
    %v4383 = vadd.f32 %v3715, %v4367
    %v4384 = vadd.f32 %v3716, %v4368
    %v4385 = vadd.f32 %v3717, %v4369
    %v4386 = vadd.f32 %v3718, %v4370
    %v4387 = vadd.f32 %v3719, %v4371
    %v4388 = vmul.f32 %v1019, %v3832
    %v4389 = vmul.f32 %v1019, %v3833
    %v4390 = vmul.f32 %v1019, %v3834
    %v4391 = vmul.f32 %v1019, %v3835
    %v4392 = vmul.f32 %v1019, %v3836
    %v4393 = vmul.f32 %v1019, %v3837
    %v4394 = vmul.f32 %v1019, %v3838
    %v4395 = vmul.f32 %v1019, %v3839
    %v4396 = vmul.f32 %v1019, %v3840
    %v4397 = vmul.f32 %v1019, %v3841
    %v4398 = vmul.f32 %v1019, %v3842
    %v4399 = vmul.f32 %v1019, %v3843
    %v4400 = vmul.f32 %v1019, %v3844
    %v4401 = vmul.f32 %v1019, %v3845
    %v4402 = vmul.f32 %v1019, %v3846
    %v4403 = vmul.f32 %v1019, %v3847
    %v4404 = vadd.f32 %v4388, %v4221
    %v4405 = vadd.f32 %v4389, %v4223
    %v4406 = vadd.f32 %v4390, %v4226
    %v4407 = vadd.f32 %v4391, %v4228
    %v4408 = vadd.f32 %v4392, %v4231
    %v4409 = vadd.f32 %v4393, %v4233
    %v4410 = vadd.f32 %v4394, %v4236
    %v4411 = vadd.f32 %v4395, %v4238
    %v4412 = vadd.f32 %v4396, %v4241
    %v4413 = vadd.f32 %v4397, %v4243
    %v4414 = vadd.f32 %v4398, %v4246
    %v4415 = vadd.f32 %v4399, %v4248
    %v4416 = vadd.f32 %v4400, %v4251
    %v4417 = vadd.f32 %v4401, %v4253
    %v4418 = vadd.f32 %v4402, %v4256
    %v4419 = vadd.f32 %v4403, %v4258
    %v4420 = vadd.f32 %v4404, %v1039
    %v4421 = vadd.f32 %v4405, %v1039
    %v4422 = vadd.f32 %v4406, %v1039
    %v4423 = vadd.f32 %v4407, %v1039
    %v4424 = vadd.f32 %v4408, %v1039
    %v4425 = vadd.f32 %v4409, %v1039
    %v4426 = vadd.f32 %v4410, %v1039
    %v4427 = vadd.f32 %v4411, %v1039
    %v4428 = vadd.f32 %v4412, %v1039
    %v4429 = vadd.f32 %v4413, %v1039
    %v4430 = vadd.f32 %v4414, %v1039
    %v4431 = vadd.f32 %v4415, %v1039
    %v4432 = vadd.f32 %v4416, %v1039
    %v4433 = vadd.f32 %v4417, %v1039
    %v4434 = vadd.f32 %v4418, %v1039
    %v4435 = vadd.f32 %v4419, %v1039
    %v4436 = vmax.f32 %v4420, 0.0
    %v4437 = vmax.f32 %v4421, 0.0
    %v4438 = vmax.f32 %v4422, 0.0
    %v4439 = vmax.f32 %v4423, 0.0
    %v4440 = vmax.f32 %v4424, 0.0
    %v4441 = vmax.f32 %v4425, 0.0
    %v4442 = vmax.f32 %v4426, 0.0
    %v4443 = vmax.f32 %v4427, 0.0
    %v4444 = vmax.f32 %v4428, 0.0
    %v4445 = vmax.f32 %v4429, 0.0
    %v4446 = vmax.f32 %v4430, 0.0
    %v4447 = vmax.f32 %v4431, 0.0
    %v4448 = vmax.f32 %v4432, 0.0
    %v4449 = vmax.f32 %v4433, 0.0
    %v4450 = vmax.f32 %v4434, 0.0
    %v4451 = vmax.f32 %v4435, 0.0
    %v4452 = vmul.f32 %v4436, 0.1
    %v4453 = vmul.f32 %v4437, 0.1
    %v4454 = vmul.f32 %v4438, 0.1
    %v4455 = vmul.f32 %v4439, 0.1
    %v4456 = vmul.f32 %v4440, 0.1
    %v4457 = vmul.f32 %v4441, 0.1
    %v4458 = vmul.f32 %v4442, 0.1
    %v4459 = vmul.f32 %v4443, 0.1
    %v4460 = vmul.f32 %v4444, 0.1
    %v4461 = vmul.f32 %v4445, 0.1
    %v4462 = vmul.f32 %v4446, 0.1
    %v4463 = vmul.f32 %v4447, 0.1
    %v4464 = vmul.f32 %v4448, 0.1
    %v4465 = vmul.f32 %v4449, 0.1
    %v4466 = vmul.f32 %v4450, 0.1
    %v4467 = vmul.f32 %v4451, 0.1
    %v4468 = vadd.f32 %v3800, %v4452
    %v4469 = vadd.f32 %v3801, %v4453
    %v4470 = vadd.f32 %v3802, %v4454
    %v4471 = vadd.f32 %v3803, %v4455
    %v4472 = vadd.f32 %v3804, %v4456
    %v4473 = vadd.f32 %v3805, %v4457
    %v4474 = vadd.f32 %v3806, %v4458
    %v4475 = vadd.f32 %v3807, %v4459
    %v4476 = vadd.f32 %v3808, %v4460
    %v4477 = vadd.f32 %v3809, %v4461
    %v4478 = vadd.f32 %v3810, %v4462
    %v4479 = vadd.f32 %v3811, %v4463
    %v4480 = vadd.f32 %v3812, %v4464
    %v4481 = vadd.f32 %v3813, %v4465
    %v4482 = vadd.f32 %v3814, %v4466
    %v4483 = vadd.f32 %v3815, %v4467
    %v4484 = vmul.f32 %v4468, 0.1
    %v4485 = vmul.f32 %v4469, 0.1
    %v4486 = vmul.f32 %v4470, 0.1
    %v4487 = vmul.f32 %v4471, 0.1
    %v4488 = vmul.f32 %v4472, 0.1
    %v4489 = vmul.f32 %v4473, 0.1
    %v4490 = vmul.f32 %v4474, 0.1
    %v4491 = vmul.f32 %v4475, 0.1
    %v4492 = vmul.f32 %v4476, 0.1
    %v4493 = vmul.f32 %v4477, 0.1
    %v4494 = vmul.f32 %v4478, 0.1
    %v4495 = vmul.f32 %v4479, 0.1
    %v4496 = vmul.f32 %v4480, 0.1
    %v4497 = vmul.f32 %v4481, 0.1
    %v4498 = vmul.f32 %v4482, 0.1
    %v4499 = vmul.f32 %v4483, 0.1
    %v4500 = vadd.f32 %v3832, %v4484
    %v4501 = vadd.f32 %v3833, %v4485
    %v4502 = vadd.f32 %v3834, %v4486
    %v4503 = vadd.f32 %v3835, %v4487
    %v4504 = vadd.f32 %v3836, %v4488
    %v4505 = vadd.f32 %v3837, %v4489
    %v4506 = vadd.f32 %v3838, %v4490
    %v4507 = vadd.f32 %v3839, %v4491
    %v4508 = vadd.f32 %v3840, %v4492
    %v4509 = vadd.f32 %v3841, %v4493
    %v4510 = vadd.f32 %v3842, %v4494
    %v4511 = vadd.f32 %v3843, %v4495
    %v4512 = vadd.f32 %v3844, %v4496
    %v4513 = vadd.f32 %v3845, %v4497
    %v4514 = vadd.f32 %v3846, %v4498
    %v4515 = vadd.f32 %v3847, %v4499
    %v4516 = vpack.c.bf16 %v4373, %v4372
    %v4517 = vpack.c.bf16 %v4375, %v4374
    %v4518 = vpack.c.bf16 %v4377, %v4376
    %v4519 = vpack.c.bf16 %v4379, %v4378
    %v4520 = vpack.c.bf16 %v4381, %v4380
    %v4521 = vpack.c.bf16 %v4383, %v4382
    %v4522 = vpack.c.bf16 %v4385, %v4384
    %v4523 = vpack.c.bf16 %v4387, %v4386
    %4524 = vmatpush.bf16.msra.mxu0 %v1184
    %4525 = vmatpush.bf16.msra.mxu0 %v1183
    %4526 = vmatpush.bf16.msra.mxu0 %v1182
    %4527 = vmatpush.bf16.msra.mxu0 %v1181
    %4528 = vmatpush.bf16.msra.mxu0 %v1180
    %4529 = vmatpush.bf16.msra.mxu0 %v1179
    %4530 = vmatpush.bf16.msra.mxu0 %v1178
    %4531 = vmatpush.bf16.msra.mxu0 %v1177
    %4532 = vmatmul.bf16.gmra.mxu0 %v4516
    %v4533 = vpop.f32.mrf.mxu0
    %v4534 = vadd.f32 0.0, %v4533
    %v4535 = vpop.f32.mrf.mxu0
    %v4536 = vadd.f32 0.0, %v4535
    %4537 = vmatmul.bf16.gmra.mxu0 %v4517
    %v4538 = vpop.f32.mrf.mxu0
    %v4539 = vadd.f32 0.0, %v4538
    %v4540 = vpop.f32.mrf.mxu0
    %v4541 = vadd.f32 0.0, %v4540
    %4542 = vmatmul.bf16.gmra.mxu0 %v4518
    %v4543 = vpop.f32.mrf.mxu0
    %v4544 = vadd.f32 0.0, %v4543
    %v4545 = vpop.f32.mrf.mxu0
    %v4546 = vadd.f32 0.0, %v4545
    %4547 = vmatmul.bf16.gmra.mxu0 %v4519
    %v4548 = vpop.f32.mrf.mxu0
    %v4549 = vadd.f32 0.0, %v4548
    %v4550 = vpop.f32.mrf.mxu0
    %v4551 = vadd.f32 0.0, %v4550
    %4552 = vmatmul.bf16.gmra.mxu0 %v4520
    %v4553 = vpop.f32.mrf.mxu0
    %v4554 = vadd.f32 0.0, %v4553
    %v4555 = vpop.f32.mrf.mxu0
    %v4556 = vadd.f32 0.0, %v4555
    %4557 = vmatmul.bf16.gmra.mxu0 %v4521
    %v4558 = vpop.f32.mrf.mxu0
    %v4559 = vadd.f32 0.0, %v4558
    %v4560 = vpop.f32.mrf.mxu0
    %v4561 = vadd.f32 0.0, %v4560
    %4562 = vmatmul.bf16.gmra.mxu0 %v4522
    %v4563 = vpop.f32.mrf.mxu0
    %v4564 = vadd.f32 0.0, %v4563
    %v4565 = vpop.f32.mrf.mxu0
    %v4566 = vadd.f32 0.0, %v4565
    %4567 = vmatmul.bf16.gmra.mxu0 %v4523
    %v4568 = vpop.f32.mrf.mxu0
    %v4569 = vadd.f32 0.0, %v4568
    %v4570 = vpop.f32.mrf.mxu0
    %v4571 = vadd.f32 0.0, %v4570
    %4572 = vdwg.mxu0
    %v4573 = vmul.f32 %v1243, %v4017
    %v4574 = vmul.f32 %v1243, %v4018
    %v4575 = vmul.f32 %v1243, %v4019
    %v4576 = vmul.f32 %v1243, %v4020
    %v4577 = vmul.f32 %v1243, %v4021
    %v4578 = vmul.f32 %v1243, %v4022
    %v4579 = vmul.f32 %v1243, %v4023
    %v4580 = vmul.f32 %v1243, %v4024
    %v4581 = vmul.f32 %v1243, %v4025
    %v4582 = vmul.f32 %v1243, %v4026
    %v4583 = vmul.f32 %v1243, %v4027
    %v4584 = vmul.f32 %v1243, %v4028
    %v4585 = vmul.f32 %v1243, %v4029
    %v4586 = vmul.f32 %v1243, %v4030
    %v4587 = vmul.f32 %v1243, %v4031
    %v4588 = vmul.f32 %v1243, %v4032
    %v4589 = vadd.f32 %v4573, %v4534
    %v4590 = vadd.f32 %v4574, %v4536
    %v4591 = vadd.f32 %v4575, %v4539
    %v4592 = vadd.f32 %v4576, %v4541
    %v4593 = vadd.f32 %v4577, %v4544
    %v4594 = vadd.f32 %v4578, %v4546
    %v4595 = vadd.f32 %v4579, %v4549
    %v4596 = vadd.f32 %v4580, %v4551
    %v4597 = vadd.f32 %v4581, %v4554
    %v4598 = vadd.f32 %v4582, %v4556
    %v4599 = vadd.f32 %v4583, %v4559
    %v4600 = vadd.f32 %v4584, %v4561
    %v4601 = vadd.f32 %v4585, %v4564
    %v4602 = vadd.f32 %v4586, %v4566
    %v4603 = vadd.f32 %v4587, %v4569
    %v4604 = vadd.f32 %v4588, %v4571
    %v4605 = vadd.f32 %v4589, %v1263
    %v4606 = vadd.f32 %v4590, %v1263
    %v4607 = vadd.f32 %v4591, %v1263
    %v4608 = vadd.f32 %v4592, %v1263
    %v4609 = vadd.f32 %v4593, %v1263
    %v4610 = vadd.f32 %v4594, %v1263
    %v4611 = vadd.f32 %v4595, %v1263
    %v4612 = vadd.f32 %v4596, %v1263
    %v4613 = vadd.f32 %v4597, %v1263
    %v4614 = vadd.f32 %v4598, %v1263
    %v4615 = vadd.f32 %v4599, %v1263
    %v4616 = vadd.f32 %v4600, %v1263
    %v4617 = vadd.f32 %v4601, %v1263
    %v4618 = vadd.f32 %v4602, %v1263
    %v4619 = vadd.f32 %v4603, %v1263
    %v4620 = vadd.f32 %v4604, %v1263
    %v4621 = vmax.f32 %v4605, 0.0
    %v4622 = vmax.f32 %v4606, 0.0
    %v4623 = vmax.f32 %v4607, 0.0
    %v4624 = vmax.f32 %v4608, 0.0
    %v4625 = vmax.f32 %v4609, 0.0
    %v4626 = vmax.f32 %v4610, 0.0
    %v4627 = vmax.f32 %v4611, 0.0
    %v4628 = vmax.f32 %v4612, 0.0
    %v4629 = vmax.f32 %v4613, 0.0
    %v4630 = vmax.f32 %v4614, 0.0
    %v4631 = vmax.f32 %v4615, 0.0
    %v4632 = vmax.f32 %v4616, 0.0
    %v4633 = vmax.f32 %v4617, 0.0
    %v4634 = vmax.f32 %v4618, 0.0
    %v4635 = vmax.f32 %v4619, 0.0
    %v4636 = vmax.f32 %v4620, 0.0
    %v4637 = vmul.f32 %v4621, 0.1
    %v4638 = vmul.f32 %v4622, 0.1
    %v4639 = vmul.f32 %v4623, 0.1
    %v4640 = vmul.f32 %v4624, 0.1
    %v4641 = vmul.f32 %v4625, 0.1
    %v4642 = vmul.f32 %v4626, 0.1
    %v4643 = vmul.f32 %v4627, 0.1
    %v4644 = vmul.f32 %v4628, 0.1
    %v4645 = vmul.f32 %v4629, 0.1
    %v4646 = vmul.f32 %v4630, 0.1
    %v4647 = vmul.f32 %v4631, 0.1
    %v4648 = vmul.f32 %v4632, 0.1
    %v4649 = vmul.f32 %v4633, 0.1
    %v4650 = vmul.f32 %v4634, 0.1
    %v4651 = vmul.f32 %v4635, 0.1
    %v4652 = vmul.f32 %v4636, 0.1
    %v4653 = vadd.f32 %v3985, %v4637
    %v4654 = vadd.f32 %v3986, %v4638
    %v4655 = vadd.f32 %v3987, %v4639
    %v4656 = vadd.f32 %v3988, %v4640
    %v4657 = vadd.f32 %v3989, %v4641
    %v4658 = vadd.f32 %v3990, %v4642
    %v4659 = vadd.f32 %v3991, %v4643
    %v4660 = vadd.f32 %v3992, %v4644
    %v4661 = vadd.f32 %v3993, %v4645
    %v4662 = vadd.f32 %v3994, %v4646
    %v4663 = vadd.f32 %v3995, %v4647
    %v4664 = vadd.f32 %v3996, %v4648
    %v4665 = vadd.f32 %v3997, %v4649
    %v4666 = vadd.f32 %v3998, %v4650
    %v4667 = vadd.f32 %v3999, %v4651
    %v4668 = vadd.f32 %v4000, %v4652
    %v4669 = vmul.f32 %v4653, 0.1
    %v4670 = vmul.f32 %v4654, 0.1
    %v4671 = vmul.f32 %v4655, 0.1
    %v4672 = vmul.f32 %v4656, 0.1
    %v4673 = vmul.f32 %v4657, 0.1
    %v4674 = vmul.f32 %v4658, 0.1
    %v4675 = vmul.f32 %v4659, 0.1
    %v4676 = vmul.f32 %v4660, 0.1
    %v4677 = vmul.f32 %v4661, 0.1
    %v4678 = vmul.f32 %v4662, 0.1
    %v4679 = vmul.f32 %v4663, 0.1
    %v4680 = vmul.f32 %v4664, 0.1
    %v4681 = vmul.f32 %v4665, 0.1
    %v4682 = vmul.f32 %v4666, 0.1
    %v4683 = vmul.f32 %v4667, 0.1
    %v4684 = vmul.f32 %v4668, 0.1
    %v4685 = vadd.f32 %v4017, %v4669
    %v4686 = vadd.f32 %v4018, %v4670
    %v4687 = vadd.f32 %v4019, %v4671
    %v4688 = vadd.f32 %v4020, %v4672
    %v4689 = vadd.f32 %v4021, %v4673
    %v4690 = vadd.f32 %v4022, %v4674
    %v4691 = vadd.f32 %v4023, %v4675
    %v4692 = vadd.f32 %v4024, %v4676
    %v4693 = vadd.f32 %v4025, %v4677
    %v4694 = vadd.f32 %v4026, %v4678
    %v4695 = vadd.f32 %v4027, %v4679
    %v4696 = vadd.f32 %v4028, %v4680
    %v4697 = vadd.f32 %v4029, %v4681
    %v4698 = vadd.f32 %v4030, %v4682
    %v4699 = vadd.f32 %v4031, %v4683
    %v4700 = vadd.f32 %v4032, %v4684
    %v4701 = vmul.f32 %v4115, 0.1
    %v4702 = vmul.f32 %v4117, 0.1
    %v4703 = vmul.f32 %v4120, 0.1
    %v4704 = vmul.f32 %v4122, 0.1
    %v4705 = vmul.f32 %v4125, 0.1
    %v4706 = vmul.f32 %v4127, 0.1
    %v4707 = vmul.f32 %v4130, 0.1
    %v4708 = vmul.f32 %v4132, 0.1
    %v4709 = vmul.f32 %v4135, 0.1
    %v4710 = vmul.f32 %v4137, 0.1
    %v4711 = vmul.f32 %v4140, 0.1
    %v4712 = vmul.f32 %v4142, 0.1
    %v4713 = vmul.f32 %v4145, 0.1
    %v4714 = vmul.f32 %v4147, 0.1
    %v4715 = vmul.f32 %v4150, 0.1
    %v4716 = vmul.f32 %v4152, 0.1
    %v4717 = vsub.f32 %v4049, %v4701
    %v4718 = vsub.f32 %v4050, %v4702
    %v4719 = vsub.f32 %v4051, %v4703
    %v4720 = vsub.f32 %v4052, %v4704
    %v4721 = vsub.f32 %v4053, %v4705
    %v4722 = vsub.f32 %v4054, %v4706
    %v4723 = vsub.f32 %v4055, %v4707
    %v4724 = vsub.f32 %v4056, %v4708
    %v4725 = vsub.f32 %v4057, %v4709
    %v4726 = vsub.f32 %v4058, %v4710
    %v4727 = vsub.f32 %v4059, %v4711
    %v4728 = vsub.f32 %v4060, %v4712
    %v4729 = vsub.f32 %v4061, %v4713
    %v4730 = vsub.f32 %v4062, %v4714
    %v4731 = vsub.f32 %v4063, %v4715
    %v4732 = vsub.f32 %v4064, %v4716
    %v4733 = vmul.f32 %v4717, 0.1
    %v4734 = vmul.f32 %v4718, 0.1
    %v4735 = vmul.f32 %v4719, 0.1
    %v4736 = vmul.f32 %v4720, 0.1
    %v4737 = vmul.f32 %v4721, 0.1
    %v4738 = vmul.f32 %v4722, 0.1
    %v4739 = vmul.f32 %v4723, 0.1
    %v4740 = vmul.f32 %v4724, 0.1
    %v4741 = vmul.f32 %v4725, 0.1
    %v4742 = vmul.f32 %v4726, 0.1
    %v4743 = vmul.f32 %v4727, 0.1
    %v4744 = vmul.f32 %v4728, 0.1
    %v4745 = vmul.f32 %v4729, 0.1
    %v4746 = vmul.f32 %v4730, 0.1
    %v4747 = vmul.f32 %v4731, 0.1
    %v4748 = vmul.f32 %v4732, 0.1
    %v4749 = vadd.f32 %v4081, %v4733
    %v4750 = vadd.f32 %v4082, %v4734
    %v4751 = vadd.f32 %v4083, %v4735
    %v4752 = vadd.f32 %v4084, %v4736
    %v4753 = vadd.f32 %v4085, %v4737
    %v4754 = vadd.f32 %v4086, %v4738
    %v4755 = vadd.f32 %v4087, %v4739
    %v4756 = vadd.f32 %v4088, %v4740
    %v4757 = vadd.f32 %v4089, %v4741
    %v4758 = vadd.f32 %v4090, %v4742
    %v4759 = vadd.f32 %v4091, %v4743
    %v4760 = vadd.f32 %v4092, %v4744
    %v4761 = vadd.f32 %v4093, %v4745
    %v4762 = vadd.f32 %v4094, %v4746
    %v4763 = vadd.f32 %v4095, %v4747
    %v4764 = vadd.f32 %v4096, %v4748
    %v4765 = vpack.c.bf16 %v4750, %v4749
    %v4766 = vpack.c.bf16 %v4752, %v4751
    %v4767 = vpack.c.bf16 %v4754, %v4753
    %v4768 = vpack.c.bf16 %v4756, %v4755
    %v4769 = vpack.c.bf16 %v4758, %v4757
    %v4770 = vpack.c.bf16 %v4760, %v4759
    %v4771 = vpack.c.bf16 %v4762, %v4761
    %v4772 = vpack.c.bf16 %v4764, %v4763
    %4773 = vmatpush.bf16.msra.mxu0 %v744
    %4774 = vmatpush.bf16.msra.mxu0 %v743
    %4775 = vmatpush.bf16.msra.mxu0 %v742
    %4776 = vmatpush.bf16.msra.mxu0 %v741
    %4777 = vmatpush.bf16.msra.mxu0 %v740
    %4778 = vmatpush.bf16.msra.mxu0 %v739
    %4779 = vmatpush.bf16.msra.mxu0 %v738
    %4780 = vmatpush.bf16.msra.mxu0 %v737
    %4781 = vmatmul.bf16.gmra.mxu0 %v4765
    %v4782 = vpop.f32.mrf.mxu0
    %v4783 = vadd.f32 0.0, %v4782
    %v4784 = vpop.f32.mrf.mxu0
    %v4785 = vadd.f32 0.0, %v4784
    %4786 = vmatmul.bf16.gmra.mxu0 %v4766
    %v4787 = vpop.f32.mrf.mxu0
    %v4788 = vadd.f32 0.0, %v4787
    %v4789 = vpop.f32.mrf.mxu0
    %v4790 = vadd.f32 0.0, %v4789
    %4791 = vmatmul.bf16.gmra.mxu0 %v4767
    %v4792 = vpop.f32.mrf.mxu0
    %v4793 = vadd.f32 0.0, %v4792
    %v4794 = vpop.f32.mrf.mxu0
    %v4795 = vadd.f32 0.0, %v4794
    %4796 = vmatmul.bf16.gmra.mxu0 %v4768
    %v4797 = vpop.f32.mrf.mxu0
    %v4798 = vadd.f32 0.0, %v4797
    %v4799 = vpop.f32.mrf.mxu0
    %v4800 = vadd.f32 0.0, %v4799
    %4801 = vmatmul.bf16.gmra.mxu0 %v4769
    %v4802 = vpop.f32.mrf.mxu0
    %v4803 = vadd.f32 0.0, %v4802
    %v4804 = vpop.f32.mrf.mxu0
    %v4805 = vadd.f32 0.0, %v4804
    %4806 = vmatmul.bf16.gmra.mxu0 %v4770
    %v4807 = vpop.f32.mrf.mxu0
    %v4808 = vadd.f32 0.0, %v4807
    %v4809 = vpop.f32.mrf.mxu0
    %v4810 = vadd.f32 0.0, %v4809
    %4811 = vmatmul.bf16.gmra.mxu0 %v4771
    %v4812 = vpop.f32.mrf.mxu0
    %v4813 = vadd.f32 0.0, %v4812
    %v4814 = vpop.f32.mrf.mxu0
    %v4815 = vadd.f32 0.0, %v4814
    %4816 = vmatmul.bf16.gmra.mxu0 %v4772
    %v4817 = vpop.f32.mrf.mxu0
    %v4818 = vadd.f32 0.0, %v4817
    %v4819 = vpop.f32.mrf.mxu0
    %v4820 = vadd.f32 0.0, %v4819
    %4821 = vdwg.mxu0
    %v4822 = vpack.c.bf16 %v4686, %v4685
    %v4823 = vpack.c.bf16 %v4688, %v4687
    %v4824 = vpack.c.bf16 %v4690, %v4689
    %v4825 = vpack.c.bf16 %v4692, %v4691
    %v4826 = vpack.c.bf16 %v4694, %v4693
    %v4827 = vpack.c.bf16 %v4696, %v4695
    %v4828 = vpack.c.bf16 %v4698, %v4697
    %v4829 = vpack.c.bf16 %v4700, %v4699
    %4830 = vmatpush.bf16.msra.mxu0 %v841
    %4831 = vmatpush.bf16.msra.mxu0 %v840
    %4832 = vmatpush.bf16.msra.mxu0 %v839
    %4833 = vmatpush.bf16.msra.mxu0 %v838
    %4834 = vmatpush.bf16.msra.mxu0 %v837
    %4835 = vmatpush.bf16.msra.mxu0 %v836
    %4836 = vmatpush.bf16.msra.mxu0 %v835
    %4837 = vmatpush.bf16.msra.mxu0 %v834
    %4838 = vmatmul.bf16.gmra.mxu0 %v4822
    %v4839 = vpop.f32.mrf.mxu0
    %v4840 = vadd.f32 0.0, %v4839
    %v4841 = vpop.f32.mrf.mxu0
    %v4842 = vadd.f32 0.0, %v4841
    %4843 = vmatmul.bf16.gmra.mxu0 %v4823
    %v4844 = vpop.f32.mrf.mxu0
    %v4845 = vadd.f32 0.0, %v4844
    %v4846 = vpop.f32.mrf.mxu0
    %v4847 = vadd.f32 0.0, %v4846
    %4848 = vmatmul.bf16.gmra.mxu0 %v4824
    %v4849 = vpop.f32.mrf.mxu0
    %v4850 = vadd.f32 0.0, %v4849
    %v4851 = vpop.f32.mrf.mxu0
    %v4852 = vadd.f32 0.0, %v4851
    %4853 = vmatmul.bf16.gmra.mxu0 %v4825
    %v4854 = vpop.f32.mrf.mxu0
    %v4855 = vadd.f32 0.0, %v4854
    %v4856 = vpop.f32.mrf.mxu0
    %v4857 = vadd.f32 0.0, %v4856
    %4858 = vmatmul.bf16.gmra.mxu0 %v4826
    %v4859 = vpop.f32.mrf.mxu0
    %v4860 = vadd.f32 0.0, %v4859
    %v4861 = vpop.f32.mrf.mxu0
    %v4862 = vadd.f32 0.0, %v4861
    %4863 = vmatmul.bf16.gmra.mxu0 %v4827
    %v4864 = vpop.f32.mrf.mxu0
    %v4865 = vadd.f32 0.0, %v4864
    %v4866 = vpop.f32.mrf.mxu0
    %v4867 = vadd.f32 0.0, %v4866
    %4868 = vmatmul.bf16.gmra.mxu0 %v4828
    %v4869 = vpop.f32.mrf.mxu0
    %v4870 = vadd.f32 0.0, %v4869
    %v4871 = vpop.f32.mrf.mxu0
    %v4872 = vadd.f32 0.0, %v4871
    %4873 = vmatmul.bf16.gmra.mxu0 %v4829
    %v4874 = vpop.f32.mrf.mxu0
    %v4875 = vadd.f32 0.0, %v4874
    %v4876 = vpop.f32.mrf.mxu0
    %v4877 = vadd.f32 0.0, %v4876
    %4878 = vdwg.mxu0
    %v4879 = vmul.f32 %v900, %v4372
    %v4880 = vmul.f32 %v900, %v4373
    %v4881 = vmul.f32 %v900, %v4374
    %v4882 = vmul.f32 %v900, %v4375
    %v4883 = vmul.f32 %v900, %v4376
    %v4884 = vmul.f32 %v900, %v4377
    %v4885 = vmul.f32 %v900, %v4378
    %v4886 = vmul.f32 %v900, %v4379
    %v4887 = vmul.f32 %v900, %v4380
    %v4888 = vmul.f32 %v900, %v4381
    %v4889 = vmul.f32 %v900, %v4382
    %v4890 = vmul.f32 %v900, %v4383
    %v4891 = vmul.f32 %v900, %v4384
    %v4892 = vmul.f32 %v900, %v4385
    %v4893 = vmul.f32 %v900, %v4386
    %v4894 = vmul.f32 %v900, %v4387
    %v4895 = vadd.f32 %v4879, %v4783
    %v4896 = vadd.f32 %v4880, %v4785
    %v4897 = vadd.f32 %v4881, %v4788
    %v4898 = vadd.f32 %v4882, %v4790
    %v4899 = vadd.f32 %v4883, %v4793
    %v4900 = vadd.f32 %v4884, %v4795
    %v4901 = vadd.f32 %v4885, %v4798
    %v4902 = vadd.f32 %v4886, %v4800
    %v4903 = vadd.f32 %v4887, %v4803
    %v4904 = vadd.f32 %v4888, %v4805
    %v4905 = vadd.f32 %v4889, %v4808
    %v4906 = vadd.f32 %v4890, %v4810
    %v4907 = vadd.f32 %v4891, %v4813
    %v4908 = vadd.f32 %v4892, %v4815
    %v4909 = vadd.f32 %v4893, %v4818
    %v4910 = vadd.f32 %v4894, %v4820
    %v4911 = vadd.f32 %v4895, %v920
    %v4912 = vadd.f32 %v4896, %v920
    %v4913 = vadd.f32 %v4897, %v920
    %v4914 = vadd.f32 %v4898, %v920
    %v4915 = vadd.f32 %v4899, %v920
    %v4916 = vadd.f32 %v4900, %v920
    %v4917 = vadd.f32 %v4901, %v920
    %v4918 = vadd.f32 %v4902, %v920
    %v4919 = vadd.f32 %v4903, %v920
    %v4920 = vadd.f32 %v4904, %v920
    %v4921 = vadd.f32 %v4905, %v920
    %v4922 = vadd.f32 %v4906, %v920
    %v4923 = vadd.f32 %v4907, %v920
    %v4924 = vadd.f32 %v4908, %v920
    %v4925 = vadd.f32 %v4909, %v920
    %v4926 = vadd.f32 %v4910, %v920
    %v4927 = vmax.f32 %v4911, 0.0
    %v4928 = vmax.f32 %v4912, 0.0
    %v4929 = vmax.f32 %v4913, 0.0
    %v4930 = vmax.f32 %v4914, 0.0
    %v4931 = vmax.f32 %v4915, 0.0
    %v4932 = vmax.f32 %v4916, 0.0
    %v4933 = vmax.f32 %v4917, 0.0
    %v4934 = vmax.f32 %v4918, 0.0
    %v4935 = vmax.f32 %v4919, 0.0
    %v4936 = vmax.f32 %v4920, 0.0
    %v4937 = vmax.f32 %v4921, 0.0
    %v4938 = vmax.f32 %v4922, 0.0
    %v4939 = vmax.f32 %v4923, 0.0
    %v4940 = vmax.f32 %v4924, 0.0
    %v4941 = vmax.f32 %v4925, 0.0
    %v4942 = vmax.f32 %v4926, 0.0
    %v4943 = vmul.f32 %v4927, 0.1
    %v4944 = vmul.f32 %v4928, 0.1
    %v4945 = vmul.f32 %v4929, 0.1
    %v4946 = vmul.f32 %v4930, 0.1
    %v4947 = vmul.f32 %v4931, 0.1
    %v4948 = vmul.f32 %v4932, 0.1
    %v4949 = vmul.f32 %v4933, 0.1
    %v4950 = vmul.f32 %v4934, 0.1
    %v4951 = vmul.f32 %v4935, 0.1
    %v4952 = vmul.f32 %v4936, 0.1
    %v4953 = vmul.f32 %v4937, 0.1
    %v4954 = vmul.f32 %v4938, 0.1
    %v4955 = vmul.f32 %v4939, 0.1
    %v4956 = vmul.f32 %v4940, 0.1
    %v4957 = vmul.f32 %v4941, 0.1
    %v4958 = vmul.f32 %v4942, 0.1
    %v4959 = vadd.f32 %v4340, %v4943
    %v4960 = vadd.f32 %v4341, %v4944
    %v4961 = vadd.f32 %v4342, %v4945
    %v4962 = vadd.f32 %v4343, %v4946
    %v4963 = vadd.f32 %v4344, %v4947
    %v4964 = vadd.f32 %v4345, %v4948
    %v4965 = vadd.f32 %v4346, %v4949
    %v4966 = vadd.f32 %v4347, %v4950
    %v4967 = vadd.f32 %v4348, %v4951
    %v4968 = vadd.f32 %v4349, %v4952
    %v4969 = vadd.f32 %v4350, %v4953
    %v4970 = vadd.f32 %v4351, %v4954
    %v4971 = vadd.f32 %v4352, %v4955
    %v4972 = vadd.f32 %v4353, %v4956
    %v4973 = vadd.f32 %v4354, %v4957
    %v4974 = vadd.f32 %v4355, %v4958
    %v4975 = vmul.f32 %v4959, 0.1
    %v4976 = vmul.f32 %v4960, 0.1
    %v4977 = vmul.f32 %v4961, 0.1
    %v4978 = vmul.f32 %v4962, 0.1
    %v4979 = vmul.f32 %v4963, 0.1
    %v4980 = vmul.f32 %v4964, 0.1
    %v4981 = vmul.f32 %v4965, 0.1
    %v4982 = vmul.f32 %v4966, 0.1
    %v4983 = vmul.f32 %v4967, 0.1
    %v4984 = vmul.f32 %v4968, 0.1
    %v4985 = vmul.f32 %v4969, 0.1
    %v4986 = vmul.f32 %v4970, 0.1
    %v4987 = vmul.f32 %v4971, 0.1
    %v4988 = vmul.f32 %v4972, 0.1
    %v4989 = vmul.f32 %v4973, 0.1
    %v4990 = vmul.f32 %v4974, 0.1
    %v4991 = vadd.f32 %v4372, %v4975
    %v4992 = vadd.f32 %v4373, %v4976
    %v4993 = vadd.f32 %v4374, %v4977
    %v4994 = vadd.f32 %v4375, %v4978
    %v4995 = vadd.f32 %v4376, %v4979
    %v4996 = vadd.f32 %v4377, %v4980
    %v4997 = vadd.f32 %v4378, %v4981
    %v4998 = vadd.f32 %v4379, %v4982
    %v4999 = vadd.f32 %v4380, %v4983
    %v5000 = vadd.f32 %v4381, %v4984
    %v5001 = vadd.f32 %v4382, %v4985
    %v5002 = vadd.f32 %v4383, %v4986
    %v5003 = vadd.f32 %v4384, %v4987
    %v5004 = vadd.f32 %v4385, %v4988
    %v5005 = vadd.f32 %v4386, %v4989
    %v5006 = vadd.f32 %v4387, %v4990
    %v5007 = vmul.f32 %v1019, %v4500
    %v5008 = vmul.f32 %v1019, %v4501
    %v5009 = vmul.f32 %v1019, %v4502
    %v5010 = vmul.f32 %v1019, %v4503
    %v5011 = vmul.f32 %v1019, %v4504
    %v5012 = vmul.f32 %v1019, %v4505
    %v5013 = vmul.f32 %v1019, %v4506
    %v5014 = vmul.f32 %v1019, %v4507
    %v5015 = vmul.f32 %v1019, %v4508
    %v5016 = vmul.f32 %v1019, %v4509
    %v5017 = vmul.f32 %v1019, %v4510
    %v5018 = vmul.f32 %v1019, %v4511
    %v5019 = vmul.f32 %v1019, %v4512
    %v5020 = vmul.f32 %v1019, %v4513
    %v5021 = vmul.f32 %v1019, %v4514
    %v5022 = vmul.f32 %v1019, %v4515
    %v5023 = vadd.f32 %v5007, %v4840
    %v5024 = vadd.f32 %v5008, %v4842
    %v5025 = vadd.f32 %v5009, %v4845
    %v5026 = vadd.f32 %v5010, %v4847
    %v5027 = vadd.f32 %v5011, %v4850
    %v5028 = vadd.f32 %v5012, %v4852
    %v5029 = vadd.f32 %v5013, %v4855
    %v5030 = vadd.f32 %v5014, %v4857
    %v5031 = vadd.f32 %v5015, %v4860
    %v5032 = vadd.f32 %v5016, %v4862
    %v5033 = vadd.f32 %v5017, %v4865
    %v5034 = vadd.f32 %v5018, %v4867
    %v5035 = vadd.f32 %v5019, %v4870
    %v5036 = vadd.f32 %v5020, %v4872
    %v5037 = vadd.f32 %v5021, %v4875
    %v5038 = vadd.f32 %v5022, %v4877
    %v5039 = vadd.f32 %v5023, %v1039
    %v5040 = vadd.f32 %v5024, %v1039
    %v5041 = vadd.f32 %v5025, %v1039
    %v5042 = vadd.f32 %v5026, %v1039
    %v5043 = vadd.f32 %v5027, %v1039
    %v5044 = vadd.f32 %v5028, %v1039
    %v5045 = vadd.f32 %v5029, %v1039
    %v5046 = vadd.f32 %v5030, %v1039
    %v5047 = vadd.f32 %v5031, %v1039
    %v5048 = vadd.f32 %v5032, %v1039
    %v5049 = vadd.f32 %v5033, %v1039
    %v5050 = vadd.f32 %v5034, %v1039
    %v5051 = vadd.f32 %v5035, %v1039
    %v5052 = vadd.f32 %v5036, %v1039
    %v5053 = vadd.f32 %v5037, %v1039
    %v5054 = vadd.f32 %v5038, %v1039
    %v5055 = vmax.f32 %v5039, 0.0
    %v5056 = vmax.f32 %v5040, 0.0
    %v5057 = vmax.f32 %v5041, 0.0
    %v5058 = vmax.f32 %v5042, 0.0
    %v5059 = vmax.f32 %v5043, 0.0
    %v5060 = vmax.f32 %v5044, 0.0
    %v5061 = vmax.f32 %v5045, 0.0
    %v5062 = vmax.f32 %v5046, 0.0
    %v5063 = vmax.f32 %v5047, 0.0
    %v5064 = vmax.f32 %v5048, 0.0
    %v5065 = vmax.f32 %v5049, 0.0
    %v5066 = vmax.f32 %v5050, 0.0
    %v5067 = vmax.f32 %v5051, 0.0
    %v5068 = vmax.f32 %v5052, 0.0
    %v5069 = vmax.f32 %v5053, 0.0
    %v5070 = vmax.f32 %v5054, 0.0
    %v5071 = vmul.f32 %v5055, 0.1
    %v5072 = vmul.f32 %v5056, 0.1
    %v5073 = vmul.f32 %v5057, 0.1
    %v5074 = vmul.f32 %v5058, 0.1
    %v5075 = vmul.f32 %v5059, 0.1
    %v5076 = vmul.f32 %v5060, 0.1
    %v5077 = vmul.f32 %v5061, 0.1
    %v5078 = vmul.f32 %v5062, 0.1
    %v5079 = vmul.f32 %v5063, 0.1
    %v5080 = vmul.f32 %v5064, 0.1
    %v5081 = vmul.f32 %v5065, 0.1
    %v5082 = vmul.f32 %v5066, 0.1
    %v5083 = vmul.f32 %v5067, 0.1
    %v5084 = vmul.f32 %v5068, 0.1
    %v5085 = vmul.f32 %v5069, 0.1
    %v5086 = vmul.f32 %v5070, 0.1
    %v5087 = vadd.f32 %v4468, %v5071
    %v5088 = vadd.f32 %v4469, %v5072
    %v5089 = vadd.f32 %v4470, %v5073
    %v5090 = vadd.f32 %v4471, %v5074
    %v5091 = vadd.f32 %v4472, %v5075
    %v5092 = vadd.f32 %v4473, %v5076
    %v5093 = vadd.f32 %v4474, %v5077
    %v5094 = vadd.f32 %v4475, %v5078
    %v5095 = vadd.f32 %v4476, %v5079
    %v5096 = vadd.f32 %v4477, %v5080
    %v5097 = vadd.f32 %v4478, %v5081
    %v5098 = vadd.f32 %v4479, %v5082
    %v5099 = vadd.f32 %v4480, %v5083
    %v5100 = vadd.f32 %v4481, %v5084
    %v5101 = vadd.f32 %v4482, %v5085
    %v5102 = vadd.f32 %v4483, %v5086
    %v5103 = vmul.f32 %v5087, 0.1
    %v5104 = vmul.f32 %v5088, 0.1
    %v5105 = vmul.f32 %v5089, 0.1
    %v5106 = vmul.f32 %v5090, 0.1
    %v5107 = vmul.f32 %v5091, 0.1
    %v5108 = vmul.f32 %v5092, 0.1
    %v5109 = vmul.f32 %v5093, 0.1
    %v5110 = vmul.f32 %v5094, 0.1
    %v5111 = vmul.f32 %v5095, 0.1
    %v5112 = vmul.f32 %v5096, 0.1
    %v5113 = vmul.f32 %v5097, 0.1
    %v5114 = vmul.f32 %v5098, 0.1
    %v5115 = vmul.f32 %v5099, 0.1
    %v5116 = vmul.f32 %v5100, 0.1
    %v5117 = vmul.f32 %v5101, 0.1
    %v5118 = vmul.f32 %v5102, 0.1
    %v5119 = vadd.f32 %v4500, %v5103
    %v5120 = vadd.f32 %v4501, %v5104
    %v5121 = vadd.f32 %v4502, %v5105
    %v5122 = vadd.f32 %v4503, %v5106
    %v5123 = vadd.f32 %v4504, %v5107
    %v5124 = vadd.f32 %v4505, %v5108
    %v5125 = vadd.f32 %v4506, %v5109
    %v5126 = vadd.f32 %v4507, %v5110
    %v5127 = vadd.f32 %v4508, %v5111
    %v5128 = vadd.f32 %v4509, %v5112
    %v5129 = vadd.f32 %v4510, %v5113
    %v5130 = vadd.f32 %v4511, %v5114
    %v5131 = vadd.f32 %v4512, %v5115
    %v5132 = vadd.f32 %v4513, %v5116
    %v5133 = vadd.f32 %v4514, %v5117
    %v5134 = vadd.f32 %v4515, %v5118
    %v5135 = vpack.c.bf16 %v4992, %v4991
    %v5136 = vpack.c.bf16 %v4994, %v4993
    %v5137 = vpack.c.bf16 %v4996, %v4995
    %v5138 = vpack.c.bf16 %v4998, %v4997
    %v5139 = vpack.c.bf16 %v5000, %v4999
    %v5140 = vpack.c.bf16 %v5002, %v5001
    %v5141 = vpack.c.bf16 %v5004, %v5003
    %v5142 = vpack.c.bf16 %v5006, %v5005
    %5143 = vmatpush.bf16.msra.mxu0 %v1184
    %5144 = vmatpush.bf16.msra.mxu0 %v1183
    %5145 = vmatpush.bf16.msra.mxu0 %v1182
    %5146 = vmatpush.bf16.msra.mxu0 %v1181
    %5147 = vmatpush.bf16.msra.mxu0 %v1180
    %5148 = vmatpush.bf16.msra.mxu0 %v1179
    %5149 = vmatpush.bf16.msra.mxu0 %v1178
    %5150 = vmatpush.bf16.msra.mxu0 %v1177
    %5151 = vmatmul.bf16.gmra.mxu0 %v5135
    %v5152 = vpop.f32.mrf.mxu0
    %v5153 = vadd.f32 0.0, %v5152
    %v5154 = vpop.f32.mrf.mxu0
    %v5155 = vadd.f32 0.0, %v5154
    %5156 = vmatmul.bf16.gmra.mxu0 %v5136
    %v5157 = vpop.f32.mrf.mxu0
    %v5158 = vadd.f32 0.0, %v5157
    %v5159 = vpop.f32.mrf.mxu0
    %v5160 = vadd.f32 0.0, %v5159
    %5161 = vmatmul.bf16.gmra.mxu0 %v5137
    %v5162 = vpop.f32.mrf.mxu0
    %v5163 = vadd.f32 0.0, %v5162
    %v5164 = vpop.f32.mrf.mxu0
    %v5165 = vadd.f32 0.0, %v5164
    %5166 = vmatmul.bf16.gmra.mxu0 %v5138
    %v5167 = vpop.f32.mrf.mxu0
    %v5168 = vadd.f32 0.0, %v5167
    %v5169 = vpop.f32.mrf.mxu0
    %v5170 = vadd.f32 0.0, %v5169
    %5171 = vmatmul.bf16.gmra.mxu0 %v5139
    %v5172 = vpop.f32.mrf.mxu0
    %v5173 = vadd.f32 0.0, %v5172
    %v5174 = vpop.f32.mrf.mxu0
    %v5175 = vadd.f32 0.0, %v5174
    %5176 = vmatmul.bf16.gmra.mxu0 %v5140
    %v5177 = vpop.f32.mrf.mxu0
    %v5178 = vadd.f32 0.0, %v5177
    %v5179 = vpop.f32.mrf.mxu0
    %v5180 = vadd.f32 0.0, %v5179
    %5181 = vmatmul.bf16.gmra.mxu0 %v5141
    %v5182 = vpop.f32.mrf.mxu0
    %v5183 = vadd.f32 0.0, %v5182
    %v5184 = vpop.f32.mrf.mxu0
    %v5185 = vadd.f32 0.0, %v5184
    %5186 = vmatmul.bf16.gmra.mxu0 %v5142
    %v5187 = vpop.f32.mrf.mxu0
    %v5188 = vadd.f32 0.0, %v5187
    %v5189 = vpop.f32.mrf.mxu0
    %v5190 = vadd.f32 0.0, %v5189
    %5191 = vdwg.mxu0
    %v5192 = vmul.f32 %v1243, %v4685
    %v5193 = vmul.f32 %v1243, %v4686
    %v5194 = vmul.f32 %v1243, %v4687
    %v5195 = vmul.f32 %v1243, %v4688
    %v5196 = vmul.f32 %v1243, %v4689
    %v5197 = vmul.f32 %v1243, %v4690
    %v5198 = vmul.f32 %v1243, %v4691
    %v5199 = vmul.f32 %v1243, %v4692
    %v5200 = vmul.f32 %v1243, %v4693
    %v5201 = vmul.f32 %v1243, %v4694
    %v5202 = vmul.f32 %v1243, %v4695
    %v5203 = vmul.f32 %v1243, %v4696
    %v5204 = vmul.f32 %v1243, %v4697
    %v5205 = vmul.f32 %v1243, %v4698
    %v5206 = vmul.f32 %v1243, %v4699
    %v5207 = vmul.f32 %v1243, %v4700
    %v5208 = vadd.f32 %v5192, %v5153
    %v5209 = vadd.f32 %v5193, %v5155
    %v5210 = vadd.f32 %v5194, %v5158
    %v5211 = vadd.f32 %v5195, %v5160
    %v5212 = vadd.f32 %v5196, %v5163
    %v5213 = vadd.f32 %v5197, %v5165
    %v5214 = vadd.f32 %v5198, %v5168
    %v5215 = vadd.f32 %v5199, %v5170
    %v5216 = vadd.f32 %v5200, %v5173
    %v5217 = vadd.f32 %v5201, %v5175
    %v5218 = vadd.f32 %v5202, %v5178
    %v5219 = vadd.f32 %v5203, %v5180
    %v5220 = vadd.f32 %v5204, %v5183
    %v5221 = vadd.f32 %v5205, %v5185
    %v5222 = vadd.f32 %v5206, %v5188
    %v5223 = vadd.f32 %v5207, %v5190
    %v5224 = vadd.f32 %v5208, %v1263
    %v5225 = vadd.f32 %v5209, %v1263
    %v5226 = vadd.f32 %v5210, %v1263
    %v5227 = vadd.f32 %v5211, %v1263
    %v5228 = vadd.f32 %v5212, %v1263
    %v5229 = vadd.f32 %v5213, %v1263
    %v5230 = vadd.f32 %v5214, %v1263
    %v5231 = vadd.f32 %v5215, %v1263
    %v5232 = vadd.f32 %v5216, %v1263
    %v5233 = vadd.f32 %v5217, %v1263
    %v5234 = vadd.f32 %v5218, %v1263
    %v5235 = vadd.f32 %v5219, %v1263
    %v5236 = vadd.f32 %v5220, %v1263
    %v5237 = vadd.f32 %v5221, %v1263
    %v5238 = vadd.f32 %v5222, %v1263
    %v5239 = vadd.f32 %v5223, %v1263
    %v5240 = vmax.f32 %v5224, 0.0
    %v5241 = vmax.f32 %v5225, 0.0
    %v5242 = vmax.f32 %v5226, 0.0
    %v5243 = vmax.f32 %v5227, 0.0
    %v5244 = vmax.f32 %v5228, 0.0
    %v5245 = vmax.f32 %v5229, 0.0
    %v5246 = vmax.f32 %v5230, 0.0
    %v5247 = vmax.f32 %v5231, 0.0
    %v5248 = vmax.f32 %v5232, 0.0
    %v5249 = vmax.f32 %v5233, 0.0
    %v5250 = vmax.f32 %v5234, 0.0
    %v5251 = vmax.f32 %v5235, 0.0
    %v5252 = vmax.f32 %v5236, 0.0
    %v5253 = vmax.f32 %v5237, 0.0
    %v5254 = vmax.f32 %v5238, 0.0
    %v5255 = vmax.f32 %v5239, 0.0
    %v5256 = vmul.f32 %v5240, 0.1
    %v5257 = vmul.f32 %v5241, 0.1
    %v5258 = vmul.f32 %v5242, 0.1
    %v5259 = vmul.f32 %v5243, 0.1
    %v5260 = vmul.f32 %v5244, 0.1
    %v5261 = vmul.f32 %v5245, 0.1
    %v5262 = vmul.f32 %v5246, 0.1
    %v5263 = vmul.f32 %v5247, 0.1
    %v5264 = vmul.f32 %v5248, 0.1
    %v5265 = vmul.f32 %v5249, 0.1
    %v5266 = vmul.f32 %v5250, 0.1
    %v5267 = vmul.f32 %v5251, 0.1
    %v5268 = vmul.f32 %v5252, 0.1
    %v5269 = vmul.f32 %v5253, 0.1
    %v5270 = vmul.f32 %v5254, 0.1
    %v5271 = vmul.f32 %v5255, 0.1
    %v5272 = vadd.f32 %v4653, %v5256
    %v5273 = vadd.f32 %v4654, %v5257
    %v5274 = vadd.f32 %v4655, %v5258
    %v5275 = vadd.f32 %v4656, %v5259
    %v5276 = vadd.f32 %v4657, %v5260
    %v5277 = vadd.f32 %v4658, %v5261
    %v5278 = vadd.f32 %v4659, %v5262
    %v5279 = vadd.f32 %v4660, %v5263
    %v5280 = vadd.f32 %v4661, %v5264
    %v5281 = vadd.f32 %v4662, %v5265
    %v5282 = vadd.f32 %v4663, %v5266
    %v5283 = vadd.f32 %v4664, %v5267
    %v5284 = vadd.f32 %v4665, %v5268
    %v5285 = vadd.f32 %v4666, %v5269
    %v5286 = vadd.f32 %v4667, %v5270
    %v5287 = vadd.f32 %v4668, %v5271
    %v5288 = vmul.f32 %v5272, 0.1
    %v5289 = vmul.f32 %v5273, 0.1
    %v5290 = vmul.f32 %v5274, 0.1
    %v5291 = vmul.f32 %v5275, 0.1
    %v5292 = vmul.f32 %v5276, 0.1
    %v5293 = vmul.f32 %v5277, 0.1
    %v5294 = vmul.f32 %v5278, 0.1
    %v5295 = vmul.f32 %v5279, 0.1
    %v5296 = vmul.f32 %v5280, 0.1
    %v5297 = vmul.f32 %v5281, 0.1
    %v5298 = vmul.f32 %v5282, 0.1
    %v5299 = vmul.f32 %v5283, 0.1
    %v5300 = vmul.f32 %v5284, 0.1
    %v5301 = vmul.f32 %v5285, 0.1
    %v5302 = vmul.f32 %v5286, 0.1
    %v5303 = vmul.f32 %v5287, 0.1
    %v5304 = vadd.f32 %v4685, %v5288
    %v5305 = vadd.f32 %v4686, %v5289
    %v5306 = vadd.f32 %v4687, %v5290
    %v5307 = vadd.f32 %v4688, %v5291
    %v5308 = vadd.f32 %v4689, %v5292
    %v5309 = vadd.f32 %v4690, %v5293
    %v5310 = vadd.f32 %v4691, %v5294
    %v5311 = vadd.f32 %v4692, %v5295
    %v5312 = vadd.f32 %v4693, %v5296
    %v5313 = vadd.f32 %v4694, %v5297
    %v5314 = vadd.f32 %v4695, %v5298
    %v5315 = vadd.f32 %v4696, %v5299
    %v5316 = vadd.f32 %v4697, %v5300
    %v5317 = vadd.f32 %v4698, %v5301
    %v5318 = vadd.f32 %v4699, %v5302
    %v5319 = vadd.f32 %v4700, %v5303
    %v5320 = vpack.c.bf16 %v5305, %v5304
    %v5321 = vpack.c.bf16 %v5307, %v5306
    %v5322 = vpack.c.bf16 %v5309, %v5308
    %v5323 = vpack.c.bf16 %v5311, %v5310
    %v5324 = vpack.c.bf16 %v5313, %v5312
    %v5325 = vpack.c.bf16 %v5315, %v5314
    %v5326 = vpack.c.bf16 %v5317, %v5316
    %v5327 = vpack.c.bf16 %v5319, %v5318
    %5328 = vmatpush.bf16.msra.mxu0 %v841
    %5329 = vmatpush.bf16.msra.mxu0 %v840
    %5330 = vmatpush.bf16.msra.mxu0 %v839
    %5331 = vmatpush.bf16.msra.mxu0 %v838
    %5332 = vmatpush.bf16.msra.mxu0 %v837
    %5333 = vmatpush.bf16.msra.mxu0 %v836
    %5334 = vmatpush.bf16.msra.mxu0 %v835
    %5335 = vmatpush.bf16.msra.mxu0 %v834
    %5336 = vmatmul.bf16.gmra.mxu0 %v5320
    %v5337 = vpop.f32.mrf.mxu0
    %v5338 = vadd.f32 0.0, %v5337
    %v5339 = vpop.f32.mrf.mxu0
    %v5340 = vadd.f32 0.0, %v5339
    %5341 = vmatmul.bf16.gmra.mxu0 %v5321
    %v5342 = vpop.f32.mrf.mxu0
    %v5343 = vadd.f32 0.0, %v5342
    %v5344 = vpop.f32.mrf.mxu0
    %v5345 = vadd.f32 0.0, %v5344
    %5346 = vmatmul.bf16.gmra.mxu0 %v5322
    %v5347 = vpop.f32.mrf.mxu0
    %v5348 = vadd.f32 0.0, %v5347
    %v5349 = vpop.f32.mrf.mxu0
    %v5350 = vadd.f32 0.0, %v5349
    %5351 = vmatmul.bf16.gmra.mxu0 %v5323
    %v5352 = vpop.f32.mrf.mxu0
    %v5353 = vadd.f32 0.0, %v5352
    %v5354 = vpop.f32.mrf.mxu0
    %v5355 = vadd.f32 0.0, %v5354
    %5356 = vmatmul.bf16.gmra.mxu0 %v5324
    %v5357 = vpop.f32.mrf.mxu0
    %v5358 = vadd.f32 0.0, %v5357
    %v5359 = vpop.f32.mrf.mxu0
    %v5360 = vadd.f32 0.0, %v5359
    %5361 = vmatmul.bf16.gmra.mxu0 %v5325
    %v5362 = vpop.f32.mrf.mxu0
    %v5363 = vadd.f32 0.0, %v5362
    %v5364 = vpop.f32.mrf.mxu0
    %v5365 = vadd.f32 0.0, %v5364
    %5366 = vmatmul.bf16.gmra.mxu0 %v5326
    %v5367 = vpop.f32.mrf.mxu0
    %v5368 = vadd.f32 0.0, %v5367
    %v5369 = vpop.f32.mrf.mxu0
    %v5370 = vadd.f32 0.0, %v5369
    %5371 = vmatmul.bf16.gmra.mxu0 %v5327
    %v5372 = vpop.f32.mrf.mxu0
    %v5373 = vadd.f32 0.0, %v5372
    %v5374 = vpop.f32.mrf.mxu0
    %v5375 = vadd.f32 0.0, %v5374
    %5376 = vdwg.mxu0
    %v5377 = vmul.f32 %v1019, %v5119
    %v5378 = vmul.f32 %v1019, %v5120
    %v5379 = vmul.f32 %v1019, %v5121
    %v5380 = vmul.f32 %v1019, %v5122
    %v5381 = vmul.f32 %v1019, %v5123
    %v5382 = vmul.f32 %v1019, %v5124
    %v5383 = vmul.f32 %v1019, %v5125
    %v5384 = vmul.f32 %v1019, %v5126
    %v5385 = vmul.f32 %v1019, %v5127
    %v5386 = vmul.f32 %v1019, %v5128
    %v5387 = vmul.f32 %v1019, %v5129
    %v5388 = vmul.f32 %v1019, %v5130
    %v5389 = vmul.f32 %v1019, %v5131
    %v5390 = vmul.f32 %v1019, %v5132
    %v5391 = vmul.f32 %v1019, %v5133
    %v5392 = vmul.f32 %v1019, %v5134
    %v5393 = vadd.f32 %v5377, %v5338
    %v5394 = vadd.f32 %v5378, %v5340
    %v5395 = vadd.f32 %v5379, %v5343
    %v5396 = vadd.f32 %v5380, %v5345
    %v5397 = vadd.f32 %v5381, %v5348
    %v5398 = vadd.f32 %v5382, %v5350
    %v5399 = vadd.f32 %v5383, %v5353
    %v5400 = vadd.f32 %v5384, %v5355
    %v5401 = vadd.f32 %v5385, %v5358
    %v5402 = vadd.f32 %v5386, %v5360
    %v5403 = vadd.f32 %v5387, %v5363
    %v5404 = vadd.f32 %v5388, %v5365
    %v5405 = vadd.f32 %v5389, %v5368
    %v5406 = vadd.f32 %v5390, %v5370
    %v5407 = vadd.f32 %v5391, %v5373
    %v5408 = vadd.f32 %v5392, %v5375
    %v5409 = vadd.f32 %v5393, %v1039
    %v5410 = vadd.f32 %v5394, %v1039
    %v5411 = vadd.f32 %v5395, %v1039
    %v5412 = vadd.f32 %v5396, %v1039
    %v5413 = vadd.f32 %v5397, %v1039
    %v5414 = vadd.f32 %v5398, %v1039
    %v5415 = vadd.f32 %v5399, %v1039
    %v5416 = vadd.f32 %v5400, %v1039
    %v5417 = vadd.f32 %v5401, %v1039
    %v5418 = vadd.f32 %v5402, %v1039
    %v5419 = vadd.f32 %v5403, %v1039
    %v5420 = vadd.f32 %v5404, %v1039
    %v5421 = vadd.f32 %v5405, %v1039
    %v5422 = vadd.f32 %v5406, %v1039
    %v5423 = vadd.f32 %v5407, %v1039
    %v5424 = vadd.f32 %v5408, %v1039
    %v5425 = vmax.f32 %v5409, 0.0
    %v5426 = vmax.f32 %v5410, 0.0
    %v5427 = vmax.f32 %v5411, 0.0
    %v5428 = vmax.f32 %v5412, 0.0
    %v5429 = vmax.f32 %v5413, 0.0
    %v5430 = vmax.f32 %v5414, 0.0
    %v5431 = vmax.f32 %v5415, 0.0
    %v5432 = vmax.f32 %v5416, 0.0
    %v5433 = vmax.f32 %v5417, 0.0
    %v5434 = vmax.f32 %v5418, 0.0
    %v5435 = vmax.f32 %v5419, 0.0
    %v5436 = vmax.f32 %v5420, 0.0
    %v5437 = vmax.f32 %v5421, 0.0
    %v5438 = vmax.f32 %v5422, 0.0
    %v5439 = vmax.f32 %v5423, 0.0
    %v5440 = vmax.f32 %v5424, 0.0
    %v5441 = vmul.f32 %v5425, 0.1
    %v5442 = vmul.f32 %v5426, 0.1
    %v5443 = vmul.f32 %v5427, 0.1
    %v5444 = vmul.f32 %v5428, 0.1
    %v5445 = vmul.f32 %v5429, 0.1
    %v5446 = vmul.f32 %v5430, 0.1
    %v5447 = vmul.f32 %v5431, 0.1
    %v5448 = vmul.f32 %v5432, 0.1
    %v5449 = vmul.f32 %v5433, 0.1
    %v5450 = vmul.f32 %v5434, 0.1
    %v5451 = vmul.f32 %v5435, 0.1
    %v5452 = vmul.f32 %v5436, 0.1
    %v5453 = vmul.f32 %v5437, 0.1
    %v5454 = vmul.f32 %v5438, 0.1
    %v5455 = vmul.f32 %v5439, 0.1
    %v5456 = vmul.f32 %v5440, 0.1
    %v5457 = vadd.f32 %v5087, %v5441
    %v5458 = vadd.f32 %v5088, %v5442
    %v5459 = vadd.f32 %v5089, %v5443
    %v5460 = vadd.f32 %v5090, %v5444
    %v5461 = vadd.f32 %v5091, %v5445
    %v5462 = vadd.f32 %v5092, %v5446
    %v5463 = vadd.f32 %v5093, %v5447
    %v5464 = vadd.f32 %v5094, %v5448
    %v5465 = vadd.f32 %v5095, %v5449
    %v5466 = vadd.f32 %v5096, %v5450
    %v5467 = vadd.f32 %v5097, %v5451
    %v5468 = vadd.f32 %v5098, %v5452
    %v5469 = vadd.f32 %v5099, %v5453
    %v5470 = vadd.f32 %v5100, %v5454
    %v5471 = vadd.f32 %v5101, %v5455
    %v5472 = vadd.f32 %v5102, %v5456
    %v5473 = vmul.f32 %v5457, 0.1
    %v5474 = vmul.f32 %v5458, 0.1
    %v5475 = vmul.f32 %v5459, 0.1
    %v5476 = vmul.f32 %v5460, 0.1
    %v5477 = vmul.f32 %v5461, 0.1
    %v5478 = vmul.f32 %v5462, 0.1
    %v5479 = vmul.f32 %v5463, 0.1
    %v5480 = vmul.f32 %v5464, 0.1
    %v5481 = vmul.f32 %v5465, 0.1
    %v5482 = vmul.f32 %v5466, 0.1
    %v5483 = vmul.f32 %v5467, 0.1
    %v5484 = vmul.f32 %v5468, 0.1
    %v5485 = vmul.f32 %v5469, 0.1
    %v5486 = vmul.f32 %v5470, 0.1
    %v5487 = vmul.f32 %v5471, 0.1
    %v5488 = vmul.f32 %v5472, 0.1
    %v5489 = vadd.f32 %v5119, %v5473
    %v5490 = vadd.f32 %v5120, %v5474
    %v5491 = vadd.f32 %v5121, %v5475
    %v5492 = vadd.f32 %v5122, %v5476
    %v5493 = vadd.f32 %v5123, %v5477
    %v5494 = vadd.f32 %v5124, %v5478
    %v5495 = vadd.f32 %v5125, %v5479
    %v5496 = vadd.f32 %v5126, %v5480
    %v5497 = vadd.f32 %v5127, %v5481
    %v5498 = vadd.f32 %v5128, %v5482
    %v5499 = vadd.f32 %v5129, %v5483
    %v5500 = vadd.f32 %v5130, %v5484
    %v5501 = vadd.f32 %v5131, %v5485
    %v5502 = vadd.f32 %v5132, %v5486
    %v5503 = vadd.f32 %v5133, %v5487
    %v5504 = vadd.f32 %v5134, %v5488
    %v5505 = vpack.c.bf16 %v5490, %v5489
    %v5506 = vpack.c.bf16 %v5492, %v5491
    %v5507 = vpack.c.bf16 %v5494, %v5493
    %v5508 = vpack.c.bf16 %v5496, %v5495
    %v5509 = vpack.c.bf16 %v5498, %v5497
    %v5510 = vpack.c.bf16 %v5500, %v5499
    %v5511 = vpack.c.bf16 %v5502, %v5501
    %v5512 = vpack.c.bf16 %v5504, %v5503
    %v5513 = vld [vmem:[#allocation13] sm:$0xf]
    %v5514 = vld [vmem:[#allocation13 + $0x4] sm:$0xf]
    %v5515 = vld [vmem:[#allocation13 + $0x8] sm:$0xf]
    %v5516 = vld [vmem:[#allocation13 + $0xc] sm:$0xf]
    %v5517 = vld [vmem:[#allocation13 + $0x10] sm:$0xf]
    %v5518 = vld [vmem:[#allocation13 + $0x14] sm:$0xf]
    %v5519 = vld [vmem:[#allocation13 + $0x18] sm:$0xf]
    %v5520 = vld [vmem:[#allocation13 + $0x1c] sm:$0xf]
    %v5521 = vld [vmem:[#allocation13 + $0x20] sm:$0xf]
    %v5522 = vld [vmem:[#allocation13 + $0x24] sm:$0xf]
    %v5523 = vld [vmem:[#allocation13 + $0x28] sm:$0xf]
    %v5524 = vld [vmem:[#allocation13 + $0x2c] sm:$0xf]
    %v5525 = vld [vmem:[#allocation13 + $0x30] sm:$0xf]
    %v5526 = vld [vmem:[#allocation13 + $0x34] sm:$0xf]
    %v5527 = vld [vmem:[#allocation13 + $0x38] sm:$0xf]
    %v5528 = vld [vmem:[#allocation13 + $0x3c] sm:$0xf]
    %v5529 = vld [vmem:[%s8] sm:$0x1]
    %v5531 = vperm.slane %v5529, 0
    %v5549 = vunpack.c.l.b16 %v5513
    %v5550 = vunpack.c.l.b16 %v5514
    %v5551 = vunpack.c.l.b16 %v5515
    %v5552 = vunpack.c.l.b16 %v5516
    %v5553 = vunpack.c.l.b16 %v5517
    %v5554 = vunpack.c.l.b16 %v5518
    %v5555 = vunpack.c.l.b16 %v5519
    %v5556 = vunpack.c.l.b16 %v5520
    %v5557 = vunpack.c.l.b16 %v5521
    %v5558 = vunpack.c.l.b16 %v5522
    %v5559 = vunpack.c.l.b16 %v5523
    %v5560 = vunpack.c.l.b16 %v5524
    %v5561 = vunpack.c.l.b16 %v5525
    %v5562 = vunpack.c.l.b16 %v5526
    %v5563 = vunpack.c.l.b16 %v5527
    %v5564 = vunpack.c.l.b16 %v5528
    %v5565 = vpack.c.b16 %v5550, %v5549
    %v5566 = vpack.c.b16 %v5552, %v5551
    %v5567 = vpack.c.b16 %v5554, %v5553
    %v5568 = vpack.c.b16 %v5556, %v5555
    %v5569 = vpack.c.b16 %v5558, %v5557
    %v5570 = vpack.c.b16 %v5560, %v5559
    %v5571 = vpack.c.b16 %v5562, %v5561
    %v5572 = vpack.c.b16 %v5564, %v5563
    %5581 = vmatpush.bf16.msra.mxu0 %v5572
    %5582 = vmatpush.bf16.msra.mxu0 %v5571
    %5583 = vmatpush.bf16.msra.mxu0 %v5570
    %5584 = vmatpush.bf16.msra.mxu0 %v5569
    %5585 = vmatpush.bf16.msra.mxu0 %v5568
    %5586 = vmatpush.bf16.msra.mxu0 %v5567
    %5587 = vmatpush.bf16.msra.mxu0 %v5566
    %5588 = vmatpush.bf16.msra.mxu0 %v5565
    %5589 = vmatmul.bf16.gmra.mxu0 %v5505
    %v5590 = vpop.f32.mrf.mxu0
    %v5591 = vadd.f32 %v5531, %v5590
    %v5592 = vpop.f32.mrf.mxu0
    %v5593 = vadd.f32 %v5531, %v5592
    %5594 = vmatmul.bf16.gmra.mxu0 %v5506
    %v5595 = vpop.f32.mrf.mxu0
    %v5596 = vadd.f32 %v5531, %v5595
    %v5597 = vpop.f32.mrf.mxu0
    %v5598 = vadd.f32 %v5531, %v5597
    %5599 = vmatmul.bf16.gmra.mxu0 %v5507
    %v5600 = vpop.f32.mrf.mxu0
    %v5601 = vadd.f32 %v5531, %v5600
    %v5602 = vpop.f32.mrf.mxu0
    %v5603 = vadd.f32 %v5531, %v5602
    %5604 = vmatmul.bf16.gmra.mxu0 %v5508
    %v5605 = vpop.f32.mrf.mxu0
    %v5606 = vadd.f32 %v5531, %v5605
    %v5607 = vpop.f32.mrf.mxu0
    %v5608 = vadd.f32 %v5531, %v5607
    %5609 = vmatmul.bf16.gmra.mxu0 %v5509
    %v5610 = vpop.f32.mrf.mxu0
    %v5611 = vadd.f32 %v5531, %v5610
    %v5612 = vpop.f32.mrf.mxu0
    %v5613 = vadd.f32 %v5531, %v5612
    %5614 = vmatmul.bf16.gmra.mxu0 %v5510
    %v5615 = vpop.f32.mrf.mxu0
    %v5616 = vadd.f32 %v5531, %v5615
    %v5617 = vpop.f32.mrf.mxu0
    %v5618 = vadd.f32 %v5531, %v5617
    %5619 = vmatmul.bf16.gmra.mxu0 %v5511
    %v5620 = vpop.f32.mrf.mxu0
    %v5621 = vadd.f32 %v5531, %v5620
    %v5622 = vpop.f32.mrf.mxu0
    %v5623 = vadd.f32 %v5531, %v5622
    %5624 = vmatmul.bf16.gmra.mxu0 %v5512
    %v5625 = vpop.f32.mrf.mxu0
    %v5626 = vadd.f32 %v5531, %v5625
    %v5627 = vpop.f32.mrf.mxu0
    %v5628 = vadd.f32 %v5531, %v5627
    %5629 = vdwg.mxu0
    %5630 = vst [vmem:[#allocation14] sm:$0xff] %v5591
    %5631 = vst [vmem:[#allocation14 + $0x8] sm:$0xff] %v5593
    %5632 = vst [vmem:[#allocation14 + $0x10] sm:$0xff] %v5596
    %5633 = vst [vmem:[#allocation14 + $0x18] sm:$0xff] %v5598
    %5634 = vst [vmem:[#allocation14 + $0x20] sm:$0xff] %v5601
    %5635 = vst [vmem:[#allocation14 + $0x28] sm:$0xff] %v5603
    %5636 = vst [vmem:[#allocation14 + $0x30] sm:$0xff] %v5606
    %5637 = vst [vmem:[#allocation14 + $0x38] sm:$0xff] %v5608
    %5638 = vst [vmem:[#allocation14 + $0x40] sm:$0xff] %v5611
    %5639 = vst [vmem:[#allocation14 + $0x48] sm:$0xff] %v5613
    %5640 = vst [vmem:[#allocation14 + $0x50] sm:$0xff] %v5616
    %5641 = vst [vmem:[#allocation14 + $0x58] sm:$0xff] %v5618
    %5642 = vst [vmem:[#allocation14 + $0x60] sm:$0xff] %v5621
    %5643 = vst [vmem:[#allocation14 + $0x68] sm:$0xff] %v5623
    %5644 = vst [vmem:[#allocation14 + $0x70] sm:$0xff] %v5626
    %5645 = vst [vmem:[#allocation14 + $0x78] sm:$0xff] %v5628
    // Predicated region
    $region66: #{tpu_custom_call.1} parent=1 // pred_check
      _
    $region67: #{tpu_custom_call.1} parent=1 // pred_check_branch
      %5647 = sbr.rel (0) target = $region69
    $region68: #{tpu_custom_call.1} parent=1 // pred_region
      %5649 = vsyncadd [#allocation4], 0
      %s5650 = sshll.u32 [#allocation14], 4
      %s5651 = int_to_ptr.vmem [resolvable:$true] %s5650
      %s5652 = sshll.u32 %s9, 4
      %s5653 = int_to_ptr.hbm [resolvable:$true] %s5652
      %5658 = dma.vmem_to_hbm [thread:$0]  %s5651, 2048, %s5653, [#allocation4], 128, 128, 8
    $region69: #{tpu_custom_call.1} parent=1 // pred_fallthru
      _
    // Predicated region
    $region70: #{tpu_custom_call.1} parent=1 // pred_check
      _
    $region71: #{tpu_custom_call.1} parent=1 // pred_check_branch
      %5660 = sbr.rel (0) target = $region73
    $region72: #{tpu_custom_call.1} parent=1 // pred_region
      %5662 = dma.done [#allocation4], 2048
    $region73: #{tpu_custom_call.1} parent=1 // pred_fallthru
      _
    %5663 = vsyncpa [#allocation3], 1
    %5664 = vsyncpa [#allocation6], 1
    %5665 = vsyncpa [#allocation9], 1
    %5666 = vsyncpa [#allocation12], 1
    %5667 = vsyncpa [#allocation4], 1

</llo_original>
